<compile_context>
chip_gen: v5e
topology: v5e:2x2
jax: 0.10.0
libtpu: 0.0.40
codegen_flags: <defaults>
</compile_context>

<pallas_src>
import jax
import jax.numpy as jnp
from jax.experimental import pallas as pl
from jax.experimental.pallas import tpu as pltpu


def _se_gate_kernel(gate_ref, x_ref, o_ref):
    # gate_ref: (ROWS, 1) full pre-sigmoid gate, resident across all grid steps
    #           (constant index_map -> DMA'd into VMEM exactly once).
    # x_ref:    (TR, HW) feature rows for this grid step.
    # o_ref:    (TR, HW) output rows.
    tr = x_ref.shape[0]
    r0 = pl.multiple_of(pl.program_id(0) * tr, 8)         # sublane-aligned start
    g = gate_ref[pl.ds(r0, tr), :]                        # (TR, 1) current rows
    g = jax.nn.sigmoid(g.astype(jnp.float32))             # EUP, f32 for accuracy
    # Multiply in the input dtype: bf16 stays bf16 on v6e/v7x (half the VALU
    # work), f32 stays f32 -> bit-identical to the reference for f32 inputs.
    o_ref[...] = x_ref[...] * g.astype(x_ref.dtype)


def _pick_tile_rows(rows, hw, x_itemsize, gate_itemsize,
                    vmem_budget_bytes=12 * 1024 * 1024):
    """Pick tile rows so the grid has 2 steps (preferred, v7x-balanced) or 1.

    VMEM accounting includes:
      * lane padding: a (tr, hw) block occupies tr * ceil(hw/128)*128 elements
      * double-buffered in + out feature blocks (x4 blocks total)
      * the resident full-height gate column, lane-padded to 128 (x2 buffers)
    """
    padded_hw = pl.cdiv(hw, 128) * 128
    gate_bytes = rows * 128 * gate_itemsize * 2            # resident, conservative
    avail = max(0, vmem_budget_bytes - gate_bytes)
    bytes_per_row = padded_hw * x_itemsize * 4              # (in + out) * 2 buffers
    cap = avail // max(1, bytes_per_row)

    half = rows // 2
    if rows % 2 == 0 and half % 8 == 0 and half <= cap:
        return half                                         # grid=(2,): 1 step / TC on v7x
    if rows <= cap:
        return rows                                          # grid=(1,)
    # Fallback for large H*W: largest multiple-of-8 divisor of rows that fits.
    t = max(8, cap - cap % 8)
    while t >= 8:
        if rows % t == 0:
            return t
        t -= 8
    return rows  # tiny/irregular shapes: single full-height block


@jax.jit
def sigmoid_mul(x741, x737):
    """x741: (B, C, 1, 1) gate logits; x737: (B, C, H, W) features -> NCHW out."""
    B, C, H, W = x737.shape
    assert x741.shape == (B, C, 1, 1)
    rows, hw = B * C, H * W

    # Free views: stay in native NCHW layout -> one HBM read + one write pass.
    x2d = x737.reshape(rows, hw)
    g2d = x741.reshape(rows, 1)

    tr = _pick_tile_rows(rows, hw, x737.dtype.itemsize, x741.dtype.itemsize)
    grid = (rows // tr,)

    cost = pl.CostEstimate(
        flops=rows * hw,                                   # one mul per element
        transcendentals=rows,                              # one sigmoid per row
        bytes_accessed=2 * rows * hw * x737.dtype.itemsize
                       + rows * x741.dtype.itemsize,
    )

    out2d = pl.pallas_call(
        _se_gate_kernel,
        out_shape=jax.ShapeDtypeStruct((rows, hw), x737.dtype),
        grid_spec=pltpu.PrefetchScalarGridSpec(
            num_scalar_prefetch=0,
            grid=grid,
            in_specs=[
                # Full gate column, constant index_map -> fetched once, resident.
                pl.BlockSpec((rows, 1), lambda r: (0, 0)),
                # Feature rows for this grid step.
                pl.BlockSpec((tr, hw), lambda r: (r, 0)),
            ],
            out_specs=pl.BlockSpec((tr, hw), lambda r: (r, 0)),
        ),
        compiler_params=pltpu.CompilerParams(
            dimension_semantics=("parallel",),             # v7x: 1 step per TC
        ),
        cost_estimate=cost,
    )(g2d, x2d)

    return out2d.reshape(B, C, H, W)


if __name__ == "__main__":
    key = jax.random.PRNGKey(0)
    k1, k2 = jax.random.split(key)

    # Module shapes: features (1, 2304, 7, 7), per-channel gate (1, 2304, 1, 1).
    B, C, H, W = 1, 2304, 7, 7
    x737 = jax.random.normal(k1, (B, C, H, W), dtype=jnp.float32)
    x741 = jax.random.normal(k2, (B, C, 1, 1), dtype=jnp.float32)

    out = jax.block_until_ready(sigmoid_mul(x741, x737))

    # Reference check against plain JAX semantics of the PyTorch module.
    ref = jax.nn.sigmoid(x741) * x737
    assert out.shape == ref.shape == (B, C, H, W)
    assert jnp.allclose(out, ref, atol=1e-6, rtol=1e-6)

    print("KERNEL_OK")
</pallas_src>

<mosaic_0001>
module attributes {stable_mosaic.version = 11 : i64} {
  func.func @_se_gate_kernel(%arg0: i32, %arg1: memref<2304x1xf32, #tpu.memory_space<vmem>>, %arg2: memref<1152x49xf32, #tpu.memory_space<vmem>>, %arg3: memref<1152x49xf32, #tpu.memory_space<vmem>>) attributes {dimension_semantics = [#tpu.dimension_semantics<parallel>], iteration_bounds = array<i64: 2>, scalar_prefetch = 0 : i64, scratch_operands = 0 : i64, tpu.core_type = #tpu.core_type<tc>, window_params = [{pipeline_mode = #tpu.pipeline_mode<synchronous>, transform_indices = @transform_0, window_bounds = array<i64: 2304, 1>}, {transform_indices = @transform_1, window_bounds = array<i64: 1152, 49>}, {transform_indices = @transform_2, window_bounds = array<i64: 1152, 49>}]} {
    %c1152_i32 = arith.constant 1152 : i32
    %0 = arith.muli %arg0, %c1152_i32 : i32
    %1 = tpu.assume_multiple %0, 8 : i32
    %2 = arith.index_cast %1 : i32 to index
    %c0 = arith.constant 0 : index
    %3 = vector.load %arg1[%2, %c0] : memref<2304x1xf32, #tpu.memory_space<vmem>>, vector<1152x1xf32>
    %4 = arith.negf %3 : vector<1152x1xf32>
    %5 = math.exp %4 : vector<1152x1xf32>
    %cst = arith.constant 1.000000e+00 : f32
    %6 = vector.broadcast %cst : f32 to vector<1152x1xf32>
    %7 = arith.addf %6, %5 : vector<1152x1xf32>
    %8 = arith.divf %6, %7 : vector<1152x1xf32>
    %c0_0 = arith.constant 0 : index
    %c0_1 = arith.constant 0 : index
    %9 = vector.load %arg2[%c0_0, %c0_1] : memref<1152x49xf32, #tpu.memory_space<vmem>>, vector<1152x49xf32>
    %10 = vector.broadcast %8 : vector<1152x1xf32> to vector<1152x49xf32>
    %11 = arith.mulf %9, %10 : vector<1152x49xf32>
    %c0_2 = arith.constant 0 : index
    %c0_3 = arith.constant 0 : index
    %12 = vector.load %arg3[%c0_2, %c0_3] : memref<1152x49xf32, #tpu.memory_space<vmem>>, vector<1152x49xf32>
    tpu.vector_store %arg3[%c0_2, %c0_3], %11 {strides = array<i32>} : memref<1152x49xf32, #tpu.memory_space<vmem>>, vector<1152x49xf32>,
    return
  }
  func.func @transform_0(%arg0: i32) -> (i32, i32) {
    %c0_i32 = arith.constant 0 : i32
    %c0_i32_0 = arith.constant 0 : i32
    %c0_i32_1 = arith.constant 0 : i32
    return %c0_i32, %c0_i32_0 : i32, i32
  }
  func.func @transform_1(%arg0: i32) -> (i32, i32) {
    %c0_i32 = arith.constant 0 : i32
    %c0_i32_0 = arith.constant 0 : i32
    return %arg0, %c0_i32 : i32, i32
  }
  func.func @transform_2(%arg0: i32) -> (i32, i32) {
    %c0_i32 = arith.constant 0 : i32
    %c0_i32_0 = arith.constant 0 : i32
    return %arg0, %c0_i32 : i32, i32
  }
}

</mosaic_0001>

<llo_original>
// kernel: sigmoid_mul.1
$region0: #{sigmoid_mul.1}
  #allocation0 [shape = 'u32[]', space=smem, size = 0x4, offset = 0x4, fixed_abs, tag = 'smem constant byte address 0x4 - core index']
  #allocation1 [shape = 'u32[72,128]{1,0:T(1,128)}', space=vmem, size = 0x9000, scoped, tag = 'internal scratch']
  %s0 = inlined_call_operand.vmem [shape: f32[2304,1], index: 0, kind: input, shape index: {}]
  %s1 = inlined_call_operand.vmem [shape: f32[2304,49], index: 1, kind: input, shape index: {}]
  %s2 = inlined_call_operand.vmem [shape: f32[2304,49], index: 2, kind: output, shape index: {}]
  %s3 = sld [smem:[#allocation0]]
  $region41: #{sigmoid_mul.1} parent=0
    _
  %s5 = ssub.s32 1, %s3
  %s6 = scalar_select 0, %s5, %s3
  loop: start=0, step=1, limit=4
  $region2: #{sigmoid_mul.1} parent=0 // loop_pre_header
    _
  $region3: #{sigmoid_mul.1} parent=0 // loop_header
    %s8 = sphi 0, %s12
    %p9 = scmp.ge.s32.totalorder %s8, 4
    %s16 = sphi 0, %s16
    %s18 = sphi 0, %s16
    %s19 = sphi 0, %s18
    %s33 = sphi 0, %s19
    %s39 = sphi 0, %s41
    %s42 = sphi 0, %s39
    %s43 = sphi 0, %s42
    %s59 = sphi 0, %s43
    %s65 = sphi 0, %s67
    %s68 = sphi 0, %s65
    %s69 = sphi 0, %s68
    %s85 = sphi 0, %s69
  $region4: #{sigmoid_mul.1} parent=0 // loop_header_branch
    %11 = sbr.rel (%p9) target = $region8
  $region5: #{sigmoid_mul.1} parent=0 // loop_body
    %s13 = ssub.s32 %s8, 1
    %s14 = ssub.s32 %s8, 2
    %s15 = sadd.s32 %s8, 1
    %s17 = sadd.s32 %s16, 1
    %p20 = scmp.eq.s32.totalorder %s8, 1
    %p21 = scmp.ne.s32.totalorder %s16, %s18
    %p22 = scmp.eq.s32.totalorder %s8, 0
    %p23 = por %p21, %p22
    %p24 = scmp.ne.s32.totalorder %s16, %s18
    %p25 = scmp.eq.s32.totalorder %s13, 1
    %p26 = por %p24, %p25
    %p27 = scmp.ne.s32.totalorder %s18, %s19
    %p28 = scmp.eq.s32.totalorder %s13, 0
    %p29 = por %p27, %p28
    %p30 = scmp.ne.s32.totalorder %s18, %s19
    %p31 = scmp.eq.s32.totalorder %s14, 1
    %p32 = por %p30, %p31
    %p34 = scmp.ne.s32.totalorder %s19, %s33
    %p35 = scmp.eq.s32.totalorder %s14, 0
    %p36 = por %p34, %p35
    %s37 = ssub.s32 %s8, %s15
    %p38 = scmp.eq.s32.totalorder %s37, 0
    %s40 = sadd.s32 %s39, 1
    %s41 = scalar_select %p38, %s39, %s40
    %p44 = pneg %p38
    %p45 = scmp.eq.s32.totalorder %s8, 1
    %p46 = por %p44, %p45
    %p47 = scmp.ne.s32.totalorder %s39, %s42
    %p48 = scmp.eq.s32.totalorder %s8, 0
    %p49 = por %p47, %p48
    %p50 = scmp.ne.s32.totalorder %s39, %s42
    %p51 = scmp.eq.s32.totalorder %s13, 1
    %p52 = por %p50, %p51
    %p53 = scmp.ne.s32.totalorder %s42, %s43
    %p54 = scmp.eq.s32.totalorder %s13, 0
    %p55 = por %p53, %p54
    %p56 = scmp.ne.s32.totalorder %s42, %s43
    %p57 = scmp.eq.s32.totalorder %s14, 1
    %p58 = por %p56, %p57
    %p60 = scmp.ne.s32.totalorder %s43, %s59
    %p61 = scmp.eq.s32.totalorder %s14, 0
    %p62 = por %p60, %p61
    %s63 = ssub.s32 %s8, %s15
    %p64 = scmp.eq.s32.totalorder %s63, 0
    %s66 = sadd.s32 %s65, 1
    %s67 = scalar_select %p64, %s65, %s66
    %p70 = pneg %p64
    %p71 = scmp.eq.s32.totalorder %s8, 1
    %p72 = por %p70, %p71
    %p73 = scmp.ne.s32.totalorder %s65, %s68
    %p74 = scmp.eq.s32.totalorder %s8, 0
    %p75 = por %p73, %p74
    %p76 = scmp.ne.s32.totalorder %s65, %s68
    %p77 = scmp.eq.s32.totalorder %s13, 1
    %p78 = por %p76, %p77
    %p79 = scmp.ne.s32.totalorder %s68, %s69
    %p80 = scmp.eq.s32.totalorder %s13, 0
    %p81 = por %p79, %p80
    %p82 = scmp.ne.s32.totalorder %s68, %s69
    %p83 = scmp.eq.s32.totalorder %s14, 1
    %p84 = por %p82, %p83
    %p86 = scmp.ne.s32.totalorder %s69, %s85
    %p87 = scmp.eq.s32.totalorder %s14, 0
    %p88 = por %p86, %p87
    %p89 = scmp.le.s32.totalorder 1, %s8
    %p90 = scmp.lt.s32.totalorder %s8, 3
    %p91 = pnand %p89, %p90
    %p92 = pneg %p91
    // Predicated region
    $region9: #{sigmoid_mul.1} parent=5 // pred_check
      _
    $region10: #{sigmoid_mul.1} parent=5 // pred_check_branch
      %94 = sbr.rel (%p91) target = $region12
    $region11: #{sigmoid_mul.1} parent=5 // pred_region
      %s95 = ssub.s32 %s8, 1
      // Predicated region
      $region13: #{sigmoid_mul.1} parent=11 // pred_check
        %p96 = pneg %p29
      $region14: #{sigmoid_mul.1} parent=11 // pred_check_branch
        %98 = sbr.rel (%p96) target = $region16
      $region15: #{sigmoid_mul.1} parent=11 // pred_region
        _
      $region16: #{sigmoid_mul.1} parent=11 // pred_fallthru
        _
    $region12: #{sigmoid_mul.1} parent=5 // pred_fallthru
      _
    %p99 = scmp.lt.s32.totalorder %s8, 2
    // Predicated region
    $region17: #{sigmoid_mul.1} parent=5 // pred_check
      %p100 = pneg %p99
    $region18: #{sigmoid_mul.1} parent=5 // pred_check_branch
      %102 = sbr.rel (%p100) target = $region20
    $region19: #{sigmoid_mul.1} parent=5 // pred_region
      // Predicated region
      $region21: #{sigmoid_mul.1} parent=19 // pred_check
        %p103 = pneg %p49
      $region22: #{sigmoid_mul.1} parent=19 // pred_check_branch
        %105 = sbr.rel (%p103) target = $region24
      $region23: #{sigmoid_mul.1} parent=19 // pred_region
        %s106 = smul.u32 144, %s8
        %p107 = scmp.lt.s32.totalorder %s106, 287
        %s108 = scalar_select %p107, %s106, 287
        %s109 = smul.addr %s108, 8
        %s110 = scalar_lea.vmem %s1, %s109
        %s111 = smul.u32 144, %s8
      $region24: #{sigmoid_mul.1} parent=19 // pred_fallthru
        _
    $region20: #{sigmoid_mul.1} parent=5 // pred_fallthru
      _
    %p112 = scmp.le.s32.totalorder 1, %s8
    %p113 = scmp.lt.s32.totalorder %s8, 3
    %p114 = pnand %p112, %p113
    %p115 = pneg %p114
    // Predicated region
    $region25: #{sigmoid_mul.1} parent=5 // pred_check
      _
    $region26: #{sigmoid_mul.1} parent=5 // pred_check_branch
      %117 = sbr.rel (%p114) target = $region28
    $region27: #{sigmoid_mul.1} parent=5 // pred_region
      %s118 = ssub.s32 %s8, 1
      %p119 = pneg %p29
      %p120 = pneg %p26
      %s121 = smul.u32 144, %s13
      %p122 = scmp.lt.s32.totalorder %s121, 287
      %s123 = scalar_select %p122, %s121, 287
      %s124 = smul.addr %s123, 8
      %s125 = scalar_lea.vmem %s1, %s124
      %p126 = pneg %p55
      %p127 = pneg %p52
      %p128 = pneg %p81
      %p129 = pneg %p78
      %s130 = smul.u32 144, %s13
      %p131 = scmp.lt.s32.totalorder %s130, 287
      %s132 = scalar_select %p131, %s130, 287
      %s133 = smul.addr %s132, 8
      %s134 = scalar_lea.vmem %s2, %s133
      %s135 = smul.u32 144, %s13
      %p136 = scmp.lt.s32.totalorder %s135, 287
      %s137 = scalar_select %p136, %s135, 287
      %s138 = smul.addr %s137, 8
      %s139 = scalar_lea.vmem %s1, %s138
      %s140 = smul.u32 144, %s13
      %s141 = smul.u32 144, %s13
      %p142 = scmp.lt.s32.totalorder %s141, 287
      %s143 = scalar_select %p142, %s141, 287
      %s144 = smul.addr %s143, 8
      %s145 = scalar_lea.vmem %s2, %s144
      %s146 = smul.u32 144, %s13
      %s147 = smul.u32 %s13, 1152
      %s148 = scalar_lea.vmem %s0, %s147
      %v149 = vld [vmem:[%s148] sm:$0xff]
      %v150 = vld [vmem:[%s148 + $0x8] sm:$0xff]
      %v151 = vld [vmem:[%s148 + $0x10] sm:$0xff]
      %v152 = vld [vmem:[%s148 + $0x18] sm:$0xff]
      %v153 = vld [vmem:[%s148 + $0x20] sm:$0xff]
      %v154 = vld [vmem:[%s148 + $0x28] sm:$0xff]
      %v155 = vld [vmem:[%s148 + $0x30] sm:$0xff]
      %v156 = vld [vmem:[%s148 + $0x38] sm:$0xff]
      %v157 = vld [vmem:[%s148 + $0x40] sm:$0xff]
      %v158 = vld [vmem:[%s148 + $0x48] sm:$0xff]
      %v159 = vld [vmem:[%s148 + $0x50] sm:$0xff]
      %v160 = vld [vmem:[%s148 + $0x58] sm:$0xff]
      %v161 = vld [vmem:[%s148 + $0x60] sm:$0xff]
      %v162 = vld [vmem:[%s148 + $0x68] sm:$0xff]
      %v163 = vld [vmem:[%s148 + $0x70] sm:$0xff]
      %v164 = vld [vmem:[%s148 + $0x78] sm:$0xff]
      %v165 = vld [vmem:[%s148 + $0x80] sm:$0xff]
      %v166 = vld [vmem:[%s148 + $0x88] sm:$0xff]
      %v167 = vld [vmem:[%s148 + $0x90] sm:$0xff]
      %v168 = vld [vmem:[%s148 + $0x98] sm:$0xff]
      %v169 = vld [vmem:[%s148 + $0xa0] sm:$0xff]
      %v170 = vld [vmem:[%s148 + $0xa8] sm:$0xff]
      %v171 = vld [vmem:[%s148 + $0xb0] sm:$0xff]
      %v172 = vld [vmem:[%s148 + $0xb8] sm:$0xff]
      %v173 = vld [vmem:[%s148 + $0xc0] sm:$0xff]
      %v174 = vld [vmem:[%s148 + $0xc8] sm:$0xff]
      %v175 = vld [vmem:[%s148 + $0xd0] sm:$0xff]
      %v176 = vld [vmem:[%s148 + $0xd8] sm:$0xff]
      %v177 = vld [vmem:[%s148 + $0xe0] sm:$0xff]
      %v178 = vld [vmem:[%s148 + $0xe8] sm:$0xff]
      %v179 = vld [vmem:[%s148 + $0xf0] sm:$0xff]
      %v180 = vld [vmem:[%s148 + $0xf8] sm:$0xff]
      %v181 = vld [vmem:[%s148 + $0x100] sm:$0xff]
      %v182 = vld [vmem:[%s148 + $0x108] sm:$0xff]
      %v183 = vld [vmem:[%s148 + $0x110] sm:$0xff]
      %v184 = vld [vmem:[%s148 + $0x118] sm:$0xff]
      %v185 = vld [vmem:[%s148 + $0x120] sm:$0xff]
      %v186 = vld [vmem:[%s148 + $0x128] sm:$0xff]
      %v187 = vld [vmem:[%s148 + $0x130] sm:$0xff]
      %v188 = vld [vmem:[%s148 + $0x138] sm:$0xff]
      %v189 = vld [vmem:[%s148 + $0x140] sm:$0xff]
      %v190 = vld [vmem:[%s148 + $0x148] sm:$0xff]
      %v191 = vld [vmem:[%s148 + $0x150] sm:$0xff]
      %v192 = vld [vmem:[%s148 + $0x158] sm:$0xff]
      %v193 = vld [vmem:[%s148 + $0x160] sm:$0xff]
      %v194 = vld [vmem:[%s148 + $0x168] sm:$0xff]
      %v195 = vld [vmem:[%s148 + $0x170] sm:$0xff]
      %v196 = vld [vmem:[%s148 + $0x178] sm:$0xff]
      %v197 = vld [vmem:[%s148 + $0x180] sm:$0xff]
      %v198 = vld [vmem:[%s148 + $0x188] sm:$0xff]
      %v199 = vld [vmem:[%s148 + $0x190] sm:$0xff]
      %v200 = vld [vmem:[%s148 + $0x198] sm:$0xff]
      %v201 = vld [vmem:[%s148 + $0x1a0] sm:$0xff]
      %v202 = vld [vmem:[%s148 + $0x1a8] sm:$0xff]
      %v203 = vld [vmem:[%s148 + $0x1b0] sm:$0xff]
      %v204 = vld [vmem:[%s148 + $0x1b8] sm:$0xff]
      %v205 = vld [vmem:[%s148 + $0x1c0] sm:$0xff]
      %v206 = vld [vmem:[%s148 + $0x1c8] sm:$0xff]
      %v207 = vld [vmem:[%s148 + $0x1d0] sm:$0xff]
      %v208 = vld [vmem:[%s148 + $0x1d8] sm:$0xff]
      %v209 = vld [vmem:[%s148 + $0x1e0] sm:$0xff]
      %v210 = vld [vmem:[%s148 + $0x1e8] sm:$0xff]
      %v211 = vld [vmem:[%s148 + $0x1f0] sm:$0xff]
      %v212 = vld [vmem:[%s148 + $0x1f8] sm:$0xff]
      %v213 = vld [vmem:[%s148 + $0x200] sm:$0xff]
      %v214 = vld [vmem:[%s148 + $0x208] sm:$0xff]
      %v215 = vld [vmem:[%s148 + $0x210] sm:$0xff]
      %v216 = vld [vmem:[%s148 + $0x218] sm:$0xff]
      %v217 = vld [vmem:[%s148 + $0x220] sm:$0xff]
      %v218 = vld [vmem:[%s148 + $0x228] sm:$0xff]
      %v219 = vld [vmem:[%s148 + $0x230] sm:$0xff]
      %v220 = vld [vmem:[%s148 + $0x238] sm:$0xff]
      %v221 = vld [vmem:[%s148 + $0x240] sm:$0xff]
      %v222 = vld [vmem:[%s148 + $0x248] sm:$0xff]
      %v223 = vld [vmem:[%s148 + $0x250] sm:$0xff]
      %v224 = vld [vmem:[%s148 + $0x258] sm:$0xff]
      %v225 = vld [vmem:[%s148 + $0x260] sm:$0xff]
      %v226 = vld [vmem:[%s148 + $0x268] sm:$0xff]
      %v227 = vld [vmem:[%s148 + $0x270] sm:$0xff]
      %v228 = vld [vmem:[%s148 + $0x278] sm:$0xff]
      %v229 = vld [vmem:[%s148 + $0x280] sm:$0xff]
      %v230 = vld [vmem:[%s148 + $0x288] sm:$0xff]
      %v231 = vld [vmem:[%s148 + $0x290] sm:$0xff]
      %v232 = vld [vmem:[%s148 + $0x298] sm:$0xff]
      %v233 = vld [vmem:[%s148 + $0x2a0] sm:$0xff]
      %v234 = vld [vmem:[%s148 + $0x2a8] sm:$0xff]
      %v235 = vld [vmem:[%s148 + $0x2b0] sm:$0xff]
      %v236 = vld [vmem:[%s148 + $0x2b8] sm:$0xff]
      %v237 = vld [vmem:[%s148 + $0x2c0] sm:$0xff]
      %v238 = vld [vmem:[%s148 + $0x2c8] sm:$0xff]
      %v239 = vld [vmem:[%s148 + $0x2d0] sm:$0xff]
      %v240 = vld [vmem:[%s148 + $0x2d8] sm:$0xff]
      %v241 = vld [vmem:[%s148 + $0x2e0] sm:$0xff]
      %v242 = vld [vmem:[%s148 + $0x2e8] sm:$0xff]
      %v243 = vld [vmem:[%s148 + $0x2f0] sm:$0xff]
      %v244 = vld [vmem:[%s148 + $0x2f8] sm:$0xff]
      %v245 = vld [vmem:[%s148 + $0x300] sm:$0xff]
      %v246 = vld [vmem:[%s148 + $0x308] sm:$0xff]
      %v247 = vld [vmem:[%s148 + $0x310] sm:$0xff]
      %v248 = vld [vmem:[%s148 + $0x318] sm:$0xff]
      %v249 = vld [vmem:[%s148 + $0x320] sm:$0xff]
      %v250 = vld [vmem:[%s148 + $0x328] sm:$0xff]
      %v251 = vld [vmem:[%s148 + $0x330] sm:$0xff]
      %v252 = vld [vmem:[%s148 + $0x338] sm:$0xff]
      %v253 = vld [vmem:[%s148 + $0x340] sm:$0xff]
      %v254 = vld [vmem:[%s148 + $0x348] sm:$0xff]
      %v255 = vld [vmem:[%s148 + $0x350] sm:$0xff]
      %v256 = vld [vmem:[%s148 + $0x358] sm:$0xff]
      %v257 = vld [vmem:[%s148 + $0x360] sm:$0xff]
      %v258 = vld [vmem:[%s148 + $0x368] sm:$0xff]
      %v259 = vld [vmem:[%s148 + $0x370] sm:$0xff]
      %v260 = vld [vmem:[%s148 + $0x378] sm:$0xff]
      %v261 = vld [vmem:[%s148 + $0x380] sm:$0xff]
      %v262 = vld [vmem:[%s148 + $0x388] sm:$0xff]
      %v263 = vld [vmem:[%s148 + $0x390] sm:$0xff]
      %v264 = vld [vmem:[%s148 + $0x398] sm:$0xff]
      %v265 = vld [vmem:[%s148 + $0x3a0] sm:$0xff]
      %v266 = vld [vmem:[%s148 + $0x3a8] sm:$0xff]
      %v267 = vld [vmem:[%s148 + $0x3b0] sm:$0xff]
      %v268 = vld [vmem:[%s148 + $0x3b8] sm:$0xff]
      %v269 = vld [vmem:[%s148 + $0x3c0] sm:$0xff]
      %v270 = vld [vmem:[%s148 + $0x3c8] sm:$0xff]
      %v271 = vld [vmem:[%s148 + $0x3d0] sm:$0xff]
      %v272 = vld [vmem:[%s148 + $0x3d8] sm:$0xff]
      %v273 = vld [vmem:[%s148 + $0x3e0] sm:$0xff]
      %v274 = vld [vmem:[%s148 + $0x3e8] sm:$0xff]
      %v275 = vld [vmem:[%s148 + $0x3f0] sm:$0xff]
      %v276 = vld [vmem:[%s148 + $0x3f8] sm:$0xff]
      %v277 = vld [vmem:[%s148 + $0x400] sm:$0xff]
      %v278 = vld [vmem:[%s148 + $0x408] sm:$0xff]
      %v279 = vld [vmem:[%s148 + $0x410] sm:$0xff]
      %v280 = vld [vmem:[%s148 + $0x418] sm:$0xff]
      %v281 = vld [vmem:[%s148 + $0x420] sm:$0xff]
      %v282 = vld [vmem:[%s148 + $0x428] sm:$0xff]
      %v283 = vld [vmem:[%s148 + $0x430] sm:$0xff]
      %v284 = vld [vmem:[%s148 + $0x438] sm:$0xff]
      %v285 = vld [vmem:[%s148 + $0x440] sm:$0xff]
      %v286 = vld [vmem:[%s148 + $0x448] sm:$0xff]
      %v287 = vld [vmem:[%s148 + $0x450] sm:$0xff]
      %v288 = vld [vmem:[%s148 + $0x458] sm:$0xff]
      %v289 = vld [vmem:[%s148 + $0x460] sm:$0xff]
      %v290 = vld [vmem:[%s148 + $0x468] sm:$0xff]
      %v291 = vld [vmem:[%s148 + $0x470] sm:$0xff]
      %v292 = vld [vmem:[%s148 + $0x478] sm:$0xff]
      %v293 = vxor.u32 %v149, 2147483648
      %v294 = vxor.u32 %v150, 2147483648
      %v295 = vxor.u32 %v151, 2147483648
      %v296 = vxor.u32 %v152, 2147483648
      %v297 = vxor.u32 %v153, 2147483648
      %v298 = vxor.u32 %v154, 2147483648
      %v299 = vxor.u32 %v155, 2147483648
      %v300 = vxor.u32 %v156, 2147483648
      %v301 = vxor.u32 %v157, 2147483648
      %v302 = vxor.u32 %v158, 2147483648
      %v303 = vxor.u32 %v159, 2147483648
      %v304 = vxor.u32 %v160, 2147483648
      %v305 = vxor.u32 %v161, 2147483648
      %v306 = vxor.u32 %v162, 2147483648
      %v307 = vxor.u32 %v163, 2147483648
      %v308 = vxor.u32 %v164, 2147483648
      %v309 = vxor.u32 %v165, 2147483648
      %v310 = vxor.u32 %v166, 2147483648
      %v311 = vxor.u32 %v167, 2147483648
      %v312 = vxor.u32 %v168, 2147483648
      %v313 = vxor.u32 %v169, 2147483648
      %v314 = vxor.u32 %v170, 2147483648
      %v315 = vxor.u32 %v171, 2147483648
      %v316 = vxor.u32 %v172, 2147483648
      %v317 = vxor.u32 %v173, 2147483648
      %v318 = vxor.u32 %v174, 2147483648
      %v319 = vxor.u32 %v175, 2147483648
      %v320 = vxor.u32 %v176, 2147483648
      %v321 = vxor.u32 %v177, 2147483648
      %v322 = vxor.u32 %v178, 2147483648
      %v323 = vxor.u32 %v179, 2147483648
      %v324 = vxor.u32 %v180, 2147483648
      %v325 = vxor.u32 %v181, 2147483648
      %v326 = vxor.u32 %v182, 2147483648
      %v327 = vxor.u32 %v183, 2147483648
      %v328 = vxor.u32 %v184, 2147483648
      %v329 = vxor.u32 %v185, 2147483648
      %v330 = vxor.u32 %v186, 2147483648
      %v331 = vxor.u32 %v187, 2147483648
      %v332 = vxor.u32 %v188, 2147483648
      %v333 = vxor.u32 %v189, 2147483648
      %v334 = vxor.u32 %v190, 2147483648
      %v335 = vxor.u32 %v191, 2147483648
      %v336 = vxor.u32 %v192, 2147483648
      %v337 = vxor.u32 %v193, 2147483648
      %v338 = vxor.u32 %v194, 2147483648
      %v339 = vxor.u32 %v195, 2147483648
      %v340 = vxor.u32 %v196, 2147483648
      %v341 = vxor.u32 %v197, 2147483648
      %v342 = vxor.u32 %v198, 2147483648
      %v343 = vxor.u32 %v199, 2147483648
      %v344 = vxor.u32 %v200, 2147483648
      %v345 = vxor.u32 %v201, 2147483648
      %v346 = vxor.u32 %v202, 2147483648
      %v347 = vxor.u32 %v203, 2147483648
      %v348 = vxor.u32 %v204, 2147483648
      %v349 = vxor.u32 %v205, 2147483648
      %v350 = vxor.u32 %v206, 2147483648
      %v351 = vxor.u32 %v207, 2147483648
      %v352 = vxor.u32 %v208, 2147483648
      %v353 = vxor.u32 %v209, 2147483648
      %v354 = vxor.u32 %v210, 2147483648
      %v355 = vxor.u32 %v211, 2147483648
      %v356 = vxor.u32 %v212, 2147483648
      %v357 = vxor.u32 %v213, 2147483648
      %v358 = vxor.u32 %v214, 2147483648
      %v359 = vxor.u32 %v215, 2147483648
      %v360 = vxor.u32 %v216, 2147483648
      %v361 = vxor.u32 %v217, 2147483648
      %v362 = vxor.u32 %v218, 2147483648
      %v363 = vxor.u32 %v219, 2147483648
      %v364 = vxor.u32 %v220, 2147483648
      %v365 = vxor.u32 %v221, 2147483648
      %v366 = vxor.u32 %v222, 2147483648
      %v367 = vxor.u32 %v223, 2147483648
      %v368 = vxor.u32 %v224, 2147483648
      %v369 = vxor.u32 %v225, 2147483648
      %v370 = vxor.u32 %v226, 2147483648
      %v371 = vxor.u32 %v227, 2147483648
      %v372 = vxor.u32 %v228, 2147483648
      %v373 = vxor.u32 %v229, 2147483648
      %v374 = vxor.u32 %v230, 2147483648
      %v375 = vxor.u32 %v231, 2147483648
      %v376 = vxor.u32 %v232, 2147483648
      %v377 = vxor.u32 %v233, 2147483648
      %v378 = vxor.u32 %v234, 2147483648
      %v379 = vxor.u32 %v235, 2147483648
      %v380 = vxor.u32 %v236, 2147483648
      %v381 = vxor.u32 %v237, 2147483648
      %v382 = vxor.u32 %v238, 2147483648
      %v383 = vxor.u32 %v239, 2147483648
      %v384 = vxor.u32 %v240, 2147483648
      %v385 = vxor.u32 %v241, 2147483648
      %v386 = vxor.u32 %v242, 2147483648
      %v387 = vxor.u32 %v243, 2147483648
      %v388 = vxor.u32 %v244, 2147483648
      %v389 = vxor.u32 %v245, 2147483648
      %v390 = vxor.u32 %v246, 2147483648
      %v391 = vxor.u32 %v247, 2147483648
      %v392 = vxor.u32 %v248, 2147483648
      %v393 = vxor.u32 %v249, 2147483648
      %v394 = vxor.u32 %v250, 2147483648
      %v395 = vxor.u32 %v251, 2147483648
      %v396 = vxor.u32 %v252, 2147483648
      %v397 = vxor.u32 %v253, 2147483648
      %v398 = vxor.u32 %v254, 2147483648
      %v399 = vxor.u32 %v255, 2147483648
      %v400 = vxor.u32 %v256, 2147483648
      %v401 = vxor.u32 %v257, 2147483648
      %v402 = vxor.u32 %v258, 2147483648
      %v403 = vxor.u32 %v259, 2147483648
      %v404 = vxor.u32 %v260, 2147483648
      %v405 = vxor.u32 %v261, 2147483648
      %v406 = vxor.u32 %v262, 2147483648
      %v407 = vxor.u32 %v263, 2147483648
      %v408 = vxor.u32 %v264, 2147483648
      %v409 = vxor.u32 %v265, 2147483648
      %v410 = vxor.u32 %v266, 2147483648
      %v411 = vxor.u32 %v267, 2147483648
      %v412 = vxor.u32 %v268, 2147483648
      %v413 = vxor.u32 %v269, 2147483648
      %v414 = vxor.u32 %v270, 2147483648
      %v415 = vxor.u32 %v271, 2147483648
      %v416 = vxor.u32 %v272, 2147483648
      %v417 = vxor.u32 %v273, 2147483648
      %v418 = vxor.u32 %v274, 2147483648
      %v419 = vxor.u32 %v275, 2147483648
      %v420 = vxor.u32 %v276, 2147483648
      %v421 = vxor.u32 %v277, 2147483648
      %v422 = vxor.u32 %v278, 2147483648
      %v423 = vxor.u32 %v279, 2147483648
      %v424 = vxor.u32 %v280, 2147483648
      %v425 = vxor.u32 %v281, 2147483648
      %v426 = vxor.u32 %v282, 2147483648
      %v427 = vxor.u32 %v283, 2147483648
      %v428 = vxor.u32 %v284, 2147483648
      %v429 = vxor.u32 %v285, 2147483648
      %v430 = vxor.u32 %v286, 2147483648
      %v431 = vxor.u32 %v287, 2147483648
      %v432 = vxor.u32 %v288, 2147483648
      %v433 = vxor.u32 %v289, 2147483648
      %v434 = vxor.u32 %v290, 2147483648
      %v435 = vxor.u32 %v291, 2147483648
      %v436 = vxor.u32 %v292, 2147483648
      %v437 = vmul.f32 %v293, 1.442695
      %v438 = vpow.pop %v437
      %v439 = vmul.f32 %v294, 1.442695
      %v440 = vpow.pop %v439
      %v441 = vmul.f32 %v295, 1.442695
      %v442 = vpow.pop %v441
      %v443 = vmul.f32 %v296, 1.442695
      %v444 = vpow.pop %v443
      %v445 = vmul.f32 %v297, 1.442695
      %v446 = vpow.pop %v445
      %v447 = vmul.f32 %v298, 1.442695
      %v448 = vpow.pop %v447
      %v449 = vmul.f32 %v299, 1.442695
      %v450 = vpow.pop %v449
      %v451 = vmul.f32 %v300, 1.442695
      %v452 = vpow.pop %v451
      %v453 = vmul.f32 %v301, 1.442695
      %v454 = vpow.pop %v453
      %v455 = vmul.f32 %v302, 1.442695
      %v456 = vpow.pop %v455
      %v457 = vmul.f32 %v303, 1.442695
      %v458 = vpow.pop %v457
      %v459 = vmul.f32 %v304, 1.442695
      %v460 = vpow.pop %v459
      %v461 = vmul.f32 %v305, 1.442695
      %v462 = vpow.pop %v461
      %v463 = vmul.f32 %v306, 1.442695
      %v464 = vpow.pop %v463
      %v465 = vmul.f32 %v307, 1.442695
      %v466 = vpow.pop %v465
      %v467 = vmul.f32 %v308, 1.442695
      %v468 = vpow.pop %v467
      %v469 = vmul.f32 %v309, 1.442695
      %v470 = vpow.pop %v469
      %v471 = vmul.f32 %v310, 1.442695
      %v472 = vpow.pop %v471
      %v473 = vmul.f32 %v311, 1.442695
      %v474 = vpow.pop %v473
      %v475 = vmul.f32 %v312, 1.442695
      %v476 = vpow.pop %v475
      %v477 = vmul.f32 %v313, 1.442695
      %v478 = vpow.pop %v477
      %v479 = vmul.f32 %v314, 1.442695
      %v480 = vpow.pop %v479
      %v481 = vmul.f32 %v315, 1.442695
      %v482 = vpow.pop %v481
      %v483 = vmul.f32 %v316, 1.442695
      %v484 = vpow.pop %v483
      %v485 = vmul.f32 %v317, 1.442695
      %v486 = vpow.pop %v485
      %v487 = vmul.f32 %v318, 1.442695
      %v488 = vpow.pop %v487
      %v489 = vmul.f32 %v319, 1.442695
      %v490 = vpow.pop %v489
      %v491 = vmul.f32 %v320, 1.442695
      %v492 = vpow.pop %v491
      %v493 = vmul.f32 %v321, 1.442695
      %v494 = vpow.pop %v493
      %v495 = vmul.f32 %v322, 1.442695
      %v496 = vpow.pop %v495
      %v497 = vmul.f32 %v323, 1.442695
      %v498 = vpow.pop %v497
      %v499 = vmul.f32 %v324, 1.442695
      %v500 = vpow.pop %v499
      %v501 = vmul.f32 %v325, 1.442695
      %v502 = vpow.pop %v501
      %v503 = vmul.f32 %v326, 1.442695
      %v504 = vpow.pop %v503
      %v505 = vmul.f32 %v327, 1.442695
      %v506 = vpow.pop %v505
      %v507 = vmul.f32 %v328, 1.442695
      %v508 = vpow.pop %v507
      %v509 = vmul.f32 %v329, 1.442695
      %v510 = vpow.pop %v509
      %v511 = vmul.f32 %v330, 1.442695
      %v512 = vpow.pop %v511
      %v513 = vmul.f32 %v331, 1.442695
      %v514 = vpow.pop %v513
      %v515 = vmul.f32 %v332, 1.442695
      %v516 = vpow.pop %v515
      %v517 = vmul.f32 %v333, 1.442695
      %v518 = vpow.pop %v517
      %v519 = vmul.f32 %v334, 1.442695
      %v520 = vpow.pop %v519
      %v521 = vmul.f32 %v335, 1.442695
      %v522 = vpow.pop %v521
      %v523 = vmul.f32 %v336, 1.442695
      %v524 = vpow.pop %v523
      %v525 = vmul.f32 %v337, 1.442695
      %v526 = vpow.pop %v525
      %v527 = vmul.f32 %v338, 1.442695
      %v528 = vpow.pop %v527
      %v529 = vmul.f32 %v339, 1.442695
      %v530 = vpow.pop %v529
      %v531 = vmul.f32 %v340, 1.442695
      %v532 = vpow.pop %v531
      %v533 = vmul.f32 %v341, 1.442695
      %v534 = vpow.pop %v533
      %v535 = vmul.f32 %v342, 1.442695
      %v536 = vpow.pop %v535
      %v537 = vmul.f32 %v343, 1.442695
      %v538 = vpow.pop %v537
      %v539 = vmul.f32 %v344, 1.442695
      %v540 = vpow.pop %v539
      %v541 = vmul.f32 %v345, 1.442695
      %v542 = vpow.pop %v541
      %v543 = vmul.f32 %v346, 1.442695
      %v544 = vpow.pop %v543
      %v545 = vmul.f32 %v347, 1.442695
      %v546 = vpow.pop %v545
      %v547 = vmul.f32 %v348, 1.442695
      %v548 = vpow.pop %v547
      %v549 = vmul.f32 %v349, 1.442695
      %v550 = vpow.pop %v549
      %v551 = vmul.f32 %v350, 1.442695
      %v552 = vpow.pop %v551
      %v553 = vmul.f32 %v351, 1.442695
      %v554 = vpow.pop %v553
      %v555 = vmul.f32 %v352, 1.442695
      %v556 = vpow.pop %v555
      %v557 = vmul.f32 %v353, 1.442695
      %v558 = vpow.pop %v557
      %v559 = vmul.f32 %v354, 1.442695
      %v560 = vpow.pop %v559
      %v561 = vmul.f32 %v355, 1.442695
      %v562 = vpow.pop %v561
      %v563 = vmul.f32 %v356, 1.442695
      %v564 = vpow.pop %v563
      %v565 = vmul.f32 %v357, 1.442695
      %v566 = vpow.pop %v565
      %v567 = vmul.f32 %v358, 1.442695
      %v568 = vpow.pop %v567
      %v569 = vmul.f32 %v359, 1.442695
      %v570 = vpow.pop %v569
      %v571 = vmul.f32 %v360, 1.442695
      %v572 = vpow.pop %v571
      %v573 = vmul.f32 %v361, 1.442695
      %v574 = vpow.pop %v573
      %v575 = vmul.f32 %v362, 1.442695
      %v576 = vpow.pop %v575
      %v577 = vmul.f32 %v363, 1.442695
      %v578 = vpow.pop %v577
      %v579 = vmul.f32 %v364, 1.442695
      %v580 = vpow.pop %v579
      %v581 = vmul.f32 %v365, 1.442695
      %v582 = vpow.pop %v581
      %v583 = vmul.f32 %v366, 1.442695
      %v584 = vpow.pop %v583
      %v585 = vmul.f32 %v367, 1.442695
      %v586 = vpow.pop %v585
      %v587 = vmul.f32 %v368, 1.442695
      %v588 = vpow.pop %v587
      %v589 = vmul.f32 %v369, 1.442695
      %v590 = vpow.pop %v589
      %v591 = vmul.f32 %v370, 1.442695
      %v592 = vpow.pop %v591
      %v593 = vmul.f32 %v371, 1.442695
      %v594 = vpow.pop %v593
      %v595 = vmul.f32 %v372, 1.442695
      %v596 = vpow.pop %v595
      %v597 = vmul.f32 %v373, 1.442695
      %v598 = vpow.pop %v597
      %v599 = vmul.f32 %v374, 1.442695
      %v600 = vpow.pop %v599
      %v601 = vmul.f32 %v375, 1.442695
      %v602 = vpow.pop %v601
      %v603 = vmul.f32 %v376, 1.442695
      %v604 = vpow.pop %v603
      %v605 = vmul.f32 %v377, 1.442695
      %v606 = vpow.pop %v605
      %v607 = vmul.f32 %v378, 1.442695
      %v608 = vpow.pop %v607
      %v609 = vmul.f32 %v379, 1.442695
      %v610 = vpow.pop %v609
      %v611 = vmul.f32 %v380, 1.442695
      %v612 = vpow.pop %v611
      %v613 = vmul.f32 %v381, 1.442695
      %v614 = vpow.pop %v613
      %v615 = vmul.f32 %v382, 1.442695
      %v616 = vpow.pop %v615
      %v617 = vmul.f32 %v383, 1.442695
      %v618 = vpow.pop %v617
      %v619 = vmul.f32 %v384, 1.442695
      %v620 = vpow.pop %v619
      %v621 = vmul.f32 %v385, 1.442695
      %v622 = vpow.pop %v621
      %v623 = vmul.f32 %v386, 1.442695
      %v624 = vpow.pop %v623
      %v625 = vmul.f32 %v387, 1.442695
      %v626 = vpow.pop %v625
      %v627 = vmul.f32 %v388, 1.442695
      %v628 = vpow.pop %v627
      %v629 = vmul.f32 %v389, 1.442695
      %v630 = vpow.pop %v629
      %v631 = vmul.f32 %v390, 1.442695
      %v632 = vpow.pop %v631
      %v633 = vmul.f32 %v391, 1.442695
      %v634 = vpow.pop %v633
      %v635 = vmul.f32 %v392, 1.442695
      %v636 = vpow.pop %v635
      %v637 = vmul.f32 %v393, 1.442695
      %v638 = vpow.pop %v637
      %v639 = vmul.f32 %v394, 1.442695
      %v640 = vpow.pop %v639
      %v641 = vmul.f32 %v395, 1.442695
      %v642 = vpow.pop %v641
      %v643 = vmul.f32 %v396, 1.442695
      %v644 = vpow.pop %v643
      %v645 = vmul.f32 %v397, 1.442695
      %v646 = vpow.pop %v645
      %v647 = vmul.f32 %v398, 1.442695
      %v648 = vpow.pop %v647
      %v649 = vmul.f32 %v399, 1.442695
      %v650 = vpow.pop %v649
      %v651 = vmul.f32 %v400, 1.442695
      %v652 = vpow.pop %v651
      %v653 = vmul.f32 %v401, 1.442695
      %v654 = vpow.pop %v653
      %v655 = vmul.f32 %v402, 1.442695
      %v656 = vpow.pop %v655
      %v657 = vmul.f32 %v403, 1.442695
      %v658 = vpow.pop %v657
      %v659 = vmul.f32 %v404, 1.442695
      %v660 = vpow.pop %v659
      %v661 = vmul.f32 %v405, 1.442695
      %v662 = vpow.pop %v661
      %v663 = vmul.f32 %v406, 1.442695
      %v664 = vpow.pop %v663
      %v665 = vmul.f32 %v407, 1.442695
      %v666 = vpow.pop %v665
      %v667 = vmul.f32 %v408, 1.442695
      %v668 = vpow.pop %v667
      %v669 = vmul.f32 %v409, 1.442695
      %v670 = vpow.pop %v669
      %v671 = vmul.f32 %v410, 1.442695
      %v672 = vpow.pop %v671
      %v673 = vmul.f32 %v411, 1.442695
      %v674 = vpow.pop %v673
      %v675 = vmul.f32 %v412, 1.442695
      %v676 = vpow.pop %v675
      %v677 = vmul.f32 %v413, 1.442695
      %v678 = vpow.pop %v677
      %v679 = vmul.f32 %v414, 1.442695
      %v680 = vpow.pop %v679
      %v681 = vmul.f32 %v415, 1.442695
      %v682 = vpow.pop %v681
      %v683 = vmul.f32 %v416, 1.442695
      %v684 = vpow.pop %v683
      %v685 = vmul.f32 %v417, 1.442695
      %v686 = vpow.pop %v685
      %v687 = vmul.f32 %v418, 1.442695
      %v688 = vpow.pop %v687
      %v689 = vmul.f32 %v419, 1.442695
      %v690 = vpow.pop %v689
      %v691 = vmul.f32 %v420, 1.442695
      %v692 = vpow.pop %v691
      %v693 = vmul.f32 %v421, 1.442695
      %v694 = vpow.pop %v693
      %v695 = vmul.f32 %v422, 1.442695
      %v696 = vpow.pop %v695
      %v697 = vmul.f32 %v423, 1.442695
      %v698 = vpow.pop %v697
      %v699 = vmul.f32 %v424, 1.442695
      %v700 = vpow.pop %v699
      %v701 = vmul.f32 %v425, 1.442695
      %v702 = vpow.pop %v701
      %v703 = vmul.f32 %v426, 1.442695
      %v704 = vpow.pop %v703
      %v705 = vmul.f32 %v427, 1.442695
      %v706 = vpow.pop %v705
      %v707 = vmul.f32 %v428, 1.442695
      %v708 = vpow.pop %v707
      %v709 = vmul.f32 %v429, 1.442695
      %v710 = vpow.pop %v709
      %v711 = vmul.f32 %v430, 1.442695
      %v712 = vpow.pop %v711
      %v713 = vmul.f32 %v431, 1.442695
      %v714 = vpow.pop %v713
      %v715 = vmul.f32 %v432, 1.442695
      %v716 = vpow.pop %v715
      %v717 = vmul.f32 %v433, 1.442695
      %v718 = vpow.pop %v717
      %v719 = vmul.f32 %v434, 1.442695
      %v720 = vpow.pop %v719
      %v721 = vmul.f32 %v435, 1.442695
      %v722 = vpow.pop %v721
      %v723 = vmul.f32 %v436, 1.442695
      %v724 = vpow.pop %v723
      %v725 = vadd.f32 %v438, 1.0
      %v726 = vadd.f32 %v440, 1.0
      %v727 = vadd.f32 %v442, 1.0
      %v728 = vadd.f32 %v444, 1.0
      %v729 = vadd.f32 %v446, 1.0
      %v730 = vadd.f32 %v448, 1.0
      %v731 = vadd.f32 %v450, 1.0
      %v732 = vadd.f32 %v452, 1.0
      %v733 = vadd.f32 %v454, 1.0
      %v734 = vadd.f32 %v456, 1.0
      %v735 = vadd.f32 %v458, 1.0
      %v736 = vadd.f32 %v460, 1.0
      %v737 = vadd.f32 %v462, 1.0
      %v738 = vadd.f32 %v464, 1.0
      %v739 = vadd.f32 %v466, 1.0
      %v740 = vadd.f32 %v468, 1.0
      %v741 = vadd.f32 %v470, 1.0
      %v742 = vadd.f32 %v472, 1.0
      %v743 = vadd.f32 %v474, 1.0
      %v744 = vadd.f32 %v476, 1.0
      %v745 = vadd.f32 %v478, 1.0
      %v746 = vadd.f32 %v480, 1.0
      %v747 = vadd.f32 %v482, 1.0
      %v748 = vadd.f32 %v484, 1.0
      %v749 = vadd.f32 %v486, 1.0
      %v750 = vadd.f32 %v488, 1.0
      %v751 = vadd.f32 %v490, 1.0
      %v752 = vadd.f32 %v492, 1.0
      %v753 = vadd.f32 %v494, 1.0
      %v754 = vadd.f32 %v496, 1.0
      %v755 = vadd.f32 %v498, 1.0
      %v756 = vadd.f32 %v500, 1.0
      %v757 = vadd.f32 %v502, 1.0
      %v758 = vadd.f32 %v504, 1.0
      %v759 = vadd.f32 %v506, 1.0
      %v760 = vadd.f32 %v508, 1.0
      %v761 = vadd.f32 %v510, 1.0
      %v762 = vadd.f32 %v512, 1.0
      %v763 = vadd.f32 %v514, 1.0
      %v764 = vadd.f32 %v516, 1.0
      %v765 = vadd.f32 %v518, 1.0
      %v766 = vadd.f32 %v520, 1.0
      %v767 = vadd.f32 %v522, 1.0
      %v768 = vadd.f32 %v524, 1.0
      %v769 = vadd.f32 %v526, 1.0
      %v770 = vadd.f32 %v528, 1.0
      %v771 = vadd.f32 %v530, 1.0
      %v772 = vadd.f32 %v532, 1.0
      %v773 = vadd.f32 %v534, 1.0
      %v774 = vadd.f32 %v536, 1.0
      %v775 = vadd.f32 %v538, 1.0
      %v776 = vadd.f32 %v540, 1.0
      %v777 = vadd.f32 %v542, 1.0
      %v778 = vadd.f32 %v544, 1.0
      %v779 = vadd.f32 %v546, 1.0
      %v780 = vadd.f32 %v548, 1.0
      %v781 = vadd.f32 %v550, 1.0
      %v782 = vadd.f32 %v552, 1.0
      %v783 = vadd.f32 %v554, 1.0
      %v784 = vadd.f32 %v556, 1.0
      %v785 = vadd.f32 %v558, 1.0
      %v786 = vadd.f32 %v560, 1.0
      %v787 = vadd.f32 %v562, 1.0
      %v788 = vadd.f32 %v564, 1.0
      %v789 = vadd.f32 %v566, 1.0
      %v790 = vadd.f32 %v568, 1.0
      %v791 = vadd.f32 %v570, 1.0
      %v792 = vadd.f32 %v572, 1.0
      %v793 = vadd.f32 %v574, 1.0
      %v794 = vadd.f32 %v576, 1.0
      %v795 = vadd.f32 %v578, 1.0
      %v796 = vadd.f32 %v580, 1.0
      %v797 = vadd.f32 %v582, 1.0
      %v798 = vadd.f32 %v584, 1.0
      %v799 = vadd.f32 %v586, 1.0
      %v800 = vadd.f32 %v588, 1.0
      %v801 = vadd.f32 %v590, 1.0
      %v802 = vadd.f32 %v592, 1.0
      %v803 = vadd.f32 %v594, 1.0
      %v804 = vadd.f32 %v596, 1.0
      %v805 = vadd.f32 %v598, 1.0
      %v806 = vadd.f32 %v600, 1.0
      %v807 = vadd.f32 %v602, 1.0
      %v808 = vadd.f32 %v604, 1.0
      %v809 = vadd.f32 %v606, 1.0
      %v810 = vadd.f32 %v608, 1.0
      %v811 = vadd.f32 %v610, 1.0
      %v812 = vadd.f32 %v612, 1.0
      %v813 = vadd.f32 %v614, 1.0
      %v814 = vadd.f32 %v616, 1.0
      %v815 = vadd.f32 %v618, 1.0
      %v816 = vadd.f32 %v620, 1.0
      %v817 = vadd.f32 %v622, 1.0
      %v818 = vadd.f32 %v624, 1.0
      %v819 = vadd.f32 %v626, 1.0
      %v820 = vadd.f32 %v628, 1.0
      %v821 = vadd.f32 %v630, 1.0
      %v822 = vadd.f32 %v632, 1.0
      %v823 = vadd.f32 %v634, 1.0
      %v824 = vadd.f32 %v636, 1.0
      %v825 = vadd.f32 %v638, 1.0
      %v826 = vadd.f32 %v640, 1.0
      %v827 = vadd.f32 %v642, 1.0
      %v828 = vadd.f32 %v644, 1.0
      %v829 = vadd.f32 %v646, 1.0
      %v830 = vadd.f32 %v648, 1.0
      %v831 = vadd.f32 %v650, 1.0
      %v832 = vadd.f32 %v652, 1.0
      %v833 = vadd.f32 %v654, 1.0
      %v834 = vadd.f32 %v656, 1.0
      %v835 = vadd.f32 %v658, 1.0
      %v836 = vadd.f32 %v660, 1.0
      %v837 = vadd.f32 %v662, 1.0
      %v838 = vadd.f32 %v664, 1.0
      %v839 = vadd.f32 %v666, 1.0
      %v840 = vadd.f32 %v668, 1.0
      %v841 = vadd.f32 %v670, 1.0
      %v842 = vadd.f32 %v672, 1.0
      %v843 = vadd.f32 %v674, 1.0
      %v844 = vadd.f32 %v676, 1.0
      %v845 = vadd.f32 %v678, 1.0
      %v846 = vadd.f32 %v680, 1.0
      %v847 = vadd.f32 %v682, 1.0
      %v848 = vadd.f32 %v684, 1.0
      %v849 = vadd.f32 %v686, 1.0
      %v850 = vadd.f32 %v688, 1.0
      %v851 = vadd.f32 %v690, 1.0
      %v852 = vadd.f32 %v692, 1.0
      %v853 = vadd.f32 %v694, 1.0
      %v854 = vadd.f32 %v696, 1.0
      %v855 = vadd.f32 %v698, 1.0
      %v856 = vadd.f32 %v700, 1.0
      %v857 = vadd.f32 %v702, 1.0
      %v858 = vadd.f32 %v704, 1.0
      %v859 = vadd.f32 %v706, 1.0
      %v860 = vadd.f32 %v708, 1.0
      %v861 = vadd.f32 %v710, 1.0
      %v862 = vadd.f32 %v712, 1.0
      %v863 = vadd.f32 %v714, 1.0
      %v864 = vadd.f32 %v716, 1.0
      %v865 = vadd.f32 %v718, 1.0
      %v866 = vadd.f32 %v720, 1.0
      %v867 = vadd.f32 %v722, 1.0
      %v868 = vadd.f32 %v724, 1.0
      %v869 = vrcp.pop %v725
      %v870 = vmul.f32 %v725, %v869
      %v871 = vsub.f32 1.0, %v870
      %v872 = vmul.f32 %v869, %v871
      %v873 = vadd.f32 %v869, %v872
      %vm874 = vweird.f32 %v725
      %vm875 = vweird.f32 %v869
      %vm876 = vmor %vm874, %vm875
      %v877 = vsel %vm876, %v869, %v873
      %v878 = vand.u32 2147483647, %v725
      %vm879 = vcmp.eq.f32.partialorder %v878, 8.507059e+37
      %v880 = vand.u32 %v725, 2147483648
      %v881 = vor.u32 1.1754944e-38, %v880
      %v882 = vsel %vm879, %v881, %v877
      %v883 = vmul.f32 1.0, %v882
      %v884 = vrcp.pop %v726
      %v885 = vmul.f32 %v726, %v884
      %v886 = vsub.f32 1.0, %v885
      %v887 = vmul.f32 %v884, %v886
      %v888 = vadd.f32 %v884, %v887
      %vm889 = vweird.f32 %v726
      %vm890 = vweird.f32 %v884
      %vm891 = vmor %vm889, %vm890
      %v892 = vsel %vm891, %v884, %v888
      %v893 = vand.u32 2147483647, %v726
      %vm894 = vcmp.eq.f32.partialorder %v893, 8.507059e+37
      %v895 = vand.u32 %v726, 2147483648
      %v896 = vor.u32 1.1754944e-38, %v895
      %v897 = vsel %vm894, %v896, %v892
      %v898 = vmul.f32 1.0, %v897
      %v899 = vrcp.pop %v727
      %v900 = vmul.f32 %v727, %v899
      %v901 = vsub.f32 1.0, %v900
      %v902 = vmul.f32 %v899, %v901
      %v903 = vadd.f32 %v899, %v902
      %vm904 = vweird.f32 %v727
      %vm905 = vweird.f32 %v899
      %vm906 = vmor %vm904, %vm905
      %v907 = vsel %vm906, %v899, %v903
      %v908 = vand.u32 2147483647, %v727
      %vm909 = vcmp.eq.f32.partialorder %v908, 8.507059e+37
      %v910 = vand.u32 %v727, 2147483648
      %v911 = vor.u32 1.1754944e-38, %v910
      %v912 = vsel %vm909, %v911, %v907
      %v913 = vmul.f32 1.0, %v912
      %v914 = vrcp.pop %v728
      %v915 = vmul.f32 %v728, %v914
      %v916 = vsub.f32 1.0, %v915
      %v917 = vmul.f32 %v914, %v916
      %v918 = vadd.f32 %v914, %v917
      %vm919 = vweird.f32 %v728
      %vm920 = vweird.f32 %v914
      %vm921 = vmor %vm919, %vm920
      %v922 = vsel %vm921, %v914, %v918
      %v923 = vand.u32 2147483647, %v728
      %vm924 = vcmp.eq.f32.partialorder %v923, 8.507059e+37
      %v925 = vand.u32 %v728, 2147483648
      %v926 = vor.u32 1.1754944e-38, %v925
      %v927 = vsel %vm924, %v926, %v922
      %v928 = vmul.f32 1.0, %v927
      %v929 = vrcp.pop %v729
      %v930 = vmul.f32 %v729, %v929
      %v931 = vsub.f32 1.0, %v930
      %v932 = vmul.f32 %v929, %v931
      %v933 = vadd.f32 %v929, %v932
      %vm934 = vweird.f32 %v729
      %vm935 = vweird.f32 %v929
      %vm936 = vmor %vm934, %vm935
      %v937 = vsel %vm936, %v929, %v933
      %v938 = vand.u32 2147483647, %v729
      %vm939 = vcmp.eq.f32.partialorder %v938, 8.507059e+37
      %v940 = vand.u32 %v729, 2147483648
      %v941 = vor.u32 1.1754944e-38, %v940
      %v942 = vsel %vm939, %v941, %v937
      %v943 = vmul.f32 1.0, %v942
      %v944 = vrcp.pop %v730
      %v945 = vmul.f32 %v730, %v944
      %v946 = vsub.f32 1.0, %v945
      %v947 = vmul.f32 %v944, %v946
      %v948 = vadd.f32 %v944, %v947
      %vm949 = vweird.f32 %v730
      %vm950 = vweird.f32 %v944
      %vm951 = vmor %vm949, %vm950
      %v952 = vsel %vm951, %v944, %v948
      %v953 = vand.u32 2147483647, %v730
      %vm954 = vcmp.eq.f32.partialorder %v953, 8.507059e+37
      %v955 = vand.u32 %v730, 2147483648
      %v956 = vor.u32 1.1754944e-38, %v955
      %v957 = vsel %vm954, %v956, %v952
      %v958 = vmul.f32 1.0, %v957
      %v959 = vrcp.pop %v731
      %v960 = vmul.f32 %v731, %v959
      %v961 = vsub.f32 1.0, %v960
      %v962 = vmul.f32 %v959, %v961
      %v963 = vadd.f32 %v959, %v962
      %vm964 = vweird.f32 %v731
      %vm965 = vweird.f32 %v959
      %vm966 = vmor %vm964, %vm965
      %v967 = vsel %vm966, %v959, %v963
      %v968 = vand.u32 2147483647, %v731
      %vm969 = vcmp.eq.f32.partialorder %v968, 8.507059e+37
      %v970 = vand.u32 %v731, 2147483648
      %v971 = vor.u32 1.1754944e-38, %v970
      %v972 = vsel %vm969, %v971, %v967
      %v973 = vmul.f32 1.0, %v972
      %v974 = vrcp.pop %v732
      %v975 = vmul.f32 %v732, %v974
      %v976 = vsub.f32 1.0, %v975
      %v977 = vmul.f32 %v974, %v976
      %v978 = vadd.f32 %v974, %v977
      %vm979 = vweird.f32 %v732
      %vm980 = vweird.f32 %v974
      %vm981 = vmor %vm979, %vm980
      %v982 = vsel %vm981, %v974, %v978
      %v983 = vand.u32 2147483647, %v732
      %vm984 = vcmp.eq.f32.partialorder %v983, 8.507059e+37
      %v985 = vand.u32 %v732, 2147483648
      %v986 = vor.u32 1.1754944e-38, %v985
      %v987 = vsel %vm984, %v986, %v982
      %v988 = vmul.f32 1.0, %v987
      %v989 = vrcp.pop %v733
      %v990 = vmul.f32 %v733, %v989
      %v991 = vsub.f32 1.0, %v990
      %v992 = vmul.f32 %v989, %v991
      %v993 = vadd.f32 %v989, %v992
      %vm994 = vweird.f32 %v733
      %vm995 = vweird.f32 %v989
      %vm996 = vmor %vm994, %vm995
      %v997 = vsel %vm996, %v989, %v993
      %v998 = vand.u32 2147483647, %v733
      %vm999 = vcmp.eq.f32.partialorder %v998, 8.507059e+37
      %v1000 = vand.u32 %v733, 2147483648
      %v1001 = vor.u32 1.1754944e-38, %v1000
      %v1002 = vsel %vm999, %v1001, %v997
      %v1003 = vmul.f32 1.0, %v1002
      %v1004 = vrcp.pop %v734
      %v1005 = vmul.f32 %v734, %v1004
      %v1006 = vsub.f32 1.0, %v1005
      %v1007 = vmul.f32 %v1004, %v1006
      %v1008 = vadd.f32 %v1004, %v1007
      %vm1009 = vweird.f32 %v734
      %vm1010 = vweird.f32 %v1004
      %vm1011 = vmor %vm1009, %vm1010
      %v1012 = vsel %vm1011, %v1004, %v1008
      %v1013 = vand.u32 2147483647, %v734
      %vm1014 = vcmp.eq.f32.partialorder %v1013, 8.507059e+37
      %v1015 = vand.u32 %v734, 2147483648
      %v1016 = vor.u32 1.1754944e-38, %v1015
      %v1017 = vsel %vm1014, %v1016, %v1012
      %v1018 = vmul.f32 1.0, %v1017
      %v1019 = vrcp.pop %v735
      %v1020 = vmul.f32 %v735, %v1019
      %v1021 = vsub.f32 1.0, %v1020
      %v1022 = vmul.f32 %v1019, %v1021
      %v1023 = vadd.f32 %v1019, %v1022
      %vm1024 = vweird.f32 %v735
      %vm1025 = vweird.f32 %v1019
      %vm1026 = vmor %vm1024, %vm1025
      %v1027 = vsel %vm1026, %v1019, %v1023
      %v1028 = vand.u32 2147483647, %v735
      %vm1029 = vcmp.eq.f32.partialorder %v1028, 8.507059e+37
      %v1030 = vand.u32 %v735, 2147483648
      %v1031 = vor.u32 1.1754944e-38, %v1030
      %v1032 = vsel %vm1029, %v1031, %v1027
      %v1033 = vmul.f32 1.0, %v1032
      %v1034 = vrcp.pop %v736
      %v1035 = vmul.f32 %v736, %v1034
      %v1036 = vsub.f32 1.0, %v1035
      %v1037 = vmul.f32 %v1034, %v1036
      %v1038 = vadd.f32 %v1034, %v1037
      %vm1039 = vweird.f32 %v736
      %vm1040 = vweird.f32 %v1034
      %vm1041 = vmor %vm1039, %vm1040
      %v1042 = vsel %vm1041, %v1034, %v1038
      %v1043 = vand.u32 2147483647, %v736
      %vm1044 = vcmp.eq.f32.partialorder %v1043, 8.507059e+37
      %v1045 = vand.u32 %v736, 2147483648
      %v1046 = vor.u32 1.1754944e-38, %v1045
      %v1047 = vsel %vm1044, %v1046, %v1042
      %v1048 = vmul.f32 1.0, %v1047
      %v1049 = vrcp.pop %v737
      %v1050 = vmul.f32 %v737, %v1049
      %v1051 = vsub.f32 1.0, %v1050
      %v1052 = vmul.f32 %v1049, %v1051
      %v1053 = vadd.f32 %v1049, %v1052
      %vm1054 = vweird.f32 %v737
      %vm1055 = vweird.f32 %v1049
      %vm1056 = vmor %vm1054, %vm1055
      %v1057 = vsel %vm1056, %v1049, %v1053
      %v1058 = vand.u32 2147483647, %v737
      %vm1059 = vcmp.eq.f32.partialorder %v1058, 8.507059e+37
      %v1060 = vand.u32 %v737, 2147483648
      %v1061 = vor.u32 1.1754944e-38, %v1060
      %v1062 = vsel %vm1059, %v1061, %v1057
      %v1063 = vmul.f32 1.0, %v1062
      %v1064 = vrcp.pop %v738
      %v1065 = vmul.f32 %v738, %v1064
      %v1066 = vsub.f32 1.0, %v1065
      %v1067 = vmul.f32 %v1064, %v1066
      %v1068 = vadd.f32 %v1064, %v1067
      %vm1069 = vweird.f32 %v738
      %vm1070 = vweird.f32 %v1064
      %vm1071 = vmor %vm1069, %vm1070
      %v1072 = vsel %vm1071, %v1064, %v1068
      %v1073 = vand.u32 2147483647, %v738
      %vm1074 = vcmp.eq.f32.partialorder %v1073, 8.507059e+37
      %v1075 = vand.u32 %v738, 2147483648
      %v1076 = vor.u32 1.1754944e-38, %v1075
      %v1077 = vsel %vm1074, %v1076, %v1072
      %v1078 = vmul.f32 1.0, %v1077
      %v1079 = vrcp.pop %v739
      %v1080 = vmul.f32 %v739, %v1079
      %v1081 = vsub.f32 1.0, %v1080
      %v1082 = vmul.f32 %v1079, %v1081
      %v1083 = vadd.f32 %v1079, %v1082
      %vm1084 = vweird.f32 %v739
      %vm1085 = vweird.f32 %v1079
      %vm1086 = vmor %vm1084, %vm1085
      %v1087 = vsel %vm1086, %v1079, %v1083
      %v1088 = vand.u32 2147483647, %v739
      %vm1089 = vcmp.eq.f32.partialorder %v1088, 8.507059e+37
      %v1090 = vand.u32 %v739, 2147483648
      %v1091 = vor.u32 1.1754944e-38, %v1090
      %v1092 = vsel %vm1089, %v1091, %v1087
      %v1093 = vmul.f32 1.0, %v1092
      %v1094 = vrcp.pop %v740
      %v1095 = vmul.f32 %v740, %v1094
      %v1096 = vsub.f32 1.0, %v1095
      %v1097 = vmul.f32 %v1094, %v1096
      %v1098 = vadd.f32 %v1094, %v1097
      %vm1099 = vweird.f32 %v740
      %vm1100 = vweird.f32 %v1094
      %vm1101 = vmor %vm1099, %vm1100
      %v1102 = vsel %vm1101, %v1094, %v1098
      %v1103 = vand.u32 2147483647, %v740
      %vm1104 = vcmp.eq.f32.partialorder %v1103, 8.507059e+37
      %v1105 = vand.u32 %v740, 2147483648
      %v1106 = vor.u32 1.1754944e-38, %v1105
      %v1107 = vsel %vm1104, %v1106, %v1102
      %v1108 = vmul.f32 1.0, %v1107
      %v1109 = vrcp.pop %v741
      %v1110 = vmul.f32 %v741, %v1109
      %v1111 = vsub.f32 1.0, %v1110
      %v1112 = vmul.f32 %v1109, %v1111
      %v1113 = vadd.f32 %v1109, %v1112
      %vm1114 = vweird.f32 %v741
      %vm1115 = vweird.f32 %v1109
      %vm1116 = vmor %vm1114, %vm1115
      %v1117 = vsel %vm1116, %v1109, %v1113
      %v1118 = vand.u32 2147483647, %v741
      %vm1119 = vcmp.eq.f32.partialorder %v1118, 8.507059e+37
      %v1120 = vand.u32 %v741, 2147483648
      %v1121 = vor.u32 1.1754944e-38, %v1120
      %v1122 = vsel %vm1119, %v1121, %v1117
      %v1123 = vmul.f32 1.0, %v1122
      %v1124 = vrcp.pop %v742
      %v1125 = vmul.f32 %v742, %v1124
      %v1126 = vsub.f32 1.0, %v1125
      %v1127 = vmul.f32 %v1124, %v1126
      %v1128 = vadd.f32 %v1124, %v1127
      %vm1129 = vweird.f32 %v742
      %vm1130 = vweird.f32 %v1124
      %vm1131 = vmor %vm1129, %vm1130
      %v1132 = vsel %vm1131, %v1124, %v1128
      %v1133 = vand.u32 2147483647, %v742
      %vm1134 = vcmp.eq.f32.partialorder %v1133, 8.507059e+37
      %v1135 = vand.u32 %v742, 2147483648
      %v1136 = vor.u32 1.1754944e-38, %v1135
      %v1137 = vsel %vm1134, %v1136, %v1132
      %v1138 = vmul.f32 1.0, %v1137
      %v1139 = vrcp.pop %v743
      %v1140 = vmul.f32 %v743, %v1139
      %v1141 = vsub.f32 1.0, %v1140
      %v1142 = vmul.f32 %v1139, %v1141
      %v1143 = vadd.f32 %v1139, %v1142
      %vm1144 = vweird.f32 %v743
      %vm1145 = vweird.f32 %v1139
      %vm1146 = vmor %vm1144, %vm1145
      %v1147 = vsel %vm1146, %v1139, %v1143
      %v1148 = vand.u32 2147483647, %v743
      %vm1149 = vcmp.eq.f32.partialorder %v1148, 8.507059e+37
      %v1150 = vand.u32 %v743, 2147483648
      %v1151 = vor.u32 1.1754944e-38, %v1150
      %v1152 = vsel %vm1149, %v1151, %v1147
      %v1153 = vmul.f32 1.0, %v1152
      %v1154 = vrcp.pop %v744
      %v1155 = vmul.f32 %v744, %v1154
      %v1156 = vsub.f32 1.0, %v1155
      %v1157 = vmul.f32 %v1154, %v1156
      %v1158 = vadd.f32 %v1154, %v1157
      %vm1159 = vweird.f32 %v744
      %vm1160 = vweird.f32 %v1154
      %vm1161 = vmor %vm1159, %vm1160
      %v1162 = vsel %vm1161, %v1154, %v1158
      %v1163 = vand.u32 2147483647, %v744
      %vm1164 = vcmp.eq.f32.partialorder %v1163, 8.507059e+37
      %v1165 = vand.u32 %v744, 2147483648
      %v1166 = vor.u32 1.1754944e-38, %v1165
      %v1167 = vsel %vm1164, %v1166, %v1162
      %v1168 = vmul.f32 1.0, %v1167
      %v1169 = vrcp.pop %v745
      %v1170 = vmul.f32 %v745, %v1169
      %v1171 = vsub.f32 1.0, %v1170
      %v1172 = vmul.f32 %v1169, %v1171
      %v1173 = vadd.f32 %v1169, %v1172
      %vm1174 = vweird.f32 %v745
      %vm1175 = vweird.f32 %v1169
      %vm1176 = vmor %vm1174, %vm1175
      %v1177 = vsel %vm1176, %v1169, %v1173
      %v1178 = vand.u32 2147483647, %v745
      %vm1179 = vcmp.eq.f32.partialorder %v1178, 8.507059e+37
      %v1180 = vand.u32 %v745, 2147483648
      %v1181 = vor.u32 1.1754944e-38, %v1180
      %v1182 = vsel %vm1179, %v1181, %v1177
      %v1183 = vmul.f32 1.0, %v1182
      %v1184 = vrcp.pop %v746
      %v1185 = vmul.f32 %v746, %v1184
      %v1186 = vsub.f32 1.0, %v1185
      %v1187 = vmul.f32 %v1184, %v1186
      %v1188 = vadd.f32 %v1184, %v1187
      %vm1189 = vweird.f32 %v746
      %vm1190 = vweird.f32 %v1184
      %vm1191 = vmor %vm1189, %vm1190
      %v1192 = vsel %vm1191, %v1184, %v1188
      %v1193 = vand.u32 2147483647, %v746
      %vm1194 = vcmp.eq.f32.partialorder %v1193, 8.507059e+37
      %v1195 = vand.u32 %v746, 2147483648
      %v1196 = vor.u32 1.1754944e-38, %v1195
      %v1197 = vsel %vm1194, %v1196, %v1192
      %v1198 = vmul.f32 1.0, %v1197
      %v1199 = vrcp.pop %v747
      %v1200 = vmul.f32 %v747, %v1199
      %v1201 = vsub.f32 1.0, %v1200
      %v1202 = vmul.f32 %v1199, %v1201
      %v1203 = vadd.f32 %v1199, %v1202
      %vm1204 = vweird.f32 %v747
      %vm1205 = vweird.f32 %v1199
      %vm1206 = vmor %vm1204, %vm1205
      %v1207 = vsel %vm1206, %v1199, %v1203
      %v1208 = vand.u32 2147483647, %v747
      %vm1209 = vcmp.eq.f32.partialorder %v1208, 8.507059e+37
      %v1210 = vand.u32 %v747, 2147483648
      %v1211 = vor.u32 1.1754944e-38, %v1210
      %v1212 = vsel %vm1209, %v1211, %v1207
      %v1213 = vmul.f32 1.0, %v1212
      %v1214 = vrcp.pop %v748
      %v1215 = vmul.f32 %v748, %v1214
      %v1216 = vsub.f32 1.0, %v1215
      %v1217 = vmul.f32 %v1214, %v1216
      %v1218 = vadd.f32 %v1214, %v1217
      %vm1219 = vweird.f32 %v748
      %vm1220 = vweird.f32 %v1214
      %vm1221 = vmor %vm1219, %vm1220
      %v1222 = vsel %vm1221, %v1214, %v1218
      %v1223 = vand.u32 2147483647, %v748
      %vm1224 = vcmp.eq.f32.partialorder %v1223, 8.507059e+37
      %v1225 = vand.u32 %v748, 2147483648
      %v1226 = vor.u32 1.1754944e-38, %v1225
      %v1227 = vsel %vm1224, %v1226, %v1222
      %v1228 = vmul.f32 1.0, %v1227
      %v1229 = vrcp.pop %v749
      %v1230 = vmul.f32 %v749, %v1229
      %v1231 = vsub.f32 1.0, %v1230
      %v1232 = vmul.f32 %v1229, %v1231
      %v1233 = vadd.f32 %v1229, %v1232
      %vm1234 = vweird.f32 %v749
      %vm1235 = vweird.f32 %v1229
      %vm1236 = vmor %vm1234, %vm1235
      %v1237 = vsel %vm1236, %v1229, %v1233
      %v1238 = vand.u32 2147483647, %v749
      %vm1239 = vcmp.eq.f32.partialorder %v1238, 8.507059e+37
      %v1240 = vand.u32 %v749, 2147483648
      %v1241 = vor.u32 1.1754944e-38, %v1240
      %v1242 = vsel %vm1239, %v1241, %v1237
      %v1243 = vmul.f32 1.0, %v1242
      %v1244 = vrcp.pop %v750
      %v1245 = vmul.f32 %v750, %v1244
      %v1246 = vsub.f32 1.0, %v1245
      %v1247 = vmul.f32 %v1244, %v1246
      %v1248 = vadd.f32 %v1244, %v1247
      %vm1249 = vweird.f32 %v750
      %vm1250 = vweird.f32 %v1244
      %vm1251 = vmor %vm1249, %vm1250
      %v1252 = vsel %vm1251, %v1244, %v1248
      %v1253 = vand.u32 2147483647, %v750
      %vm1254 = vcmp.eq.f32.partialorder %v1253, 8.507059e+37
      %v1255 = vand.u32 %v750, 2147483648
      %v1256 = vor.u32 1.1754944e-38, %v1255
      %v1257 = vsel %vm1254, %v1256, %v1252
      %v1258 = vmul.f32 1.0, %v1257
      %v1259 = vrcp.pop %v751
      %v1260 = vmul.f32 %v751, %v1259
      %v1261 = vsub.f32 1.0, %v1260
      %v1262 = vmul.f32 %v1259, %v1261
      %v1263 = vadd.f32 %v1259, %v1262
      %vm1264 = vweird.f32 %v751
      %vm1265 = vweird.f32 %v1259
      %vm1266 = vmor %vm1264, %vm1265
      %v1267 = vsel %vm1266, %v1259, %v1263
      %v1268 = vand.u32 2147483647, %v751
      %vm1269 = vcmp.eq.f32.partialorder %v1268, 8.507059e+37
      %v1270 = vand.u32 %v751, 2147483648
      %v1271 = vor.u32 1.1754944e-38, %v1270
      %v1272 = vsel %vm1269, %v1271, %v1267
      %v1273 = vmul.f32 1.0, %v1272
      %v1274 = vrcp.pop %v752
      %v1275 = vmul.f32 %v752, %v1274
      %v1276 = vsub.f32 1.0, %v1275
      %v1277 = vmul.f32 %v1274, %v1276
      %v1278 = vadd.f32 %v1274, %v1277
      %vm1279 = vweird.f32 %v752
      %vm1280 = vweird.f32 %v1274
      %vm1281 = vmor %vm1279, %vm1280
      %v1282 = vsel %vm1281, %v1274, %v1278
      %v1283 = vand.u32 2147483647, %v752
      %vm1284 = vcmp.eq.f32.partialorder %v1283, 8.507059e+37
      %v1285 = vand.u32 %v752, 2147483648
      %v1286 = vor.u32 1.1754944e-38, %v1285
      %v1287 = vsel %vm1284, %v1286, %v1282
      %v1288 = vmul.f32 1.0, %v1287
      %v1289 = vrcp.pop %v753
      %v1290 = vmul.f32 %v753, %v1289
      %v1291 = vsub.f32 1.0, %v1290
      %v1292 = vmul.f32 %v1289, %v1291
      %v1293 = vadd.f32 %v1289, %v1292
      %vm1294 = vweird.f32 %v753
      %vm1295 = vweird.f32 %v1289
      %vm1296 = vmor %vm1294, %vm1295
      %v1297 = vsel %vm1296, %v1289, %v1293
      %v1298 = vand.u32 2147483647, %v753
      %vm1299 = vcmp.eq.f32.partialorder %v1298, 8.507059e+37
      %v1300 = vand.u32 %v753, 2147483648
      %v1301 = vor.u32 1.1754944e-38, %v1300
      %v1302 = vsel %vm1299, %v1301, %v1297
      %v1303 = vmul.f32 1.0, %v1302
      %v1304 = vrcp.pop %v754
      %v1305 = vmul.f32 %v754, %v1304
      %v1306 = vsub.f32 1.0, %v1305
      %v1307 = vmul.f32 %v1304, %v1306
      %v1308 = vadd.f32 %v1304, %v1307
      %vm1309 = vweird.f32 %v754
      %vm1310 = vweird.f32 %v1304
      %vm1311 = vmor %vm1309, %vm1310
      %v1312 = vsel %vm1311, %v1304, %v1308
      %v1313 = vand.u32 2147483647, %v754
      %vm1314 = vcmp.eq.f32.partialorder %v1313, 8.507059e+37
      %v1315 = vand.u32 %v754, 2147483648
      %v1316 = vor.u32 1.1754944e-38, %v1315
      %v1317 = vsel %vm1314, %v1316, %v1312
      %v1318 = vmul.f32 1.0, %v1317
      %v1319 = vrcp.pop %v755
      %v1320 = vmul.f32 %v755, %v1319
      %v1321 = vsub.f32 1.0, %v1320
      %v1322 = vmul.f32 %v1319, %v1321
      %v1323 = vadd.f32 %v1319, %v1322
      %vm1324 = vweird.f32 %v755
      %vm1325 = vweird.f32 %v1319
      %vm1326 = vmor %vm1324, %vm1325
      %v1327 = vsel %vm1326, %v1319, %v1323
      %v1328 = vand.u32 2147483647, %v755
      %vm1329 = vcmp.eq.f32.partialorder %v1328, 8.507059e+37
      %v1330 = vand.u32 %v755, 2147483648
      %v1331 = vor.u32 1.1754944e-38, %v1330
      %v1332 = vsel %vm1329, %v1331, %v1327
      %v1333 = vmul.f32 1.0, %v1332
      %v1334 = vrcp.pop %v756
      %v1335 = vmul.f32 %v756, %v1334
      %v1336 = vsub.f32 1.0, %v1335
      %v1337 = vmul.f32 %v1334, %v1336
      %v1338 = vadd.f32 %v1334, %v1337
      %vm1339 = vweird.f32 %v756
      %vm1340 = vweird.f32 %v1334
      %vm1341 = vmor %vm1339, %vm1340
      %v1342 = vsel %vm1341, %v1334, %v1338
      %v1343 = vand.u32 2147483647, %v756
      %vm1344 = vcmp.eq.f32.partialorder %v1343, 8.507059e+37
      %v1345 = vand.u32 %v756, 2147483648
      %v1346 = vor.u32 1.1754944e-38, %v1345
      %v1347 = vsel %vm1344, %v1346, %v1342
      %v1348 = vmul.f32 1.0, %v1347
      %v1349 = vrcp.pop %v757
      %v1350 = vmul.f32 %v757, %v1349
      %v1351 = vsub.f32 1.0, %v1350
      %v1352 = vmul.f32 %v1349, %v1351
      %v1353 = vadd.f32 %v1349, %v1352
      %vm1354 = vweird.f32 %v757
      %vm1355 = vweird.f32 %v1349
      %vm1356 = vmor %vm1354, %vm1355
      %v1357 = vsel %vm1356, %v1349, %v1353
      %v1358 = vand.u32 2147483647, %v757
      %vm1359 = vcmp.eq.f32.partialorder %v1358, 8.507059e+37
      %v1360 = vand.u32 %v757, 2147483648
      %v1361 = vor.u32 1.1754944e-38, %v1360
      %v1362 = vsel %vm1359, %v1361, %v1357
      %v1363 = vmul.f32 1.0, %v1362
      %v1364 = vrcp.pop %v758
      %v1365 = vmul.f32 %v758, %v1364
      %v1366 = vsub.f32 1.0, %v1365
      %v1367 = vmul.f32 %v1364, %v1366
      %v1368 = vadd.f32 %v1364, %v1367
      %vm1369 = vweird.f32 %v758
      %vm1370 = vweird.f32 %v1364
      %vm1371 = vmor %vm1369, %vm1370
      %v1372 = vsel %vm1371, %v1364, %v1368
      %v1373 = vand.u32 2147483647, %v758
      %vm1374 = vcmp.eq.f32.partialorder %v1373, 8.507059e+37
      %v1375 = vand.u32 %v758, 2147483648
      %v1376 = vor.u32 1.1754944e-38, %v1375
      %v1377 = vsel %vm1374, %v1376, %v1372
      %v1378 = vmul.f32 1.0, %v1377
      %v1379 = vrcp.pop %v759
      %v1380 = vmul.f32 %v759, %v1379
      %v1381 = vsub.f32 1.0, %v1380
      %v1382 = vmul.f32 %v1379, %v1381
      %v1383 = vadd.f32 %v1379, %v1382
      %vm1384 = vweird.f32 %v759
      %vm1385 = vweird.f32 %v1379
      %vm1386 = vmor %vm1384, %vm1385
      %v1387 = vsel %vm1386, %v1379, %v1383
      %v1388 = vand.u32 2147483647, %v759
      %vm1389 = vcmp.eq.f32.partialorder %v1388, 8.507059e+37
      %v1390 = vand.u32 %v759, 2147483648
      %v1391 = vor.u32 1.1754944e-38, %v1390
      %v1392 = vsel %vm1389, %v1391, %v1387
      %v1393 = vmul.f32 1.0, %v1392
      %v1394 = vrcp.pop %v760
      %v1395 = vmul.f32 %v760, %v1394
      %v1396 = vsub.f32 1.0, %v1395
      %v1397 = vmul.f32 %v1394, %v1396
      %v1398 = vadd.f32 %v1394, %v1397
      %vm1399 = vweird.f32 %v760
      %vm1400 = vweird.f32 %v1394
      %vm1401 = vmor %vm1399, %vm1400
      %v1402 = vsel %vm1401, %v1394, %v1398
      %v1403 = vand.u32 2147483647, %v760
      %vm1404 = vcmp.eq.f32.partialorder %v1403, 8.507059e+37
      %v1405 = vand.u32 %v760, 2147483648
      %v1406 = vor.u32 1.1754944e-38, %v1405
      %v1407 = vsel %vm1404, %v1406, %v1402
      %v1408 = vmul.f32 1.0, %v1407
      %v1409 = vrcp.pop %v761
      %v1410 = vmul.f32 %v761, %v1409
      %v1411 = vsub.f32 1.0, %v1410
      %v1412 = vmul.f32 %v1409, %v1411
      %v1413 = vadd.f32 %v1409, %v1412
      %vm1414 = vweird.f32 %v761
      %vm1415 = vweird.f32 %v1409
      %vm1416 = vmor %vm1414, %vm1415
      %v1417 = vsel %vm1416, %v1409, %v1413
      %v1418 = vand.u32 2147483647, %v761
      %vm1419 = vcmp.eq.f32.partialorder %v1418, 8.507059e+37
      %v1420 = vand.u32 %v761, 2147483648
      %v1421 = vor.u32 1.1754944e-38, %v1420
      %v1422 = vsel %vm1419, %v1421, %v1417
      %v1423 = vmul.f32 1.0, %v1422
      %v1424 = vrcp.pop %v762
      %v1425 = vmul.f32 %v762, %v1424
      %v1426 = vsub.f32 1.0, %v1425
      %v1427 = vmul.f32 %v1424, %v1426
      %v1428 = vadd.f32 %v1424, %v1427
      %vm1429 = vweird.f32 %v762
      %vm1430 = vweird.f32 %v1424
      %vm1431 = vmor %vm1429, %vm1430
      %v1432 = vsel %vm1431, %v1424, %v1428
      %v1433 = vand.u32 2147483647, %v762
      %vm1434 = vcmp.eq.f32.partialorder %v1433, 8.507059e+37
      %v1435 = vand.u32 %v762, 2147483648
      %v1436 = vor.u32 1.1754944e-38, %v1435
      %v1437 = vsel %vm1434, %v1436, %v1432
      %v1438 = vmul.f32 1.0, %v1437
      %v1439 = vrcp.pop %v763
      %v1440 = vmul.f32 %v763, %v1439
      %v1441 = vsub.f32 1.0, %v1440
      %v1442 = vmul.f32 %v1439, %v1441
      %v1443 = vadd.f32 %v1439, %v1442
      %vm1444 = vweird.f32 %v763
      %vm1445 = vweird.f32 %v1439
      %vm1446 = vmor %vm1444, %vm1445
      %v1447 = vsel %vm1446, %v1439, %v1443
      %v1448 = vand.u32 2147483647, %v763
      %vm1449 = vcmp.eq.f32.partialorder %v1448, 8.507059e+37
      %v1450 = vand.u32 %v763, 2147483648
      %v1451 = vor.u32 1.1754944e-38, %v1450
      %v1452 = vsel %vm1449, %v1451, %v1447
      %v1453 = vmul.f32 1.0, %v1452
      %v1454 = vrcp.pop %v764
      %v1455 = vmul.f32 %v764, %v1454
      %v1456 = vsub.f32 1.0, %v1455
      %v1457 = vmul.f32 %v1454, %v1456
      %v1458 = vadd.f32 %v1454, %v1457
      %vm1459 = vweird.f32 %v764
      %vm1460 = vweird.f32 %v1454
      %vm1461 = vmor %vm1459, %vm1460
      %v1462 = vsel %vm1461, %v1454, %v1458
      %v1463 = vand.u32 2147483647, %v764
      %vm1464 = vcmp.eq.f32.partialorder %v1463, 8.507059e+37
      %v1465 = vand.u32 %v764, 2147483648
      %v1466 = vor.u32 1.1754944e-38, %v1465
      %v1467 = vsel %vm1464, %v1466, %v1462
      %v1468 = vmul.f32 1.0, %v1467
      %v1469 = vrcp.pop %v765
      %v1470 = vmul.f32 %v765, %v1469
      %v1471 = vsub.f32 1.0, %v1470
      %v1472 = vmul.f32 %v1469, %v1471
      %v1473 = vadd.f32 %v1469, %v1472
      %vm1474 = vweird.f32 %v765
      %vm1475 = vweird.f32 %v1469
      %vm1476 = vmor %vm1474, %vm1475
      %v1477 = vsel %vm1476, %v1469, %v1473
      %v1478 = vand.u32 2147483647, %v765
      %vm1479 = vcmp.eq.f32.partialorder %v1478, 8.507059e+37
      %v1480 = vand.u32 %v765, 2147483648
      %v1481 = vor.u32 1.1754944e-38, %v1480
      %v1482 = vsel %vm1479, %v1481, %v1477
      %v1483 = vmul.f32 1.0, %v1482
      %v1484 = vrcp.pop %v766
      %v1485 = vmul.f32 %v766, %v1484
      %v1486 = vsub.f32 1.0, %v1485
      %v1487 = vmul.f32 %v1484, %v1486
      %v1488 = vadd.f32 %v1484, %v1487
      %vm1489 = vweird.f32 %v766
      %vm1490 = vweird.f32 %v1484
      %vm1491 = vmor %vm1489, %vm1490
      %v1492 = vsel %vm1491, %v1484, %v1488
      %v1493 = vand.u32 2147483647, %v766
      %vm1494 = vcmp.eq.f32.partialorder %v1493, 8.507059e+37
      %v1495 = vand.u32 %v766, 2147483648
      %v1496 = vor.u32 1.1754944e-38, %v1495
      %v1497 = vsel %vm1494, %v1496, %v1492
      %v1498 = vmul.f32 1.0, %v1497
      %v1499 = vrcp.pop %v767
      %v1500 = vmul.f32 %v767, %v1499
      %v1501 = vsub.f32 1.0, %v1500
      %v1502 = vmul.f32 %v1499, %v1501
      %v1503 = vadd.f32 %v1499, %v1502
      %vm1504 = vweird.f32 %v767
      %vm1505 = vweird.f32 %v1499
      %vm1506 = vmor %vm1504, %vm1505
      %v1507 = vsel %vm1506, %v1499, %v1503
      %v1508 = vand.u32 2147483647, %v767
      %vm1509 = vcmp.eq.f32.partialorder %v1508, 8.507059e+37
      %v1510 = vand.u32 %v767, 2147483648
      %v1511 = vor.u32 1.1754944e-38, %v1510
      %v1512 = vsel %vm1509, %v1511, %v1507
      %v1513 = vmul.f32 1.0, %v1512
      %v1514 = vrcp.pop %v768
      %v1515 = vmul.f32 %v768, %v1514
      %v1516 = vsub.f32 1.0, %v1515
      %v1517 = vmul.f32 %v1514, %v1516
      %v1518 = vadd.f32 %v1514, %v1517
      %vm1519 = vweird.f32 %v768
      %vm1520 = vweird.f32 %v1514
      %vm1521 = vmor %vm1519, %vm1520
      %v1522 = vsel %vm1521, %v1514, %v1518
      %v1523 = vand.u32 2147483647, %v768
      %vm1524 = vcmp.eq.f32.partialorder %v1523, 8.507059e+37
      %v1525 = vand.u32 %v768, 2147483648
      %v1526 = vor.u32 1.1754944e-38, %v1525
      %v1527 = vsel %vm1524, %v1526, %v1522
      %v1528 = vmul.f32 1.0, %v1527
      %v1529 = vrcp.pop %v769
      %v1530 = vmul.f32 %v769, %v1529
      %v1531 = vsub.f32 1.0, %v1530
      %v1532 = vmul.f32 %v1529, %v1531
      %v1533 = vadd.f32 %v1529, %v1532
      %vm1534 = vweird.f32 %v769
      %vm1535 = vweird.f32 %v1529
      %vm1536 = vmor %vm1534, %vm1535
      %v1537 = vsel %vm1536, %v1529, %v1533
      %v1538 = vand.u32 2147483647, %v769
      %vm1539 = vcmp.eq.f32.partialorder %v1538, 8.507059e+37
      %v1540 = vand.u32 %v769, 2147483648
      %v1541 = vor.u32 1.1754944e-38, %v1540
      %v1542 = vsel %vm1539, %v1541, %v1537
      %v1543 = vmul.f32 1.0, %v1542
      %v1544 = vrcp.pop %v770
      %v1545 = vmul.f32 %v770, %v1544
      %v1546 = vsub.f32 1.0, %v1545
      %v1547 = vmul.f32 %v1544, %v1546
      %v1548 = vadd.f32 %v1544, %v1547
      %vm1549 = vweird.f32 %v770
      %vm1550 = vweird.f32 %v1544
      %vm1551 = vmor %vm1549, %vm1550
      %v1552 = vsel %vm1551, %v1544, %v1548
      %v1553 = vand.u32 2147483647, %v770
      %vm1554 = vcmp.eq.f32.partialorder %v1553, 8.507059e+37
      %v1555 = vand.u32 %v770, 2147483648
      %v1556 = vor.u32 1.1754944e-38, %v1555
      %v1557 = vsel %vm1554, %v1556, %v1552
      %v1558 = vmul.f32 1.0, %v1557
      %v1559 = vrcp.pop %v771
      %v1560 = vmul.f32 %v771, %v1559
      %v1561 = vsub.f32 1.0, %v1560
      %v1562 = vmul.f32 %v1559, %v1561
      %v1563 = vadd.f32 %v1559, %v1562
      %vm1564 = vweird.f32 %v771
      %vm1565 = vweird.f32 %v1559
      %vm1566 = vmor %vm1564, %vm1565
      %v1567 = vsel %vm1566, %v1559, %v1563
      %v1568 = vand.u32 2147483647, %v771
      %vm1569 = vcmp.eq.f32.partialorder %v1568, 8.507059e+37
      %v1570 = vand.u32 %v771, 2147483648
      %v1571 = vor.u32 1.1754944e-38, %v1570
      %v1572 = vsel %vm1569, %v1571, %v1567
      %v1573 = vmul.f32 1.0, %v1572
      %v1574 = vrcp.pop %v772
      %v1575 = vmul.f32 %v772, %v1574
      %v1576 = vsub.f32 1.0, %v1575
      %v1577 = vmul.f32 %v1574, %v1576
      %v1578 = vadd.f32 %v1574, %v1577
      %vm1579 = vweird.f32 %v772
      %vm1580 = vweird.f32 %v1574
      %vm1581 = vmor %vm1579, %vm1580
      %v1582 = vsel %vm1581, %v1574, %v1578
      %v1583 = vand.u32 2147483647, %v772
      %vm1584 = vcmp.eq.f32.partialorder %v1583, 8.507059e+37
      %v1585 = vand.u32 %v772, 2147483648
      %v1586 = vor.u32 1.1754944e-38, %v1585
      %v1587 = vsel %vm1584, %v1586, %v1582
      %v1588 = vmul.f32 1.0, %v1587
      %v1589 = vrcp.pop %v773
      %v1590 = vmul.f32 %v773, %v1589
      %v1591 = vsub.f32 1.0, %v1590
      %v1592 = vmul.f32 %v1589, %v1591
      %v1593 = vadd.f32 %v1589, %v1592
      %vm1594 = vweird.f32 %v773
      %vm1595 = vweird.f32 %v1589
      %vm1596 = vmor %vm1594, %vm1595
      %v1597 = vsel %vm1596, %v1589, %v1593
      %v1598 = vand.u32 2147483647, %v773
      %vm1599 = vcmp.eq.f32.partialorder %v1598, 8.507059e+37
      %v1600 = vand.u32 %v773, 2147483648
      %v1601 = vor.u32 1.1754944e-38, %v1600
      %v1602 = vsel %vm1599, %v1601, %v1597
      %v1603 = vmul.f32 1.0, %v1602
      %v1604 = vrcp.pop %v774
      %v1605 = vmul.f32 %v774, %v1604
      %v1606 = vsub.f32 1.0, %v1605
      %v1607 = vmul.f32 %v1604, %v1606
      %v1608 = vadd.f32 %v1604, %v1607
      %vm1609 = vweird.f32 %v774
      %vm1610 = vweird.f32 %v1604
      %vm1611 = vmor %vm1609, %vm1610
      %v1612 = vsel %vm1611, %v1604, %v1608
      %v1613 = vand.u32 2147483647, %v774
      %vm1614 = vcmp.eq.f32.partialorder %v1613, 8.507059e+37
      %v1615 = vand.u32 %v774, 2147483648
      %v1616 = vor.u32 1.1754944e-38, %v1615
      %v1617 = vsel %vm1614, %v1616, %v1612
      %v1618 = vmul.f32 1.0, %v1617
      %v1619 = vrcp.pop %v775
      %v1620 = vmul.f32 %v775, %v1619
      %v1621 = vsub.f32 1.0, %v1620
      %v1622 = vmul.f32 %v1619, %v1621
      %v1623 = vadd.f32 %v1619, %v1622
      %vm1624 = vweird.f32 %v775
      %vm1625 = vweird.f32 %v1619
      %vm1626 = vmor %vm1624, %vm1625
      %v1627 = vsel %vm1626, %v1619, %v1623
      %v1628 = vand.u32 2147483647, %v775
      %vm1629 = vcmp.eq.f32.partialorder %v1628, 8.507059e+37
      %v1630 = vand.u32 %v775, 2147483648
      %v1631 = vor.u32 1.1754944e-38, %v1630
      %v1632 = vsel %vm1629, %v1631, %v1627
      %v1633 = vmul.f32 1.0, %v1632
      %v1634 = vrcp.pop %v776
      %v1635 = vmul.f32 %v776, %v1634
      %v1636 = vsub.f32 1.0, %v1635
      %v1637 = vmul.f32 %v1634, %v1636
      %v1638 = vadd.f32 %v1634, %v1637
      %vm1639 = vweird.f32 %v776
      %vm1640 = vweird.f32 %v1634
      %vm1641 = vmor %vm1639, %vm1640
      %v1642 = vsel %vm1641, %v1634, %v1638
      %v1643 = vand.u32 2147483647, %v776
      %vm1644 = vcmp.eq.f32.partialorder %v1643, 8.507059e+37
      %v1645 = vand.u32 %v776, 2147483648
      %v1646 = vor.u32 1.1754944e-38, %v1645
      %v1647 = vsel %vm1644, %v1646, %v1642
      %v1648 = vmul.f32 1.0, %v1647
      %v1649 = vrcp.pop %v777
      %v1650 = vmul.f32 %v777, %v1649
      %v1651 = vsub.f32 1.0, %v1650
      %v1652 = vmul.f32 %v1649, %v1651
      %v1653 = vadd.f32 %v1649, %v1652
      %vm1654 = vweird.f32 %v777
      %vm1655 = vweird.f32 %v1649
      %vm1656 = vmor %vm1654, %vm1655
      %v1657 = vsel %vm1656, %v1649, %v1653
      %v1658 = vand.u32 2147483647, %v777
      %vm1659 = vcmp.eq.f32.partialorder %v1658, 8.507059e+37
      %v1660 = vand.u32 %v777, 2147483648
      %v1661 = vor.u32 1.1754944e-38, %v1660
      %v1662 = vsel %vm1659, %v1661, %v1657
      %v1663 = vmul.f32 1.0, %v1662
      %v1664 = vrcp.pop %v778
      %v1665 = vmul.f32 %v778, %v1664
      %v1666 = vsub.f32 1.0, %v1665
      %v1667 = vmul.f32 %v1664, %v1666
      %v1668 = vadd.f32 %v1664, %v1667
      %vm1669 = vweird.f32 %v778
      %vm1670 = vweird.f32 %v1664
      %vm1671 = vmor %vm1669, %vm1670
      %v1672 = vsel %vm1671, %v1664, %v1668
      %v1673 = vand.u32 2147483647, %v778
      %vm1674 = vcmp.eq.f32.partialorder %v1673, 8.507059e+37
      %v1675 = vand.u32 %v778, 2147483648
      %v1676 = vor.u32 1.1754944e-38, %v1675
      %v1677 = vsel %vm1674, %v1676, %v1672
      %v1678 = vmul.f32 1.0, %v1677
      %v1679 = vrcp.pop %v779
      %v1680 = vmul.f32 %v779, %v1679
      %v1681 = vsub.f32 1.0, %v1680
      %v1682 = vmul.f32 %v1679, %v1681
      %v1683 = vadd.f32 %v1679, %v1682
      %vm1684 = vweird.f32 %v779
      %vm1685 = vweird.f32 %v1679
      %vm1686 = vmor %vm1684, %vm1685
      %v1687 = vsel %vm1686, %v1679, %v1683
      %v1688 = vand.u32 2147483647, %v779
      %vm1689 = vcmp.eq.f32.partialorder %v1688, 8.507059e+37
      %v1690 = vand.u32 %v779, 2147483648
      %v1691 = vor.u32 1.1754944e-38, %v1690
      %v1692 = vsel %vm1689, %v1691, %v1687
      %v1693 = vmul.f32 1.0, %v1692
      %v1694 = vrcp.pop %v780
      %v1695 = vmul.f32 %v780, %v1694
      %v1696 = vsub.f32 1.0, %v1695
      %v1697 = vmul.f32 %v1694, %v1696
      %v1698 = vadd.f32 %v1694, %v1697
      %vm1699 = vweird.f32 %v780
      %vm1700 = vweird.f32 %v1694
      %vm1701 = vmor %vm1699, %vm1700
      %v1702 = vsel %vm1701, %v1694, %v1698
      %v1703 = vand.u32 2147483647, %v780
      %vm1704 = vcmp.eq.f32.partialorder %v1703, 8.507059e+37
      %v1705 = vand.u32 %v780, 2147483648
      %v1706 = vor.u32 1.1754944e-38, %v1705
      %v1707 = vsel %vm1704, %v1706, %v1702
      %v1708 = vmul.f32 1.0, %v1707
      %v1709 = vrcp.pop %v781
      %v1710 = vmul.f32 %v781, %v1709
      %v1711 = vsub.f32 1.0, %v1710
      %v1712 = vmul.f32 %v1709, %v1711
      %v1713 = vadd.f32 %v1709, %v1712
      %vm1714 = vweird.f32 %v781
      %vm1715 = vweird.f32 %v1709
      %vm1716 = vmor %vm1714, %vm1715
      %v1717 = vsel %vm1716, %v1709, %v1713
      %v1718 = vand.u32 2147483647, %v781
      %vm1719 = vcmp.eq.f32.partialorder %v1718, 8.507059e+37
      %v1720 = vand.u32 %v781, 2147483648
      %v1721 = vor.u32 1.1754944e-38, %v1720
      %v1722 = vsel %vm1719, %v1721, %v1717
      %v1723 = vmul.f32 1.0, %v1722
      %v1724 = vrcp.pop %v782
      %v1725 = vmul.f32 %v782, %v1724
      %v1726 = vsub.f32 1.0, %v1725
      %v1727 = vmul.f32 %v1724, %v1726
      %v1728 = vadd.f32 %v1724, %v1727
      %vm1729 = vweird.f32 %v782
      %vm1730 = vweird.f32 %v1724
      %vm1731 = vmor %vm1729, %vm1730
      %v1732 = vsel %vm1731, %v1724, %v1728
      %v1733 = vand.u32 2147483647, %v782
      %vm1734 = vcmp.eq.f32.partialorder %v1733, 8.507059e+37
      %v1735 = vand.u32 %v782, 2147483648
      %v1736 = vor.u32 1.1754944e-38, %v1735
      %v1737 = vsel %vm1734, %v1736, %v1732
      %v1738 = vmul.f32 1.0, %v1737
      %v1739 = vrcp.pop %v783
      %v1740 = vmul.f32 %v783, %v1739
      %v1741 = vsub.f32 1.0, %v1740
      %v1742 = vmul.f32 %v1739, %v1741
      %v1743 = vadd.f32 %v1739, %v1742
      %vm1744 = vweird.f32 %v783
      %vm1745 = vweird.f32 %v1739
      %vm1746 = vmor %vm1744, %vm1745
      %v1747 = vsel %vm1746, %v1739, %v1743
      %v1748 = vand.u32 2147483647, %v783
      %vm1749 = vcmp.eq.f32.partialorder %v1748, 8.507059e+37
      %v1750 = vand.u32 %v783, 2147483648
      %v1751 = vor.u32 1.1754944e-38, %v1750
      %v1752 = vsel %vm1749, %v1751, %v1747
      %v1753 = vmul.f32 1.0, %v1752
      %v1754 = vrcp.pop %v784
      %v1755 = vmul.f32 %v784, %v1754
      %v1756 = vsub.f32 1.0, %v1755
      %v1757 = vmul.f32 %v1754, %v1756
      %v1758 = vadd.f32 %v1754, %v1757
      %vm1759 = vweird.f32 %v784
      %vm1760 = vweird.f32 %v1754
      %vm1761 = vmor %vm1759, %vm1760
      %v1762 = vsel %vm1761, %v1754, %v1758
      %v1763 = vand.u32 2147483647, %v784
      %vm1764 = vcmp.eq.f32.partialorder %v1763, 8.507059e+37
      %v1765 = vand.u32 %v784, 2147483648
      %v1766 = vor.u32 1.1754944e-38, %v1765
      %v1767 = vsel %vm1764, %v1766, %v1762
      %v1768 = vmul.f32 1.0, %v1767
      %v1769 = vrcp.pop %v785
      %v1770 = vmul.f32 %v785, %v1769
      %v1771 = vsub.f32 1.0, %v1770
      %v1772 = vmul.f32 %v1769, %v1771
      %v1773 = vadd.f32 %v1769, %v1772
      %vm1774 = vweird.f32 %v785
      %vm1775 = vweird.f32 %v1769
      %vm1776 = vmor %vm1774, %vm1775
      %v1777 = vsel %vm1776, %v1769, %v1773
      %v1778 = vand.u32 2147483647, %v785
      %vm1779 = vcmp.eq.f32.partialorder %v1778, 8.507059e+37
      %v1780 = vand.u32 %v785, 2147483648
      %v1781 = vor.u32 1.1754944e-38, %v1780
      %v1782 = vsel %vm1779, %v1781, %v1777
      %v1783 = vmul.f32 1.0, %v1782
      %v1784 = vrcp.pop %v786
      %v1785 = vmul.f32 %v786, %v1784
      %v1786 = vsub.f32 1.0, %v1785
      %v1787 = vmul.f32 %v1784, %v1786
      %v1788 = vadd.f32 %v1784, %v1787
      %vm1789 = vweird.f32 %v786
      %vm1790 = vweird.f32 %v1784
      %vm1791 = vmor %vm1789, %vm1790
      %v1792 = vsel %vm1791, %v1784, %v1788
      %v1793 = vand.u32 2147483647, %v786
      %vm1794 = vcmp.eq.f32.partialorder %v1793, 8.507059e+37
      %v1795 = vand.u32 %v786, 2147483648
      %v1796 = vor.u32 1.1754944e-38, %v1795
      %v1797 = vsel %vm1794, %v1796, %v1792
      %v1798 = vmul.f32 1.0, %v1797
      %v1799 = vrcp.pop %v787
      %v1800 = vmul.f32 %v787, %v1799
      %v1801 = vsub.f32 1.0, %v1800
      %v1802 = vmul.f32 %v1799, %v1801
      %v1803 = vadd.f32 %v1799, %v1802
      %vm1804 = vweird.f32 %v787
      %vm1805 = vweird.f32 %v1799
      %vm1806 = vmor %vm1804, %vm1805
      %v1807 = vsel %vm1806, %v1799, %v1803
      %v1808 = vand.u32 2147483647, %v787
      %vm1809 = vcmp.eq.f32.partialorder %v1808, 8.507059e+37
      %v1810 = vand.u32 %v787, 2147483648
      %v1811 = vor.u32 1.1754944e-38, %v1810
      %v1812 = vsel %vm1809, %v1811, %v1807
      %v1813 = vmul.f32 1.0, %v1812
      %v1814 = vrcp.pop %v788
      %v1815 = vmul.f32 %v788, %v1814
      %v1816 = vsub.f32 1.0, %v1815
      %v1817 = vmul.f32 %v1814, %v1816
      %v1818 = vadd.f32 %v1814, %v1817
      %vm1819 = vweird.f32 %v788
      %vm1820 = vweird.f32 %v1814
      %vm1821 = vmor %vm1819, %vm1820
      %v1822 = vsel %vm1821, %v1814, %v1818
      %v1823 = vand.u32 2147483647, %v788
      %vm1824 = vcmp.eq.f32.partialorder %v1823, 8.507059e+37
      %v1825 = vand.u32 %v788, 2147483648
      %v1826 = vor.u32 1.1754944e-38, %v1825
      %v1827 = vsel %vm1824, %v1826, %v1822
      %v1828 = vmul.f32 1.0, %v1827
      %v1829 = vrcp.pop %v789
      %v1830 = vmul.f32 %v789, %v1829
      %v1831 = vsub.f32 1.0, %v1830
      %v1832 = vmul.f32 %v1829, %v1831
      %v1833 = vadd.f32 %v1829, %v1832
      %vm1834 = vweird.f32 %v789
      %vm1835 = vweird.f32 %v1829
      %vm1836 = vmor %vm1834, %vm1835
      %v1837 = vsel %vm1836, %v1829, %v1833
      %v1838 = vand.u32 2147483647, %v789
      %vm1839 = vcmp.eq.f32.partialorder %v1838, 8.507059e+37
      %v1840 = vand.u32 %v789, 2147483648
      %v1841 = vor.u32 1.1754944e-38, %v1840
      %v1842 = vsel %vm1839, %v1841, %v1837
      %v1843 = vmul.f32 1.0, %v1842
      %v1844 = vrcp.pop %v790
      %v1845 = vmul.f32 %v790, %v1844
      %v1846 = vsub.f32 1.0, %v1845
      %v1847 = vmul.f32 %v1844, %v1846
      %v1848 = vadd.f32 %v1844, %v1847
      %vm1849 = vweird.f32 %v790
      %vm1850 = vweird.f32 %v1844
      %vm1851 = vmor %vm1849, %vm1850
      %v1852 = vsel %vm1851, %v1844, %v1848
      %v1853 = vand.u32 2147483647, %v790
      %vm1854 = vcmp.eq.f32.partialorder %v1853, 8.507059e+37
      %v1855 = vand.u32 %v790, 2147483648
      %v1856 = vor.u32 1.1754944e-38, %v1855
      %v1857 = vsel %vm1854, %v1856, %v1852
      %v1858 = vmul.f32 1.0, %v1857
      %v1859 = vrcp.pop %v791
      %v1860 = vmul.f32 %v791, %v1859
      %v1861 = vsub.f32 1.0, %v1860
      %v1862 = vmul.f32 %v1859, %v1861
      %v1863 = vadd.f32 %v1859, %v1862
      %vm1864 = vweird.f32 %v791
      %vm1865 = vweird.f32 %v1859
      %vm1866 = vmor %vm1864, %vm1865
      %v1867 = vsel %vm1866, %v1859, %v1863
      %v1868 = vand.u32 2147483647, %v791
      %vm1869 = vcmp.eq.f32.partialorder %v1868, 8.507059e+37
      %v1870 = vand.u32 %v791, 2147483648
      %v1871 = vor.u32 1.1754944e-38, %v1870
      %v1872 = vsel %vm1869, %v1871, %v1867
      %v1873 = vmul.f32 1.0, %v1872
      %v1874 = vrcp.pop %v792
      %v1875 = vmul.f32 %v792, %v1874
      %v1876 = vsub.f32 1.0, %v1875
      %v1877 = vmul.f32 %v1874, %v1876
      %v1878 = vadd.f32 %v1874, %v1877
      %vm1879 = vweird.f32 %v792
      %vm1880 = vweird.f32 %v1874
      %vm1881 = vmor %vm1879, %vm1880
      %v1882 = vsel %vm1881, %v1874, %v1878
      %v1883 = vand.u32 2147483647, %v792
      %vm1884 = vcmp.eq.f32.partialorder %v1883, 8.507059e+37
      %v1885 = vand.u32 %v792, 2147483648
      %v1886 = vor.u32 1.1754944e-38, %v1885
      %v1887 = vsel %vm1884, %v1886, %v1882
      %v1888 = vmul.f32 1.0, %v1887
      %v1889 = vrcp.pop %v793
      %v1890 = vmul.f32 %v793, %v1889
      %v1891 = vsub.f32 1.0, %v1890
      %v1892 = vmul.f32 %v1889, %v1891
      %v1893 = vadd.f32 %v1889, %v1892
      %vm1894 = vweird.f32 %v793
      %vm1895 = vweird.f32 %v1889
      %vm1896 = vmor %vm1894, %vm1895
      %v1897 = vsel %vm1896, %v1889, %v1893
      %v1898 = vand.u32 2147483647, %v793
      %vm1899 = vcmp.eq.f32.partialorder %v1898, 8.507059e+37
      %v1900 = vand.u32 %v793, 2147483648
      %v1901 = vor.u32 1.1754944e-38, %v1900
      %v1902 = vsel %vm1899, %v1901, %v1897
      %v1903 = vmul.f32 1.0, %v1902
      %v1904 = vrcp.pop %v794
      %v1905 = vmul.f32 %v794, %v1904
      %v1906 = vsub.f32 1.0, %v1905
      %v1907 = vmul.f32 %v1904, %v1906
      %v1908 = vadd.f32 %v1904, %v1907
      %vm1909 = vweird.f32 %v794
      %vm1910 = vweird.f32 %v1904
      %vm1911 = vmor %vm1909, %vm1910
      %v1912 = vsel %vm1911, %v1904, %v1908
      %v1913 = vand.u32 2147483647, %v794
      %vm1914 = vcmp.eq.f32.partialorder %v1913, 8.507059e+37
      %v1915 = vand.u32 %v794, 2147483648
      %v1916 = vor.u32 1.1754944e-38, %v1915
      %v1917 = vsel %vm1914, %v1916, %v1912
      %v1918 = vmul.f32 1.0, %v1917
      %v1919 = vrcp.pop %v795
      %v1920 = vmul.f32 %v795, %v1919
      %v1921 = vsub.f32 1.0, %v1920
      %v1922 = vmul.f32 %v1919, %v1921
      %v1923 = vadd.f32 %v1919, %v1922
      %vm1924 = vweird.f32 %v795
      %vm1925 = vweird.f32 %v1919
      %vm1926 = vmor %vm1924, %vm1925
      %v1927 = vsel %vm1926, %v1919, %v1923
      %v1928 = vand.u32 2147483647, %v795
      %vm1929 = vcmp.eq.f32.partialorder %v1928, 8.507059e+37
      %v1930 = vand.u32 %v795, 2147483648
      %v1931 = vor.u32 1.1754944e-38, %v1930
      %v1932 = vsel %vm1929, %v1931, %v1927
      %v1933 = vmul.f32 1.0, %v1932
      %v1934 = vrcp.pop %v796
      %v1935 = vmul.f32 %v796, %v1934
      %v1936 = vsub.f32 1.0, %v1935
      %v1937 = vmul.f32 %v1934, %v1936
      %v1938 = vadd.f32 %v1934, %v1937
      %vm1939 = vweird.f32 %v796
      %vm1940 = vweird.f32 %v1934
      %vm1941 = vmor %vm1939, %vm1940
      %v1942 = vsel %vm1941, %v1934, %v1938
      %v1943 = vand.u32 2147483647, %v796
      %vm1944 = vcmp.eq.f32.partialorder %v1943, 8.507059e+37
      %v1945 = vand.u32 %v796, 2147483648
      %v1946 = vor.u32 1.1754944e-38, %v1945
      %v1947 = vsel %vm1944, %v1946, %v1942
      %v1948 = vmul.f32 1.0, %v1947
      %v1949 = vrcp.pop %v797
      %v1950 = vmul.f32 %v797, %v1949
      %v1951 = vsub.f32 1.0, %v1950
      %v1952 = vmul.f32 %v1949, %v1951
      %v1953 = vadd.f32 %v1949, %v1952
      %vm1954 = vweird.f32 %v797
      %vm1955 = vweird.f32 %v1949
      %vm1956 = vmor %vm1954, %vm1955
      %v1957 = vsel %vm1956, %v1949, %v1953
      %v1958 = vand.u32 2147483647, %v797
      %vm1959 = vcmp.eq.f32.partialorder %v1958, 8.507059e+37
      %v1960 = vand.u32 %v797, 2147483648
      %v1961 = vor.u32 1.1754944e-38, %v1960
      %v1962 = vsel %vm1959, %v1961, %v1957
      %v1963 = vmul.f32 1.0, %v1962
      %v1964 = vrcp.pop %v798
      %v1965 = vmul.f32 %v798, %v1964
      %v1966 = vsub.f32 1.0, %v1965
      %v1967 = vmul.f32 %v1964, %v1966
      %v1968 = vadd.f32 %v1964, %v1967
      %vm1969 = vweird.f32 %v798
      %vm1970 = vweird.f32 %v1964
      %vm1971 = vmor %vm1969, %vm1970
      %v1972 = vsel %vm1971, %v1964, %v1968
      %v1973 = vand.u32 2147483647, %v798
      %vm1974 = vcmp.eq.f32.partialorder %v1973, 8.507059e+37
      %v1975 = vand.u32 %v798, 2147483648
      %v1976 = vor.u32 1.1754944e-38, %v1975
      %v1977 = vsel %vm1974, %v1976, %v1972
      %v1978 = vmul.f32 1.0, %v1977
      %v1979 = vrcp.pop %v799
      %v1980 = vmul.f32 %v799, %v1979
      %v1981 = vsub.f32 1.0, %v1980
      %v1982 = vmul.f32 %v1979, %v1981
      %v1983 = vadd.f32 %v1979, %v1982
      %vm1984 = vweird.f32 %v799
      %vm1985 = vweird.f32 %v1979
      %vm1986 = vmor %vm1984, %vm1985
      %v1987 = vsel %vm1986, %v1979, %v1983
      %v1988 = vand.u32 2147483647, %v799
      %vm1989 = vcmp.eq.f32.partialorder %v1988, 8.507059e+37
      %v1990 = vand.u32 %v799, 2147483648
      %v1991 = vor.u32 1.1754944e-38, %v1990
      %v1992 = vsel %vm1989, %v1991, %v1987
      %v1993 = vmul.f32 1.0, %v1992
      %v1994 = vrcp.pop %v800
      %v1995 = vmul.f32 %v800, %v1994
      %v1996 = vsub.f32 1.0, %v1995
      %v1997 = vmul.f32 %v1994, %v1996
      %v1998 = vadd.f32 %v1994, %v1997
      %vm1999 = vweird.f32 %v800
      %vm2000 = vweird.f32 %v1994
      %vm2001 = vmor %vm1999, %vm2000
      %v2002 = vsel %vm2001, %v1994, %v1998
      %v2003 = vand.u32 2147483647, %v800
      %vm2004 = vcmp.eq.f32.partialorder %v2003, 8.507059e+37
      %v2005 = vand.u32 %v800, 2147483648
      %v2006 = vor.u32 1.1754944e-38, %v2005
      %v2007 = vsel %vm2004, %v2006, %v2002
      %v2008 = vmul.f32 1.0, %v2007
      %v2009 = vrcp.pop %v801
      %v2010 = vmul.f32 %v801, %v2009
      %v2011 = vsub.f32 1.0, %v2010
      %v2012 = vmul.f32 %v2009, %v2011
      %v2013 = vadd.f32 %v2009, %v2012
      %vm2014 = vweird.f32 %v801
      %vm2015 = vweird.f32 %v2009
      %vm2016 = vmor %vm2014, %vm2015
      %v2017 = vsel %vm2016, %v2009, %v2013
      %v2018 = vand.u32 2147483647, %v801
      %vm2019 = vcmp.eq.f32.partialorder %v2018, 8.507059e+37
      %v2020 = vand.u32 %v801, 2147483648
      %v2021 = vor.u32 1.1754944e-38, %v2020
      %v2022 = vsel %vm2019, %v2021, %v2017
      %v2023 = vmul.f32 1.0, %v2022
      %v2024 = vrcp.pop %v802
      %v2025 = vmul.f32 %v802, %v2024
      %v2026 = vsub.f32 1.0, %v2025
      %v2027 = vmul.f32 %v2024, %v2026
      %v2028 = vadd.f32 %v2024, %v2027
      %vm2029 = vweird.f32 %v802
      %vm2030 = vweird.f32 %v2024
      %vm2031 = vmor %vm2029, %vm2030
      %v2032 = vsel %vm2031, %v2024, %v2028
      %v2033 = vand.u32 2147483647, %v802
      %vm2034 = vcmp.eq.f32.partialorder %v2033, 8.507059e+37
      %v2035 = vand.u32 %v802, 2147483648
      %v2036 = vor.u32 1.1754944e-38, %v2035
      %v2037 = vsel %vm2034, %v2036, %v2032
      %v2038 = vmul.f32 1.0, %v2037
      %v2039 = vrcp.pop %v803
      %v2040 = vmul.f32 %v803, %v2039
      %v2041 = vsub.f32 1.0, %v2040
      %v2042 = vmul.f32 %v2039, %v2041
      %v2043 = vadd.f32 %v2039, %v2042
      %vm2044 = vweird.f32 %v803
      %vm2045 = vweird.f32 %v2039
      %vm2046 = vmor %vm2044, %vm2045
      %v2047 = vsel %vm2046, %v2039, %v2043
      %v2048 = vand.u32 2147483647, %v803
      %vm2049 = vcmp.eq.f32.partialorder %v2048, 8.507059e+37
      %v2050 = vand.u32 %v803, 2147483648
      %v2051 = vor.u32 1.1754944e-38, %v2050
      %v2052 = vsel %vm2049, %v2051, %v2047
      %v2053 = vmul.f32 1.0, %v2052
      %v2054 = vrcp.pop %v804
      %v2055 = vmul.f32 %v804, %v2054
      %v2056 = vsub.f32 1.0, %v2055
      %v2057 = vmul.f32 %v2054, %v2056
      %v2058 = vadd.f32 %v2054, %v2057
      %vm2059 = vweird.f32 %v804
      %vm2060 = vweird.f32 %v2054
      %vm2061 = vmor %vm2059, %vm2060
      %v2062 = vsel %vm2061, %v2054, %v2058
      %v2063 = vand.u32 2147483647, %v804
      %vm2064 = vcmp.eq.f32.partialorder %v2063, 8.507059e+37
      %v2065 = vand.u32 %v804, 2147483648
      %v2066 = vor.u32 1.1754944e-38, %v2065
      %v2067 = vsel %vm2064, %v2066, %v2062
      %v2068 = vmul.f32 1.0, %v2067
      %v2069 = vrcp.pop %v805
      %v2070 = vmul.f32 %v805, %v2069
      %v2071 = vsub.f32 1.0, %v2070
      %v2072 = vmul.f32 %v2069, %v2071
      %v2073 = vadd.f32 %v2069, %v2072
      %vm2074 = vweird.f32 %v805
      %vm2075 = vweird.f32 %v2069
      %vm2076 = vmor %vm2074, %vm2075
      %v2077 = vsel %vm2076, %v2069, %v2073
      %v2078 = vand.u32 2147483647, %v805
      %vm2079 = vcmp.eq.f32.partialorder %v2078, 8.507059e+37
      %v2080 = vand.u32 %v805, 2147483648
      %v2081 = vor.u32 1.1754944e-38, %v2080
      %v2082 = vsel %vm2079, %v2081, %v2077
      %v2083 = vmul.f32 1.0, %v2082
      %v2084 = vrcp.pop %v806
      %v2085 = vmul.f32 %v806, %v2084
      %v2086 = vsub.f32 1.0, %v2085
      %v2087 = vmul.f32 %v2084, %v2086
      %v2088 = vadd.f32 %v2084, %v2087
      %vm2089 = vweird.f32 %v806
      %vm2090 = vweird.f32 %v2084
      %vm2091 = vmor %vm2089, %vm2090
      %v2092 = vsel %vm2091, %v2084, %v2088
      %v2093 = vand.u32 2147483647, %v806
      %vm2094 = vcmp.eq.f32.partialorder %v2093, 8.507059e+37
      %v2095 = vand.u32 %v806, 2147483648
      %v2096 = vor.u32 1.1754944e-38, %v2095
      %v2097 = vsel %vm2094, %v2096, %v2092
      %v2098 = vmul.f32 1.0, %v2097
      %v2099 = vrcp.pop %v807
      %v2100 = vmul.f32 %v807, %v2099
      %v2101 = vsub.f32 1.0, %v2100
      %v2102 = vmul.f32 %v2099, %v2101
      %v2103 = vadd.f32 %v2099, %v2102
      %vm2104 = vweird.f32 %v807
      %vm2105 = vweird.f32 %v2099
      %vm2106 = vmor %vm2104, %vm2105
      %v2107 = vsel %vm2106, %v2099, %v2103
      %v2108 = vand.u32 2147483647, %v807
      %vm2109 = vcmp.eq.f32.partialorder %v2108, 8.507059e+37
      %v2110 = vand.u32 %v807, 2147483648
      %v2111 = vor.u32 1.1754944e-38, %v2110
      %v2112 = vsel %vm2109, %v2111, %v2107
      %v2113 = vmul.f32 1.0, %v2112
      %v2114 = vrcp.pop %v808
      %v2115 = vmul.f32 %v808, %v2114
      %v2116 = vsub.f32 1.0, %v2115
      %v2117 = vmul.f32 %v2114, %v2116
      %v2118 = vadd.f32 %v2114, %v2117
      %vm2119 = vweird.f32 %v808
      %vm2120 = vweird.f32 %v2114
      %vm2121 = vmor %vm2119, %vm2120
      %v2122 = vsel %vm2121, %v2114, %v2118
      %v2123 = vand.u32 2147483647, %v808
      %vm2124 = vcmp.eq.f32.partialorder %v2123, 8.507059e+37
      %v2125 = vand.u32 %v808, 2147483648
      %v2126 = vor.u32 1.1754944e-38, %v2125
      %v2127 = vsel %vm2124, %v2126, %v2122
      %v2128 = vmul.f32 1.0, %v2127
      %v2129 = vrcp.pop %v809
      %v2130 = vmul.f32 %v809, %v2129
      %v2131 = vsub.f32 1.0, %v2130
      %v2132 = vmul.f32 %v2129, %v2131
      %v2133 = vadd.f32 %v2129, %v2132
      %vm2134 = vweird.f32 %v809
      %vm2135 = vweird.f32 %v2129
      %vm2136 = vmor %vm2134, %vm2135
      %v2137 = vsel %vm2136, %v2129, %v2133
      %v2138 = vand.u32 2147483647, %v809
      %vm2139 = vcmp.eq.f32.partialorder %v2138, 8.507059e+37
      %v2140 = vand.u32 %v809, 2147483648
      %v2141 = vor.u32 1.1754944e-38, %v2140
      %v2142 = vsel %vm2139, %v2141, %v2137
      %v2143 = vmul.f32 1.0, %v2142
      %v2144 = vrcp.pop %v810
      %v2145 = vmul.f32 %v810, %v2144
      %v2146 = vsub.f32 1.0, %v2145
      %v2147 = vmul.f32 %v2144, %v2146
      %v2148 = vadd.f32 %v2144, %v2147
      %vm2149 = vweird.f32 %v810
      %vm2150 = vweird.f32 %v2144
      %vm2151 = vmor %vm2149, %vm2150
      %v2152 = vsel %vm2151, %v2144, %v2148
      %v2153 = vand.u32 2147483647, %v810
      %vm2154 = vcmp.eq.f32.partialorder %v2153, 8.507059e+37
      %v2155 = vand.u32 %v810, 2147483648
      %v2156 = vor.u32 1.1754944e-38, %v2155
      %v2157 = vsel %vm2154, %v2156, %v2152
      %v2158 = vmul.f32 1.0, %v2157
      %v2159 = vrcp.pop %v811
      %v2160 = vmul.f32 %v811, %v2159
      %v2161 = vsub.f32 1.0, %v2160
      %v2162 = vmul.f32 %v2159, %v2161
      %v2163 = vadd.f32 %v2159, %v2162
      %vm2164 = vweird.f32 %v811
      %vm2165 = vweird.f32 %v2159
      %vm2166 = vmor %vm2164, %vm2165
      %v2167 = vsel %vm2166, %v2159, %v2163
      %v2168 = vand.u32 2147483647, %v811
      %vm2169 = vcmp.eq.f32.partialorder %v2168, 8.507059e+37
      %v2170 = vand.u32 %v811, 2147483648
      %v2171 = vor.u32 1.1754944e-38, %v2170
      %v2172 = vsel %vm2169, %v2171, %v2167
      %v2173 = vmul.f32 1.0, %v2172
      %v2174 = vrcp.pop %v812
      %v2175 = vmul.f32 %v812, %v2174
      %v2176 = vsub.f32 1.0, %v2175
      %v2177 = vmul.f32 %v2174, %v2176
      %v2178 = vadd.f32 %v2174, %v2177
      %vm2179 = vweird.f32 %v812
      %vm2180 = vweird.f32 %v2174
      %vm2181 = vmor %vm2179, %vm2180
      %v2182 = vsel %vm2181, %v2174, %v2178
      %v2183 = vand.u32 2147483647, %v812
      %vm2184 = vcmp.eq.f32.partialorder %v2183, 8.507059e+37
      %v2185 = vand.u32 %v812, 2147483648
      %v2186 = vor.u32 1.1754944e-38, %v2185
      %v2187 = vsel %vm2184, %v2186, %v2182
      %v2188 = vmul.f32 1.0, %v2187
      %v2189 = vrcp.pop %v813
      %v2190 = vmul.f32 %v813, %v2189
      %v2191 = vsub.f32 1.0, %v2190
      %v2192 = vmul.f32 %v2189, %v2191
      %v2193 = vadd.f32 %v2189, %v2192
      %vm2194 = vweird.f32 %v813
      %vm2195 = vweird.f32 %v2189
      %vm2196 = vmor %vm2194, %vm2195
      %v2197 = vsel %vm2196, %v2189, %v2193
      %v2198 = vand.u32 2147483647, %v813
      %vm2199 = vcmp.eq.f32.partialorder %v2198, 8.507059e+37
      %v2200 = vand.u32 %v813, 2147483648
      %v2201 = vor.u32 1.1754944e-38, %v2200
      %v2202 = vsel %vm2199, %v2201, %v2197
      %v2203 = vmul.f32 1.0, %v2202
      %v2204 = vrcp.pop %v814
      %v2205 = vmul.f32 %v814, %v2204
      %v2206 = vsub.f32 1.0, %v2205
      %v2207 = vmul.f32 %v2204, %v2206
      %v2208 = vadd.f32 %v2204, %v2207
      %vm2209 = vweird.f32 %v814
      %vm2210 = vweird.f32 %v2204
      %vm2211 = vmor %vm2209, %vm2210
      %v2212 = vsel %vm2211, %v2204, %v2208
      %v2213 = vand.u32 2147483647, %v814
      %vm2214 = vcmp.eq.f32.partialorder %v2213, 8.507059e+37
      %v2215 = vand.u32 %v814, 2147483648
      %v2216 = vor.u32 1.1754944e-38, %v2215
      %v2217 = vsel %vm2214, %v2216, %v2212
      %v2218 = vmul.f32 1.0, %v2217
      %v2219 = vrcp.pop %v815
      %v2220 = vmul.f32 %v815, %v2219
      %v2221 = vsub.f32 1.0, %v2220
      %v2222 = vmul.f32 %v2219, %v2221
      %v2223 = vadd.f32 %v2219, %v2222
      %vm2224 = vweird.f32 %v815
      %vm2225 = vweird.f32 %v2219
      %vm2226 = vmor %vm2224, %vm2225
      %v2227 = vsel %vm2226, %v2219, %v2223
      %v2228 = vand.u32 2147483647, %v815
      %vm2229 = vcmp.eq.f32.partialorder %v2228, 8.507059e+37
      %v2230 = vand.u32 %v815, 2147483648
      %v2231 = vor.u32 1.1754944e-38, %v2230
      %v2232 = vsel %vm2229, %v2231, %v2227
      %v2233 = vmul.f32 1.0, %v2232
      %v2234 = vrcp.pop %v816
      %v2235 = vmul.f32 %v816, %v2234
      %v2236 = vsub.f32 1.0, %v2235
      %v2237 = vmul.f32 %v2234, %v2236
      %v2238 = vadd.f32 %v2234, %v2237
      %vm2239 = vweird.f32 %v816
      %vm2240 = vweird.f32 %v2234
      %vm2241 = vmor %vm2239, %vm2240
      %v2242 = vsel %vm2241, %v2234, %v2238
      %v2243 = vand.u32 2147483647, %v816
      %vm2244 = vcmp.eq.f32.partialorder %v2243, 8.507059e+37
      %v2245 = vand.u32 %v816, 2147483648
      %v2246 = vor.u32 1.1754944e-38, %v2245
      %v2247 = vsel %vm2244, %v2246, %v2242
      %v2248 = vmul.f32 1.0, %v2247
      %v2249 = vrcp.pop %v817
      %v2250 = vmul.f32 %v817, %v2249
      %v2251 = vsub.f32 1.0, %v2250
      %v2252 = vmul.f32 %v2249, %v2251
      %v2253 = vadd.f32 %v2249, %v2252
      %vm2254 = vweird.f32 %v817
      %vm2255 = vweird.f32 %v2249
      %vm2256 = vmor %vm2254, %vm2255
      %v2257 = vsel %vm2256, %v2249, %v2253
      %v2258 = vand.u32 2147483647, %v817
      %vm2259 = vcmp.eq.f32.partialorder %v2258, 8.507059e+37
      %v2260 = vand.u32 %v817, 2147483648
      %v2261 = vor.u32 1.1754944e-38, %v2260
      %v2262 = vsel %vm2259, %v2261, %v2257
      %v2263 = vmul.f32 1.0, %v2262
      %v2264 = vrcp.pop %v818
      %v2265 = vmul.f32 %v818, %v2264
      %v2266 = vsub.f32 1.0, %v2265
      %v2267 = vmul.f32 %v2264, %v2266
      %v2268 = vadd.f32 %v2264, %v2267
      %vm2269 = vweird.f32 %v818
      %vm2270 = vweird.f32 %v2264
      %vm2271 = vmor %vm2269, %vm2270
      %v2272 = vsel %vm2271, %v2264, %v2268
      %v2273 = vand.u32 2147483647, %v818
      %vm2274 = vcmp.eq.f32.partialorder %v2273, 8.507059e+37
      %v2275 = vand.u32 %v818, 2147483648
      %v2276 = vor.u32 1.1754944e-38, %v2275
      %v2277 = vsel %vm2274, %v2276, %v2272
      %v2278 = vmul.f32 1.0, %v2277
      %v2279 = vrcp.pop %v819
      %v2280 = vmul.f32 %v819, %v2279
      %v2281 = vsub.f32 1.0, %v2280
      %v2282 = vmul.f32 %v2279, %v2281
      %v2283 = vadd.f32 %v2279, %v2282
      %vm2284 = vweird.f32 %v819
      %vm2285 = vweird.f32 %v2279
      %vm2286 = vmor %vm2284, %vm2285
      %v2287 = vsel %vm2286, %v2279, %v2283
      %v2288 = vand.u32 2147483647, %v819
      %vm2289 = vcmp.eq.f32.partialorder %v2288, 8.507059e+37
      %v2290 = vand.u32 %v819, 2147483648
      %v2291 = vor.u32 1.1754944e-38, %v2290
      %v2292 = vsel %vm2289, %v2291, %v2287
      %v2293 = vmul.f32 1.0, %v2292
      %v2294 = vrcp.pop %v820
      %v2295 = vmul.f32 %v820, %v2294
      %v2296 = vsub.f32 1.0, %v2295
      %v2297 = vmul.f32 %v2294, %v2296
      %v2298 = vadd.f32 %v2294, %v2297
      %vm2299 = vweird.f32 %v820
      %vm2300 = vweird.f32 %v2294
      %vm2301 = vmor %vm2299, %vm2300
      %v2302 = vsel %vm2301, %v2294, %v2298
      %v2303 = vand.u32 2147483647, %v820
      %vm2304 = vcmp.eq.f32.partialorder %v2303, 8.507059e+37
      %v2305 = vand.u32 %v820, 2147483648
      %v2306 = vor.u32 1.1754944e-38, %v2305
      %v2307 = vsel %vm2304, %v2306, %v2302
      %v2308 = vmul.f32 1.0, %v2307
      %v2309 = vrcp.pop %v821
      %v2310 = vmul.f32 %v821, %v2309
      %v2311 = vsub.f32 1.0, %v2310
      %v2312 = vmul.f32 %v2309, %v2311
      %v2313 = vadd.f32 %v2309, %v2312
      %vm2314 = vweird.f32 %v821
      %vm2315 = vweird.f32 %v2309
      %vm2316 = vmor %vm2314, %vm2315
      %v2317 = vsel %vm2316, %v2309, %v2313
      %v2318 = vand.u32 2147483647, %v821
      %vm2319 = vcmp.eq.f32.partialorder %v2318, 8.507059e+37
      %v2320 = vand.u32 %v821, 2147483648
      %v2321 = vor.u32 1.1754944e-38, %v2320
      %v2322 = vsel %vm2319, %v2321, %v2317
      %v2323 = vmul.f32 1.0, %v2322
      %v2324 = vrcp.pop %v822
      %v2325 = vmul.f32 %v822, %v2324
      %v2326 = vsub.f32 1.0, %v2325
      %v2327 = vmul.f32 %v2324, %v2326
      %v2328 = vadd.f32 %v2324, %v2327
      %vm2329 = vweird.f32 %v822
      %vm2330 = vweird.f32 %v2324
      %vm2331 = vmor %vm2329, %vm2330
      %v2332 = vsel %vm2331, %v2324, %v2328
      %v2333 = vand.u32 2147483647, %v822
      %vm2334 = vcmp.eq.f32.partialorder %v2333, 8.507059e+37
      %v2335 = vand.u32 %v822, 2147483648
      %v2336 = vor.u32 1.1754944e-38, %v2335
      %v2337 = vsel %vm2334, %v2336, %v2332
      %v2338 = vmul.f32 1.0, %v2337
      %v2339 = vrcp.pop %v823
      %v2340 = vmul.f32 %v823, %v2339
      %v2341 = vsub.f32 1.0, %v2340
      %v2342 = vmul.f32 %v2339, %v2341
      %v2343 = vadd.f32 %v2339, %v2342
      %vm2344 = vweird.f32 %v823
      %vm2345 = vweird.f32 %v2339
      %vm2346 = vmor %vm2344, %vm2345
      %v2347 = vsel %vm2346, %v2339, %v2343
      %v2348 = vand.u32 2147483647, %v823
      %vm2349 = vcmp.eq.f32.partialorder %v2348, 8.507059e+37
      %v2350 = vand.u32 %v823, 2147483648
      %v2351 = vor.u32 1.1754944e-38, %v2350
      %v2352 = vsel %vm2349, %v2351, %v2347
      %v2353 = vmul.f32 1.0, %v2352
      %v2354 = vrcp.pop %v824
      %v2355 = vmul.f32 %v824, %v2354
      %v2356 = vsub.f32 1.0, %v2355
      %v2357 = vmul.f32 %v2354, %v2356
      %v2358 = vadd.f32 %v2354, %v2357
      %vm2359 = vweird.f32 %v824
      %vm2360 = vweird.f32 %v2354
      %vm2361 = vmor %vm2359, %vm2360
      %v2362 = vsel %vm2361, %v2354, %v2358
      %v2363 = vand.u32 2147483647, %v824
      %vm2364 = vcmp.eq.f32.partialorder %v2363, 8.507059e+37
      %v2365 = vand.u32 %v824, 2147483648
      %v2366 = vor.u32 1.1754944e-38, %v2365
      %v2367 = vsel %vm2364, %v2366, %v2362
      %v2368 = vmul.f32 1.0, %v2367
      %v2369 = vrcp.pop %v825
      %v2370 = vmul.f32 %v825, %v2369
      %v2371 = vsub.f32 1.0, %v2370
      %v2372 = vmul.f32 %v2369, %v2371
      %v2373 = vadd.f32 %v2369, %v2372
      %vm2374 = vweird.f32 %v825
      %vm2375 = vweird.f32 %v2369
      %vm2376 = vmor %vm2374, %vm2375
      %v2377 = vsel %vm2376, %v2369, %v2373
      %v2378 = vand.u32 2147483647, %v825
      %vm2379 = vcmp.eq.f32.partialorder %v2378, 8.507059e+37
      %v2380 = vand.u32 %v825, 2147483648
      %v2381 = vor.u32 1.1754944e-38, %v2380
      %v2382 = vsel %vm2379, %v2381, %v2377
      %v2383 = vmul.f32 1.0, %v2382
      %v2384 = vrcp.pop %v826
      %v2385 = vmul.f32 %v826, %v2384
      %v2386 = vsub.f32 1.0, %v2385
      %v2387 = vmul.f32 %v2384, %v2386
      %v2388 = vadd.f32 %v2384, %v2387
      %vm2389 = vweird.f32 %v826
      %vm2390 = vweird.f32 %v2384
      %vm2391 = vmor %vm2389, %vm2390
      %v2392 = vsel %vm2391, %v2384, %v2388
      %v2393 = vand.u32 2147483647, %v826
      %vm2394 = vcmp.eq.f32.partialorder %v2393, 8.507059e+37
      %v2395 = vand.u32 %v826, 2147483648
      %v2396 = vor.u32 1.1754944e-38, %v2395
      %v2397 = vsel %vm2394, %v2396, %v2392
      %v2398 = vmul.f32 1.0, %v2397
      %v2399 = vrcp.pop %v827
      %v2400 = vmul.f32 %v827, %v2399
      %v2401 = vsub.f32 1.0, %v2400
      %v2402 = vmul.f32 %v2399, %v2401
      %v2403 = vadd.f32 %v2399, %v2402
      %vm2404 = vweird.f32 %v827
      %vm2405 = vweird.f32 %v2399
      %vm2406 = vmor %vm2404, %vm2405
      %v2407 = vsel %vm2406, %v2399, %v2403
      %v2408 = vand.u32 2147483647, %v827
      %vm2409 = vcmp.eq.f32.partialorder %v2408, 8.507059e+37
      %v2410 = vand.u32 %v827, 2147483648
      %v2411 = vor.u32 1.1754944e-38, %v2410
      %v2412 = vsel %vm2409, %v2411, %v2407
      %v2413 = vmul.f32 1.0, %v2412
      %v2414 = vrcp.pop %v828
      %v2415 = vmul.f32 %v828, %v2414
      %v2416 = vsub.f32 1.0, %v2415
      %v2417 = vmul.f32 %v2414, %v2416
      %v2418 = vadd.f32 %v2414, %v2417
      %vm2419 = vweird.f32 %v828
      %vm2420 = vweird.f32 %v2414
      %vm2421 = vmor %vm2419, %vm2420
      %v2422 = vsel %vm2421, %v2414, %v2418
      %v2423 = vand.u32 2147483647, %v828
      %vm2424 = vcmp.eq.f32.partialorder %v2423, 8.507059e+37
      %v2425 = vand.u32 %v828, 2147483648
      %v2426 = vor.u32 1.1754944e-38, %v2425
      %v2427 = vsel %vm2424, %v2426, %v2422
      %v2428 = vmul.f32 1.0, %v2427
      %v2429 = vrcp.pop %v829
      %v2430 = vmul.f32 %v829, %v2429
      %v2431 = vsub.f32 1.0, %v2430
      %v2432 = vmul.f32 %v2429, %v2431
      %v2433 = vadd.f32 %v2429, %v2432
      %vm2434 = vweird.f32 %v829
      %vm2435 = vweird.f32 %v2429
      %vm2436 = vmor %vm2434, %vm2435
      %v2437 = vsel %vm2436, %v2429, %v2433
      %v2438 = vand.u32 2147483647, %v829
      %vm2439 = vcmp.eq.f32.partialorder %v2438, 8.507059e+37
      %v2440 = vand.u32 %v829, 2147483648
      %v2441 = vor.u32 1.1754944e-38, %v2440
      %v2442 = vsel %vm2439, %v2441, %v2437
      %v2443 = vmul.f32 1.0, %v2442
      %v2444 = vrcp.pop %v830
      %v2445 = vmul.f32 %v830, %v2444
      %v2446 = vsub.f32 1.0, %v2445
      %v2447 = vmul.f32 %v2444, %v2446
      %v2448 = vadd.f32 %v2444, %v2447
      %vm2449 = vweird.f32 %v830
      %vm2450 = vweird.f32 %v2444
      %vm2451 = vmor %vm2449, %vm2450
      %v2452 = vsel %vm2451, %v2444, %v2448
      %v2453 = vand.u32 2147483647, %v830
      %vm2454 = vcmp.eq.f32.partialorder %v2453, 8.507059e+37
      %v2455 = vand.u32 %v830, 2147483648
      %v2456 = vor.u32 1.1754944e-38, %v2455
      %v2457 = vsel %vm2454, %v2456, %v2452
      %v2458 = vmul.f32 1.0, %v2457
      %v2459 = vrcp.pop %v831
      %v2460 = vmul.f32 %v831, %v2459
      %v2461 = vsub.f32 1.0, %v2460
      %v2462 = vmul.f32 %v2459, %v2461
      %v2463 = vadd.f32 %v2459, %v2462
      %vm2464 = vweird.f32 %v831
      %vm2465 = vweird.f32 %v2459
      %vm2466 = vmor %vm2464, %vm2465
      %v2467 = vsel %vm2466, %v2459, %v2463
      %v2468 = vand.u32 2147483647, %v831
      %vm2469 = vcmp.eq.f32.partialorder %v2468, 8.507059e+37
      %v2470 = vand.u32 %v831, 2147483648
      %v2471 = vor.u32 1.1754944e-38, %v2470
      %v2472 = vsel %vm2469, %v2471, %v2467
      %v2473 = vmul.f32 1.0, %v2472
      %v2474 = vrcp.pop %v832
      %v2475 = vmul.f32 %v832, %v2474
      %v2476 = vsub.f32 1.0, %v2475
      %v2477 = vmul.f32 %v2474, %v2476
      %v2478 = vadd.f32 %v2474, %v2477
      %vm2479 = vweird.f32 %v832
      %vm2480 = vweird.f32 %v2474
      %vm2481 = vmor %vm2479, %vm2480
      %v2482 = vsel %vm2481, %v2474, %v2478
      %v2483 = vand.u32 2147483647, %v832
      %vm2484 = vcmp.eq.f32.partialorder %v2483, 8.507059e+37
      %v2485 = vand.u32 %v832, 2147483648
      %v2486 = vor.u32 1.1754944e-38, %v2485
      %v2487 = vsel %vm2484, %v2486, %v2482
      %v2488 = vmul.f32 1.0, %v2487
      %v2489 = vrcp.pop %v833
      %v2490 = vmul.f32 %v833, %v2489
      %v2491 = vsub.f32 1.0, %v2490
      %v2492 = vmul.f32 %v2489, %v2491
      %v2493 = vadd.f32 %v2489, %v2492
      %vm2494 = vweird.f32 %v833
      %vm2495 = vweird.f32 %v2489
      %vm2496 = vmor %vm2494, %vm2495
      %v2497 = vsel %vm2496, %v2489, %v2493
      %v2498 = vand.u32 2147483647, %v833
      %vm2499 = vcmp.eq.f32.partialorder %v2498, 8.507059e+37
      %v2500 = vand.u32 %v833, 2147483648
      %v2501 = vor.u32 1.1754944e-38, %v2500
      %v2502 = vsel %vm2499, %v2501, %v2497
      %v2503 = vmul.f32 1.0, %v2502
      %v2504 = vrcp.pop %v834
      %v2505 = vmul.f32 %v834, %v2504
      %v2506 = vsub.f32 1.0, %v2505
      %v2507 = vmul.f32 %v2504, %v2506
      %v2508 = vadd.f32 %v2504, %v2507
      %vm2509 = vweird.f32 %v834
      %vm2510 = vweird.f32 %v2504
      %vm2511 = vmor %vm2509, %vm2510
      %v2512 = vsel %vm2511, %v2504, %v2508
      %v2513 = vand.u32 2147483647, %v834
      %vm2514 = vcmp.eq.f32.partialorder %v2513, 8.507059e+37
      %v2515 = vand.u32 %v834, 2147483648
      %v2516 = vor.u32 1.1754944e-38, %v2515
      %v2517 = vsel %vm2514, %v2516, %v2512
      %v2518 = vmul.f32 1.0, %v2517
      %v2519 = vrcp.pop %v835
      %v2520 = vmul.f32 %v835, %v2519
      %v2521 = vsub.f32 1.0, %v2520
      %v2522 = vmul.f32 %v2519, %v2521
      %v2523 = vadd.f32 %v2519, %v2522
      %vm2524 = vweird.f32 %v835
      %vm2525 = vweird.f32 %v2519
      %vm2526 = vmor %vm2524, %vm2525
      %v2527 = vsel %vm2526, %v2519, %v2523
      %v2528 = vand.u32 2147483647, %v835
      %vm2529 = vcmp.eq.f32.partialorder %v2528, 8.507059e+37
      %v2530 = vand.u32 %v835, 2147483648
      %v2531 = vor.u32 1.1754944e-38, %v2530
      %v2532 = vsel %vm2529, %v2531, %v2527
      %v2533 = vmul.f32 1.0, %v2532
      %v2534 = vrcp.pop %v836
      %v2535 = vmul.f32 %v836, %v2534
      %v2536 = vsub.f32 1.0, %v2535
      %v2537 = vmul.f32 %v2534, %v2536
      %v2538 = vadd.f32 %v2534, %v2537
      %vm2539 = vweird.f32 %v836
      %vm2540 = vweird.f32 %v2534
      %vm2541 = vmor %vm2539, %vm2540
      %v2542 = vsel %vm2541, %v2534, %v2538
      %v2543 = vand.u32 2147483647, %v836
      %vm2544 = vcmp.eq.f32.partialorder %v2543, 8.507059e+37
      %v2545 = vand.u32 %v836, 2147483648
      %v2546 = vor.u32 1.1754944e-38, %v2545
      %v2547 = vsel %vm2544, %v2546, %v2542
      %v2548 = vmul.f32 1.0, %v2547
      %v2549 = vrcp.pop %v837
      %v2550 = vmul.f32 %v837, %v2549
      %v2551 = vsub.f32 1.0, %v2550
      %v2552 = vmul.f32 %v2549, %v2551
      %v2553 = vadd.f32 %v2549, %v2552
      %vm2554 = vweird.f32 %v837
      %vm2555 = vweird.f32 %v2549
      %vm2556 = vmor %vm2554, %vm2555
      %v2557 = vsel %vm2556, %v2549, %v2553
      %v2558 = vand.u32 2147483647, %v837
      %vm2559 = vcmp.eq.f32.partialorder %v2558, 8.507059e+37
      %v2560 = vand.u32 %v837, 2147483648
      %v2561 = vor.u32 1.1754944e-38, %v2560
      %v2562 = vsel %vm2559, %v2561, %v2557
      %v2563 = vmul.f32 1.0, %v2562
      %v2564 = vrcp.pop %v838
      %v2565 = vmul.f32 %v838, %v2564
      %v2566 = vsub.f32 1.0, %v2565
      %v2567 = vmul.f32 %v2564, %v2566
      %v2568 = vadd.f32 %v2564, %v2567
      %vm2569 = vweird.f32 %v838
      %vm2570 = vweird.f32 %v2564
      %vm2571 = vmor %vm2569, %vm2570
      %v2572 = vsel %vm2571, %v2564, %v2568
      %v2573 = vand.u32 2147483647, %v838
      %vm2574 = vcmp.eq.f32.partialorder %v2573, 8.507059e+37
      %v2575 = vand.u32 %v838, 2147483648
      %v2576 = vor.u32 1.1754944e-38, %v2575
      %v2577 = vsel %vm2574, %v2576, %v2572
      %v2578 = vmul.f32 1.0, %v2577
      %v2579 = vrcp.pop %v839
      %v2580 = vmul.f32 %v839, %v2579
      %v2581 = vsub.f32 1.0, %v2580
      %v2582 = vmul.f32 %v2579, %v2581
      %v2583 = vadd.f32 %v2579, %v2582
      %vm2584 = vweird.f32 %v839
      %vm2585 = vweird.f32 %v2579
      %vm2586 = vmor %vm2584, %vm2585
      %v2587 = vsel %vm2586, %v2579, %v2583
      %v2588 = vand.u32 2147483647, %v839
      %vm2589 = vcmp.eq.f32.partialorder %v2588, 8.507059e+37
      %v2590 = vand.u32 %v839, 2147483648
      %v2591 = vor.u32 1.1754944e-38, %v2590
      %v2592 = vsel %vm2589, %v2591, %v2587
      %v2593 = vmul.f32 1.0, %v2592
      %v2594 = vrcp.pop %v840
      %v2595 = vmul.f32 %v840, %v2594
      %v2596 = vsub.f32 1.0, %v2595
      %v2597 = vmul.f32 %v2594, %v2596
      %v2598 = vadd.f32 %v2594, %v2597
      %vm2599 = vweird.f32 %v840
      %vm2600 = vweird.f32 %v2594
      %vm2601 = vmor %vm2599, %vm2600
      %v2602 = vsel %vm2601, %v2594, %v2598
      %v2603 = vand.u32 2147483647, %v840
      %vm2604 = vcmp.eq.f32.partialorder %v2603, 8.507059e+37
      %v2605 = vand.u32 %v840, 2147483648
      %v2606 = vor.u32 1.1754944e-38, %v2605
      %v2607 = vsel %vm2604, %v2606, %v2602
      %v2608 = vmul.f32 1.0, %v2607
      %v2609 = vrcp.pop %v841
      %v2610 = vmul.f32 %v841, %v2609
      %v2611 = vsub.f32 1.0, %v2610
      %v2612 = vmul.f32 %v2609, %v2611
      %v2613 = vadd.f32 %v2609, %v2612
      %vm2614 = vweird.f32 %v841
      %vm2615 = vweird.f32 %v2609
      %vm2616 = vmor %vm2614, %vm2615
      %v2617 = vsel %vm2616, %v2609, %v2613
      %v2618 = vand.u32 2147483647, %v841
      %vm2619 = vcmp.eq.f32.partialorder %v2618, 8.507059e+37
      %v2620 = vand.u32 %v841, 2147483648
      %v2621 = vor.u32 1.1754944e-38, %v2620
      %v2622 = vsel %vm2619, %v2621, %v2617
      %v2623 = vmul.f32 1.0, %v2622
      %v2624 = vrcp.pop %v842
      %v2625 = vmul.f32 %v842, %v2624
      %v2626 = vsub.f32 1.0, %v2625
      %v2627 = vmul.f32 %v2624, %v2626
      %v2628 = vadd.f32 %v2624, %v2627
      %vm2629 = vweird.f32 %v842
      %vm2630 = vweird.f32 %v2624
      %vm2631 = vmor %vm2629, %vm2630
      %v2632 = vsel %vm2631, %v2624, %v2628
      %v2633 = vand.u32 2147483647, %v842
      %vm2634 = vcmp.eq.f32.partialorder %v2633, 8.507059e+37
      %v2635 = vand.u32 %v842, 2147483648
      %v2636 = vor.u32 1.1754944e-38, %v2635
      %v2637 = vsel %vm2634, %v2636, %v2632
      %v2638 = vmul.f32 1.0, %v2637
      %v2639 = vrcp.pop %v843
      %v2640 = vmul.f32 %v843, %v2639
      %v2641 = vsub.f32 1.0, %v2640
      %v2642 = vmul.f32 %v2639, %v2641
      %v2643 = vadd.f32 %v2639, %v2642
      %vm2644 = vweird.f32 %v843
      %vm2645 = vweird.f32 %v2639
      %vm2646 = vmor %vm2644, %vm2645
      %v2647 = vsel %vm2646, %v2639, %v2643
      %v2648 = vand.u32 2147483647, %v843
      %vm2649 = vcmp.eq.f32.partialorder %v2648, 8.507059e+37
      %v2650 = vand.u32 %v843, 2147483648
      %v2651 = vor.u32 1.1754944e-38, %v2650
      %v2652 = vsel %vm2649, %v2651, %v2647
      %v2653 = vmul.f32 1.0, %v2652
      %v2654 = vrcp.pop %v844
      %v2655 = vmul.f32 %v844, %v2654
      %v2656 = vsub.f32 1.0, %v2655
      %v2657 = vmul.f32 %v2654, %v2656
      %v2658 = vadd.f32 %v2654, %v2657
      %vm2659 = vweird.f32 %v844
      %vm2660 = vweird.f32 %v2654
      %vm2661 = vmor %vm2659, %vm2660
      %v2662 = vsel %vm2661, %v2654, %v2658
      %v2663 = vand.u32 2147483647, %v844
      %vm2664 = vcmp.eq.f32.partialorder %v2663, 8.507059e+37
      %v2665 = vand.u32 %v844, 2147483648
      %v2666 = vor.u32 1.1754944e-38, %v2665
      %v2667 = vsel %vm2664, %v2666, %v2662
      %v2668 = vmul.f32 1.0, %v2667
      %v2669 = vrcp.pop %v845
      %v2670 = vmul.f32 %v845, %v2669
      %v2671 = vsub.f32 1.0, %v2670
      %v2672 = vmul.f32 %v2669, %v2671
      %v2673 = vadd.f32 %v2669, %v2672
      %vm2674 = vweird.f32 %v845
      %vm2675 = vweird.f32 %v2669
      %vm2676 = vmor %vm2674, %vm2675
      %v2677 = vsel %vm2676, %v2669, %v2673
      %v2678 = vand.u32 2147483647, %v845
      %vm2679 = vcmp.eq.f32.partialorder %v2678, 8.507059e+37
      %v2680 = vand.u32 %v845, 2147483648
      %v2681 = vor.u32 1.1754944e-38, %v2680
      %v2682 = vsel %vm2679, %v2681, %v2677
      %v2683 = vmul.f32 1.0, %v2682
      %v2684 = vrcp.pop %v846
      %v2685 = vmul.f32 %v846, %v2684
      %v2686 = vsub.f32 1.0, %v2685
      %v2687 = vmul.f32 %v2684, %v2686
      %v2688 = vadd.f32 %v2684, %v2687
      %vm2689 = vweird.f32 %v846
      %vm2690 = vweird.f32 %v2684
      %vm2691 = vmor %vm2689, %vm2690
      %v2692 = vsel %vm2691, %v2684, %v2688
      %v2693 = vand.u32 2147483647, %v846
      %vm2694 = vcmp.eq.f32.partialorder %v2693, 8.507059e+37
      %v2695 = vand.u32 %v846, 2147483648
      %v2696 = vor.u32 1.1754944e-38, %v2695
      %v2697 = vsel %vm2694, %v2696, %v2692
      %v2698 = vmul.f32 1.0, %v2697
      %v2699 = vrcp.pop %v847
      %v2700 = vmul.f32 %v847, %v2699
      %v2701 = vsub.f32 1.0, %v2700
      %v2702 = vmul.f32 %v2699, %v2701
      %v2703 = vadd.f32 %v2699, %v2702
      %vm2704 = vweird.f32 %v847
      %vm2705 = vweird.f32 %v2699
      %vm2706 = vmor %vm2704, %vm2705
      %v2707 = vsel %vm2706, %v2699, %v2703
      %v2708 = vand.u32 2147483647, %v847
      %vm2709 = vcmp.eq.f32.partialorder %v2708, 8.507059e+37
      %v2710 = vand.u32 %v847, 2147483648
      %v2711 = vor.u32 1.1754944e-38, %v2710
      %v2712 = vsel %vm2709, %v2711, %v2707
      %v2713 = vmul.f32 1.0, %v2712
      %v2714 = vrcp.pop %v848
      %v2715 = vmul.f32 %v848, %v2714
      %v2716 = vsub.f32 1.0, %v2715
      %v2717 = vmul.f32 %v2714, %v2716
      %v2718 = vadd.f32 %v2714, %v2717
      %vm2719 = vweird.f32 %v848
      %vm2720 = vweird.f32 %v2714
      %vm2721 = vmor %vm2719, %vm2720
      %v2722 = vsel %vm2721, %v2714, %v2718
      %v2723 = vand.u32 2147483647, %v848
      %vm2724 = vcmp.eq.f32.partialorder %v2723, 8.507059e+37
      %v2725 = vand.u32 %v848, 2147483648
      %v2726 = vor.u32 1.1754944e-38, %v2725
      %v2727 = vsel %vm2724, %v2726, %v2722
      %v2728 = vmul.f32 1.0, %v2727
      %v2729 = vrcp.pop %v849
      %v2730 = vmul.f32 %v849, %v2729
      %v2731 = vsub.f32 1.0, %v2730
      %v2732 = vmul.f32 %v2729, %v2731
      %v2733 = vadd.f32 %v2729, %v2732
      %vm2734 = vweird.f32 %v849
      %vm2735 = vweird.f32 %v2729
      %vm2736 = vmor %vm2734, %vm2735
      %v2737 = vsel %vm2736, %v2729, %v2733
      %v2738 = vand.u32 2147483647, %v849
      %vm2739 = vcmp.eq.f32.partialorder %v2738, 8.507059e+37
      %v2740 = vand.u32 %v849, 2147483648
      %v2741 = vor.u32 1.1754944e-38, %v2740
      %v2742 = vsel %vm2739, %v2741, %v2737
      %v2743 = vmul.f32 1.0, %v2742
      %v2744 = vrcp.pop %v850
      %v2745 = vmul.f32 %v850, %v2744
      %v2746 = vsub.f32 1.0, %v2745
      %v2747 = vmul.f32 %v2744, %v2746
      %v2748 = vadd.f32 %v2744, %v2747
      %vm2749 = vweird.f32 %v850
      %vm2750 = vweird.f32 %v2744
      %vm2751 = vmor %vm2749, %vm2750
      %v2752 = vsel %vm2751, %v2744, %v2748
      %v2753 = vand.u32 2147483647, %v850
      %vm2754 = vcmp.eq.f32.partialorder %v2753, 8.507059e+37
      %v2755 = vand.u32 %v850, 2147483648
      %v2756 = vor.u32 1.1754944e-38, %v2755
      %v2757 = vsel %vm2754, %v2756, %v2752
      %v2758 = vmul.f32 1.0, %v2757
      %v2759 = vrcp.pop %v851
      %v2760 = vmul.f32 %v851, %v2759
      %v2761 = vsub.f32 1.0, %v2760
      %v2762 = vmul.f32 %v2759, %v2761
      %v2763 = vadd.f32 %v2759, %v2762
      %vm2764 = vweird.f32 %v851
      %vm2765 = vweird.f32 %v2759
      %vm2766 = vmor %vm2764, %vm2765
      %v2767 = vsel %vm2766, %v2759, %v2763
      %v2768 = vand.u32 2147483647, %v851
      %vm2769 = vcmp.eq.f32.partialorder %v2768, 8.507059e+37
      %v2770 = vand.u32 %v851, 2147483648
      %v2771 = vor.u32 1.1754944e-38, %v2770
      %v2772 = vsel %vm2769, %v2771, %v2767
      %v2773 = vmul.f32 1.0, %v2772
      %v2774 = vrcp.pop %v852
      %v2775 = vmul.f32 %v852, %v2774
      %v2776 = vsub.f32 1.0, %v2775
      %v2777 = vmul.f32 %v2774, %v2776
      %v2778 = vadd.f32 %v2774, %v2777
      %vm2779 = vweird.f32 %v852
      %vm2780 = vweird.f32 %v2774
      %vm2781 = vmor %vm2779, %vm2780
      %v2782 = vsel %vm2781, %v2774, %v2778
      %v2783 = vand.u32 2147483647, %v852
      %vm2784 = vcmp.eq.f32.partialorder %v2783, 8.507059e+37
      %v2785 = vand.u32 %v852, 2147483648
      %v2786 = vor.u32 1.1754944e-38, %v2785
      %v2787 = vsel %vm2784, %v2786, %v2782
      %v2788 = vmul.f32 1.0, %v2787
      %v2789 = vrcp.pop %v853
      %v2790 = vmul.f32 %v853, %v2789
      %v2791 = vsub.f32 1.0, %v2790
      %v2792 = vmul.f32 %v2789, %v2791
      %v2793 = vadd.f32 %v2789, %v2792
      %vm2794 = vweird.f32 %v853
      %vm2795 = vweird.f32 %v2789
      %vm2796 = vmor %vm2794, %vm2795
      %v2797 = vsel %vm2796, %v2789, %v2793
      %v2798 = vand.u32 2147483647, %v853
      %vm2799 = vcmp.eq.f32.partialorder %v2798, 8.507059e+37
      %v2800 = vand.u32 %v853, 2147483648
      %v2801 = vor.u32 1.1754944e-38, %v2800
      %v2802 = vsel %vm2799, %v2801, %v2797
      %v2803 = vmul.f32 1.0, %v2802
      %v2804 = vrcp.pop %v854
      %v2805 = vmul.f32 %v854, %v2804
      %v2806 = vsub.f32 1.0, %v2805
      %v2807 = vmul.f32 %v2804, %v2806
      %v2808 = vadd.f32 %v2804, %v2807
      %vm2809 = vweird.f32 %v854
      %vm2810 = vweird.f32 %v2804
      %vm2811 = vmor %vm2809, %vm2810
      %v2812 = vsel %vm2811, %v2804, %v2808
      %v2813 = vand.u32 2147483647, %v854
      %vm2814 = vcmp.eq.f32.partialorder %v2813, 8.507059e+37
      %v2815 = vand.u32 %v854, 2147483648
      %v2816 = vor.u32 1.1754944e-38, %v2815
      %v2817 = vsel %vm2814, %v2816, %v2812
      %v2818 = vmul.f32 1.0, %v2817
      %v2819 = vrcp.pop %v855
      %v2820 = vmul.f32 %v855, %v2819
      %v2821 = vsub.f32 1.0, %v2820
      %v2822 = vmul.f32 %v2819, %v2821
      %v2823 = vadd.f32 %v2819, %v2822
      %vm2824 = vweird.f32 %v855
      %vm2825 = vweird.f32 %v2819
      %vm2826 = vmor %vm2824, %vm2825
      %v2827 = vsel %vm2826, %v2819, %v2823
      %v2828 = vand.u32 2147483647, %v855
      %vm2829 = vcmp.eq.f32.partialorder %v2828, 8.507059e+37
      %v2830 = vand.u32 %v855, 2147483648
      %v2831 = vor.u32 1.1754944e-38, %v2830
      %v2832 = vsel %vm2829, %v2831, %v2827
      %v2833 = vmul.f32 1.0, %v2832
      %v2834 = vrcp.pop %v856
      %v2835 = vmul.f32 %v856, %v2834
      %v2836 = vsub.f32 1.0, %v2835
      %v2837 = vmul.f32 %v2834, %v2836
      %v2838 = vadd.f32 %v2834, %v2837
      %vm2839 = vweird.f32 %v856
      %vm2840 = vweird.f32 %v2834
      %vm2841 = vmor %vm2839, %vm2840
      %v2842 = vsel %vm2841, %v2834, %v2838
      %v2843 = vand.u32 2147483647, %v856
      %vm2844 = vcmp.eq.f32.partialorder %v2843, 8.507059e+37
      %v2845 = vand.u32 %v856, 2147483648
      %v2846 = vor.u32 1.1754944e-38, %v2845
      %v2847 = vsel %vm2844, %v2846, %v2842
      %v2848 = vmul.f32 1.0, %v2847
      %v2849 = vrcp.pop %v857
      %v2850 = vmul.f32 %v857, %v2849
      %v2851 = vsub.f32 1.0, %v2850
      %v2852 = vmul.f32 %v2849, %v2851
      %v2853 = vadd.f32 %v2849, %v2852
      %vm2854 = vweird.f32 %v857
      %vm2855 = vweird.f32 %v2849
      %vm2856 = vmor %vm2854, %vm2855
      %v2857 = vsel %vm2856, %v2849, %v2853
      %v2858 = vand.u32 2147483647, %v857
      %vm2859 = vcmp.eq.f32.partialorder %v2858, 8.507059e+37
      %v2860 = vand.u32 %v857, 2147483648
      %v2861 = vor.u32 1.1754944e-38, %v2860
      %v2862 = vsel %vm2859, %v2861, %v2857
      %v2863 = vmul.f32 1.0, %v2862
      %v2864 = vrcp.pop %v858
      %v2865 = vmul.f32 %v858, %v2864
      %v2866 = vsub.f32 1.0, %v2865
      %v2867 = vmul.f32 %v2864, %v2866
      %v2868 = vadd.f32 %v2864, %v2867
      %vm2869 = vweird.f32 %v858
      %vm2870 = vweird.f32 %v2864
      %vm2871 = vmor %vm2869, %vm2870
      %v2872 = vsel %vm2871, %v2864, %v2868
      %v2873 = vand.u32 2147483647, %v858
      %vm2874 = vcmp.eq.f32.partialorder %v2873, 8.507059e+37
      %v2875 = vand.u32 %v858, 2147483648
      %v2876 = vor.u32 1.1754944e-38, %v2875
      %v2877 = vsel %vm2874, %v2876, %v2872
      %v2878 = vmul.f32 1.0, %v2877
      %v2879 = vrcp.pop %v859
      %v2880 = vmul.f32 %v859, %v2879
      %v2881 = vsub.f32 1.0, %v2880
      %v2882 = vmul.f32 %v2879, %v2881
      %v2883 = vadd.f32 %v2879, %v2882
      %vm2884 = vweird.f32 %v859
      %vm2885 = vweird.f32 %v2879
      %vm2886 = vmor %vm2884, %vm2885
      %v2887 = vsel %vm2886, %v2879, %v2883
      %v2888 = vand.u32 2147483647, %v859
      %vm2889 = vcmp.eq.f32.partialorder %v2888, 8.507059e+37
      %v2890 = vand.u32 %v859, 2147483648
      %v2891 = vor.u32 1.1754944e-38, %v2890
      %v2892 = vsel %vm2889, %v2891, %v2887
      %v2893 = vmul.f32 1.0, %v2892
      %v2894 = vrcp.pop %v860
      %v2895 = vmul.f32 %v860, %v2894
      %v2896 = vsub.f32 1.0, %v2895
      %v2897 = vmul.f32 %v2894, %v2896
      %v2898 = vadd.f32 %v2894, %v2897
      %vm2899 = vweird.f32 %v860
      %vm2900 = vweird.f32 %v2894
      %vm2901 = vmor %vm2899, %vm2900
      %v2902 = vsel %vm2901, %v2894, %v2898
      %v2903 = vand.u32 2147483647, %v860
      %vm2904 = vcmp.eq.f32.partialorder %v2903, 8.507059e+37
      %v2905 = vand.u32 %v860, 2147483648
      %v2906 = vor.u32 1.1754944e-38, %v2905
      %v2907 = vsel %vm2904, %v2906, %v2902
      %v2908 = vmul.f32 1.0, %v2907
      %v2909 = vrcp.pop %v861
      %v2910 = vmul.f32 %v861, %v2909
      %v2911 = vsub.f32 1.0, %v2910
      %v2912 = vmul.f32 %v2909, %v2911
      %v2913 = vadd.f32 %v2909, %v2912
      %vm2914 = vweird.f32 %v861
      %vm2915 = vweird.f32 %v2909
      %vm2916 = vmor %vm2914, %vm2915
      %v2917 = vsel %vm2916, %v2909, %v2913
      %v2918 = vand.u32 2147483647, %v861
      %vm2919 = vcmp.eq.f32.partialorder %v2918, 8.507059e+37
      %v2920 = vand.u32 %v861, 2147483648
      %v2921 = vor.u32 1.1754944e-38, %v2920
      %v2922 = vsel %vm2919, %v2921, %v2917
      %v2923 = vmul.f32 1.0, %v2922
      %v2924 = vrcp.pop %v862
      %v2925 = vmul.f32 %v862, %v2924
      %v2926 = vsub.f32 1.0, %v2925
      %v2927 = vmul.f32 %v2924, %v2926
      %v2928 = vadd.f32 %v2924, %v2927
      %vm2929 = vweird.f32 %v862
      %vm2930 = vweird.f32 %v2924
      %vm2931 = vmor %vm2929, %vm2930
      %v2932 = vsel %vm2931, %v2924, %v2928
      %v2933 = vand.u32 2147483647, %v862
      %vm2934 = vcmp.eq.f32.partialorder %v2933, 8.507059e+37
      %v2935 = vand.u32 %v862, 2147483648
      %v2936 = vor.u32 1.1754944e-38, %v2935
      %v2937 = vsel %vm2934, %v2936, %v2932
      %v2938 = vmul.f32 1.0, %v2937
      %v2939 = vrcp.pop %v863
      %v2940 = vmul.f32 %v863, %v2939
      %v2941 = vsub.f32 1.0, %v2940
      %v2942 = vmul.f32 %v2939, %v2941
      %v2943 = vadd.f32 %v2939, %v2942
      %vm2944 = vweird.f32 %v863
      %vm2945 = vweird.f32 %v2939
      %vm2946 = vmor %vm2944, %vm2945
      %v2947 = vsel %vm2946, %v2939, %v2943
      %v2948 = vand.u32 2147483647, %v863
      %vm2949 = vcmp.eq.f32.partialorder %v2948, 8.507059e+37
      %v2950 = vand.u32 %v863, 2147483648
      %v2951 = vor.u32 1.1754944e-38, %v2950
      %v2952 = vsel %vm2949, %v2951, %v2947
      %v2953 = vmul.f32 1.0, %v2952
      %v2954 = vrcp.pop %v864
      %v2955 = vmul.f32 %v864, %v2954
      %v2956 = vsub.f32 1.0, %v2955
      %v2957 = vmul.f32 %v2954, %v2956
      %v2958 = vadd.f32 %v2954, %v2957
      %vm2959 = vweird.f32 %v864
      %vm2960 = vweird.f32 %v2954
      %vm2961 = vmor %vm2959, %vm2960
      %v2962 = vsel %vm2961, %v2954, %v2958
      %v2963 = vand.u32 2147483647, %v864
      %vm2964 = vcmp.eq.f32.partialorder %v2963, 8.507059e+37
      %v2965 = vand.u32 %v864, 2147483648
      %v2966 = vor.u32 1.1754944e-38, %v2965
      %v2967 = vsel %vm2964, %v2966, %v2962
      %v2968 = vmul.f32 1.0, %v2967
      %v2969 = vrcp.pop %v865
      %v2970 = vmul.f32 %v865, %v2969
      %v2971 = vsub.f32 1.0, %v2970
      %v2972 = vmul.f32 %v2969, %v2971
      %v2973 = vadd.f32 %v2969, %v2972
      %vm2974 = vweird.f32 %v865
      %vm2975 = vweird.f32 %v2969
      %vm2976 = vmor %vm2974, %vm2975
      %v2977 = vsel %vm2976, %v2969, %v2973
      %v2978 = vand.u32 2147483647, %v865
      %vm2979 = vcmp.eq.f32.partialorder %v2978, 8.507059e+37
      %v2980 = vand.u32 %v865, 2147483648
      %v2981 = vor.u32 1.1754944e-38, %v2980
      %v2982 = vsel %vm2979, %v2981, %v2977
      %v2983 = vmul.f32 1.0, %v2982
      %v2984 = vrcp.pop %v866
      %v2985 = vmul.f32 %v866, %v2984
      %v2986 = vsub.f32 1.0, %v2985
      %v2987 = vmul.f32 %v2984, %v2986
      %v2988 = vadd.f32 %v2984, %v2987
      %vm2989 = vweird.f32 %v866
      %vm2990 = vweird.f32 %v2984
      %vm2991 = vmor %vm2989, %vm2990
      %v2992 = vsel %vm2991, %v2984, %v2988
      %v2993 = vand.u32 2147483647, %v866
      %vm2994 = vcmp.eq.f32.partialorder %v2993, 8.507059e+37
      %v2995 = vand.u32 %v866, 2147483648
      %v2996 = vor.u32 1.1754944e-38, %v2995
      %v2997 = vsel %vm2994, %v2996, %v2992
      %v2998 = vmul.f32 1.0, %v2997
      %v2999 = vrcp.pop %v867
      %v3000 = vmul.f32 %v867, %v2999
      %v3001 = vsub.f32 1.0, %v3000
      %v3002 = vmul.f32 %v2999, %v3001
      %v3003 = vadd.f32 %v2999, %v3002
      %vm3004 = vweird.f32 %v867
      %vm3005 = vweird.f32 %v2999
      %vm3006 = vmor %vm3004, %vm3005
      %v3007 = vsel %vm3006, %v2999, %v3003
      %v3008 = vand.u32 2147483647, %v867
      %vm3009 = vcmp.eq.f32.partialorder %v3008, 8.507059e+37
      %v3010 = vand.u32 %v867, 2147483648
      %v3011 = vor.u32 1.1754944e-38, %v3010
      %v3012 = vsel %vm3009, %v3011, %v3007
      %v3013 = vmul.f32 1.0, %v3012
      %v3014 = vrcp.pop %v868
      %v3015 = vmul.f32 %v868, %v3014
      %v3016 = vsub.f32 1.0, %v3015
      %v3017 = vmul.f32 %v3014, %v3016
      %v3018 = vadd.f32 %v3014, %v3017
      %vm3019 = vweird.f32 %v868
      %vm3020 = vweird.f32 %v3014
      %vm3021 = vmor %vm3019, %vm3020
      %v3022 = vsel %vm3021, %v3014, %v3018
      %v3023 = vand.u32 2147483647, %v868
      %vm3024 = vcmp.eq.f32.partialorder %v3023, 8.507059e+37
      %v3025 = vand.u32 %v868, 2147483648
      %v3026 = vor.u32 1.1754944e-38, %v3025
      %v3027 = vsel %vm3024, %v3026, %v3022
      %v3028 = vmul.f32 1.0, %v3027
      %v3029 = vld [vmem:[%s139] sm:$0xff]
      %v3030 = vld [vmem:[%s139 + $0x8] sm:$0xff]
      %v3031 = vld [vmem:[%s139 + $0x10] sm:$0xff]
      %v3032 = vld [vmem:[%s139 + $0x18] sm:$0xff]
      %v3033 = vld [vmem:[%s139 + $0x20] sm:$0xff]
      %v3034 = vld [vmem:[%s139 + $0x28] sm:$0xff]
      %v3035 = vld [vmem:[%s139 + $0x30] sm:$0xff]
      %v3036 = vld [vmem:[%s139 + $0x38] sm:$0xff]
      %v3037 = vld [vmem:[%s139 + $0x40] sm:$0xff]
      %v3038 = vld [vmem:[%s139 + $0x48] sm:$0xff]
      %v3039 = vld [vmem:[%s139 + $0x50] sm:$0xff]
      %v3040 = vld [vmem:[%s139 + $0x58] sm:$0xff]
      %v3041 = vld [vmem:[%s139 + $0x60] sm:$0xff]
      %v3042 = vld [vmem:[%s139 + $0x68] sm:$0xff]
      %v3043 = vld [vmem:[%s139 + $0x70] sm:$0xff]
      %v3044 = vld [vmem:[%s139 + $0x78] sm:$0xff]
      %v3045 = vld [vmem:[%s139 + $0x80] sm:$0xff]
      %v3046 = vld [vmem:[%s139 + $0x88] sm:$0xff]
      %v3047 = vld [vmem:[%s139 + $0x90] sm:$0xff]
      %v3048 = vld [vmem:[%s139 + $0x98] sm:$0xff]
      %v3049 = vld [vmem:[%s139 + $0xa0] sm:$0xff]
      %v3050 = vld [vmem:[%s139 + $0xa8] sm:$0xff]
      %v3051 = vld [vmem:[%s139 + $0xb0] sm:$0xff]
      %v3052 = vld [vmem:[%s139 + $0xb8] sm:$0xff]
      %v3053 = vld [vmem:[%s139 + $0xc0] sm:$0xff]
      %v3054 = vld [vmem:[%s139 + $0xc8] sm:$0xff]
      %v3055 = vld [vmem:[%s139 + $0xd0] sm:$0xff]
      %v3056 = vld [vmem:[%s139 + $0xd8] sm:$0xff]
      %v3057 = vld [vmem:[%s139 + $0xe0] sm:$0xff]
      %v3058 = vld [vmem:[%s139 + $0xe8] sm:$0xff]
      %v3059 = vld [vmem:[%s139 + $0xf0] sm:$0xff]
      %v3060 = vld [vmem:[%s139 + $0xf8] sm:$0xff]
      %v3061 = vld [vmem:[%s139 + $0x100] sm:$0xff]
      %v3062 = vld [vmem:[%s139 + $0x108] sm:$0xff]
      %v3063 = vld [vmem:[%s139 + $0x110] sm:$0xff]
      %v3064 = vld [vmem:[%s139 + $0x118] sm:$0xff]
      %v3065 = vld [vmem:[%s139 + $0x120] sm:$0xff]
      %v3066 = vld [vmem:[%s139 + $0x128] sm:$0xff]
      %v3067 = vld [vmem:[%s139 + $0x130] sm:$0xff]
      %v3068 = vld [vmem:[%s139 + $0x138] sm:$0xff]
      %v3069 = vld [vmem:[%s139 + $0x140] sm:$0xff]
      %v3070 = vld [vmem:[%s139 + $0x148] sm:$0xff]
      %v3071 = vld [vmem:[%s139 + $0x150] sm:$0xff]
      %v3072 = vld [vmem:[%s139 + $0x158] sm:$0xff]
      %v3073 = vld [vmem:[%s139 + $0x160] sm:$0xff]
      %v3074 = vld [vmem:[%s139 + $0x168] sm:$0xff]
      %v3075 = vld [vmem:[%s139 + $0x170] sm:$0xff]
      %v3076 = vld [vmem:[%s139 + $0x178] sm:$0xff]
      %v3077 = vld [vmem:[%s139 + $0x180] sm:$0xff]
      %v3078 = vld [vmem:[%s139 + $0x188] sm:$0xff]
      %v3079 = vld [vmem:[%s139 + $0x190] sm:$0xff]
      %v3080 = vld [vmem:[%s139 + $0x198] sm:$0xff]
      %v3081 = vld [vmem:[%s139 + $0x1a0] sm:$0xff]
      %v3082 = vld [vmem:[%s139 + $0x1a8] sm:$0xff]
      %v3083 = vld [vmem:[%s139 + $0x1b0] sm:$0xff]
      %v3084 = vld [vmem:[%s139 + $0x1b8] sm:$0xff]
      %v3085 = vld [vmem:[%s139 + $0x1c0] sm:$0xff]
      %v3086 = vld [vmem:[%s139 + $0x1c8] sm:$0xff]
      %v3087 = vld [vmem:[%s139 + $0x1d0] sm:$0xff]
      %v3088 = vld [vmem:[%s139 + $0x1d8] sm:$0xff]
      %v3089 = vld [vmem:[%s139 + $0x1e0] sm:$0xff]
      %v3090 = vld [vmem:[%s139 + $0x1e8] sm:$0xff]
      %v3091 = vld [vmem:[%s139 + $0x1f0] sm:$0xff]
      %v3092 = vld [vmem:[%s139 + $0x1f8] sm:$0xff]
      %v3093 = vld [vmem:[%s139 + $0x200] sm:$0xff]
      %v3094 = vld [vmem:[%s139 + $0x208] sm:$0xff]
      %v3095 = vld [vmem:[%s139 + $0x210] sm:$0xff]
      %v3096 = vld [vmem:[%s139 + $0x218] sm:$0xff]
      %v3097 = vld [vmem:[%s139 + $0x220] sm:$0xff]
      %v3098 = vld [vmem:[%s139 + $0x228] sm:$0xff]
      %v3099 = vld [vmem:[%s139 + $0x230] sm:$0xff]
      %v3100 = vld [vmem:[%s139 + $0x238] sm:$0xff]
      %v3101 = vld [vmem:[%s139 + $0x240] sm:$0xff]
      %v3102 = vld [vmem:[%s139 + $0x248] sm:$0xff]
      %v3103 = vld [vmem:[%s139 + $0x250] sm:$0xff]
      %v3104 = vld [vmem:[%s139 + $0x258] sm:$0xff]
      %v3105 = vld [vmem:[%s139 + $0x260] sm:$0xff]
      %v3106 = vld [vmem:[%s139 + $0x268] sm:$0xff]
      %v3107 = vld [vmem:[%s139 + $0x270] sm:$0xff]
      %v3108 = vld [vmem:[%s139 + $0x278] sm:$0xff]
      %v3109 = vld [vmem:[%s139 + $0x280] sm:$0xff]
      %v3110 = vld [vmem:[%s139 + $0x288] sm:$0xff]
      %v3111 = vld [vmem:[%s139 + $0x290] sm:$0xff]
      %v3112 = vld [vmem:[%s139 + $0x298] sm:$0xff]
      %v3113 = vld [vmem:[%s139 + $0x2a0] sm:$0xff]
      %v3114 = vld [vmem:[%s139 + $0x2a8] sm:$0xff]
      %v3115 = vld [vmem:[%s139 + $0x2b0] sm:$0xff]
      %v3116 = vld [vmem:[%s139 + $0x2b8] sm:$0xff]
      %v3117 = vld [vmem:[%s139 + $0x2c0] sm:$0xff]
      %v3118 = vld [vmem:[%s139 + $0x2c8] sm:$0xff]
      %v3119 = vld [vmem:[%s139 + $0x2d0] sm:$0xff]
      %v3120 = vld [vmem:[%s139 + $0x2d8] sm:$0xff]
      %v3121 = vld [vmem:[%s139 + $0x2e0] sm:$0xff]
      %v3122 = vld [vmem:[%s139 + $0x2e8] sm:$0xff]
      %v3123 = vld [vmem:[%s139 + $0x2f0] sm:$0xff]
      %v3124 = vld [vmem:[%s139 + $0x2f8] sm:$0xff]
      %v3125 = vld [vmem:[%s139 + $0x300] sm:$0xff]
      %v3126 = vld [vmem:[%s139 + $0x308] sm:$0xff]
      %v3127 = vld [vmem:[%s139 + $0x310] sm:$0xff]
      %v3128 = vld [vmem:[%s139 + $0x318] sm:$0xff]
      %v3129 = vld [vmem:[%s139 + $0x320] sm:$0xff]
      %v3130 = vld [vmem:[%s139 + $0x328] sm:$0xff]
      %v3131 = vld [vmem:[%s139 + $0x330] sm:$0xff]
      %v3132 = vld [vmem:[%s139 + $0x338] sm:$0xff]
      %v3133 = vld [vmem:[%s139 + $0x340] sm:$0xff]
      %v3134 = vld [vmem:[%s139 + $0x348] sm:$0xff]
      %v3135 = vld [vmem:[%s139 + $0x350] sm:$0xff]
      %v3136 = vld [vmem:[%s139 + $0x358] sm:$0xff]
      %v3137 = vld [vmem:[%s139 + $0x360] sm:$0xff]
      %v3138 = vld [vmem:[%s139 + $0x368] sm:$0xff]
      %v3139 = vld [vmem:[%s139 + $0x370] sm:$0xff]
      %v3140 = vld [vmem:[%s139 + $0x378] sm:$0xff]
      %v3141 = vld [vmem:[%s139 + $0x380] sm:$0xff]
      %v3142 = vld [vmem:[%s139 + $0x388] sm:$0xff]
      %v3143 = vld [vmem:[%s139 + $0x390] sm:$0xff]
      %v3144 = vld [vmem:[%s139 + $0x398] sm:$0xff]
      %v3145 = vld [vmem:[%s139 + $0x3a0] sm:$0xff]
      %v3146 = vld [vmem:[%s139 + $0x3a8] sm:$0xff]
      %v3147 = vld [vmem:[%s139 + $0x3b0] sm:$0xff]
      %v3148 = vld [vmem:[%s139 + $0x3b8] sm:$0xff]
      %v3149 = vld [vmem:[%s139 + $0x3c0] sm:$0xff]
      %v3150 = vld [vmem:[%s139 + $0x3c8] sm:$0xff]
      %v3151 = vld [vmem:[%s139 + $0x3d0] sm:$0xff]
      %v3152 = vld [vmem:[%s139 + $0x3d8] sm:$0xff]
      %v3153 = vld [vmem:[%s139 + $0x3e0] sm:$0xff]
      %v3154 = vld [vmem:[%s139 + $0x3e8] sm:$0xff]
      %v3155 = vld [vmem:[%s139 + $0x3f0] sm:$0xff]
      %v3156 = vld [vmem:[%s139 + $0x3f8] sm:$0xff]
      %v3157 = vld [vmem:[%s139 + $0x400] sm:$0xff]
      %v3158 = vld [vmem:[%s139 + $0x408] sm:$0xff]
      %v3159 = vld [vmem:[%s139 + $0x410] sm:$0xff]
      %v3160 = vld [vmem:[%s139 + $0x418] sm:$0xff]
      %v3161 = vld [vmem:[%s139 + $0x420] sm:$0xff]
      %v3162 = vld [vmem:[%s139 + $0x428] sm:$0xff]
      %v3163 = vld [vmem:[%s139 + $0x430] sm:$0xff]
      %v3164 = vld [vmem:[%s139 + $0x438] sm:$0xff]
      %v3165 = vld [vmem:[%s139 + $0x440] sm:$0xff]
      %v3166 = vld [vmem:[%s139 + $0x448] sm:$0xff]
      %v3167 = vld [vmem:[%s139 + $0x450] sm:$0xff]
      %v3168 = vld [vmem:[%s139 + $0x458] sm:$0xff]
      %v3169 = vld [vmem:[%s139 + $0x460] sm:$0xff]
      %v3170 = vld [vmem:[%s139 + $0x468] sm:$0xff]
      %v3171 = vld [vmem:[%s139 + $0x470] sm:$0xff]
      %v3172 = vld [vmem:[%s139 + $0x478] sm:$0xff]
      %3174 = vset.pattern.permute.xlu0 0
      %3175 = vperm.xlu0 %3174, %v883
      %v3176 = vpop.permute.xlu0 %3175
      %3179 = vset.pattern.permute.xlu0 0
      %3180 = vperm.xlu0 %3179, %v898
      %v3181 = vpop.permute.xlu0 %3180
      %3184 = vset.pattern.permute.xlu0 0
      %3185 = vperm.xlu0 %3184, %v913
      %v3186 = vpop.permute.xlu0 %3185
      %3189 = vset.pattern.permute.xlu0 0
      %3190 = vperm.xlu0 %3189, %v928
      %v3191 = vpop.permute.xlu0 %3190
      %3194 = vset.pattern.permute.xlu0 0
      %3195 = vperm.xlu0 %3194, %v943
      %v3196 = vpop.permute.xlu0 %3195
      %3199 = vset.pattern.permute.xlu0 0
      %3200 = vperm.xlu0 %3199, %v958
      %v3201 = vpop.permute.xlu0 %3200
      %3204 = vset.pattern.permute.xlu0 0
      %3205 = vperm.xlu0 %3204, %v973
      %v3206 = vpop.permute.xlu0 %3205
      %3209 = vset.pattern.permute.xlu0 0
      %3210 = vperm.xlu0 %3209, %v988
      %v3211 = vpop.permute.xlu0 %3210
      %3214 = vset.pattern.permute.xlu0 0
      %3215 = vperm.xlu0 %3214, %v1003
      %v3216 = vpop.permute.xlu0 %3215
      %3219 = vset.pattern.permute.xlu0 0
      %3220 = vperm.xlu0 %3219, %v1018
      %v3221 = vpop.permute.xlu0 %3220
      %3224 = vset.pattern.permute.xlu0 0
      %3225 = vperm.xlu0 %3224, %v1033
      %v3226 = vpop.permute.xlu0 %3225
      %3229 = vset.pattern.permute.xlu0 0
      %3230 = vperm.xlu0 %3229, %v1048
      %v3231 = vpop.permute.xlu0 %3230
      %3234 = vset.pattern.permute.xlu0 0
      %3235 = vperm.xlu0 %3234, %v1063
      %v3236 = vpop.permute.xlu0 %3235
      %3239 = vset.pattern.permute.xlu0 0
      %3240 = vperm.xlu0 %3239, %v1078
      %v3241 = vpop.permute.xlu0 %3240
      %3244 = vset.pattern.permute.xlu0 0
      %3245 = vperm.xlu0 %3244, %v1093
      %v3246 = vpop.permute.xlu0 %3245
      %3249 = vset.pattern.permute.xlu0 0
      %3250 = vperm.xlu0 %3249, %v1108
      %v3251 = vpop.permute.xlu0 %3250
      %3254 = vset.pattern.permute.xlu0 0
      %3255 = vperm.xlu0 %3254, %v1123
      %v3256 = vpop.permute.xlu0 %3255
      %3259 = vset.pattern.permute.xlu0 0
      %3260 = vperm.xlu0 %3259, %v1138
      %v3261 = vpop.permute.xlu0 %3260
      %3264 = vset.pattern.permute.xlu0 0
      %3265 = vperm.xlu0 %3264, %v1153
      %v3266 = vpop.permute.xlu0 %3265
      %3269 = vset.pattern.permute.xlu0 0
      %3270 = vperm.xlu0 %3269, %v1168
      %v3271 = vpop.permute.xlu0 %3270
      %3274 = vset.pattern.permute.xlu0 0
      %3275 = vperm.xlu0 %3274, %v1183
      %v3276 = vpop.permute.xlu0 %3275
      %3279 = vset.pattern.permute.xlu0 0
      %3280 = vperm.xlu0 %3279, %v1198
      %v3281 = vpop.permute.xlu0 %3280
      %3284 = vset.pattern.permute.xlu0 0
      %3285 = vperm.xlu0 %3284, %v1213
      %v3286 = vpop.permute.xlu0 %3285
      %3289 = vset.pattern.permute.xlu0 0
      %3290 = vperm.xlu0 %3289, %v1228
      %v3291 = vpop.permute.xlu0 %3290
      %3294 = vset.pattern.permute.xlu0 0
      %3295 = vperm.xlu0 %3294, %v1243
      %v3296 = vpop.permute.xlu0 %3295
      %3299 = vset.pattern.permute.xlu0 0
      %3300 = vperm.xlu0 %3299, %v1258
      %v3301 = vpop.permute.xlu0 %3300
      %3304 = vset.pattern.permute.xlu0 0
      %3305 = vperm.xlu0 %3304, %v1273
      %v3306 = vpop.permute.xlu0 %3305
      %3309 = vset.pattern.permute.xlu0 0
      %3310 = vperm.xlu0 %3309, %v1288
      %v3311 = vpop.permute.xlu0 %3310
      %3314 = vset.pattern.permute.xlu0 0
      %3315 = vperm.xlu0 %3314, %v1303
      %v3316 = vpop.permute.xlu0 %3315
      %3319 = vset.pattern.permute.xlu0 0
      %3320 = vperm.xlu0 %3319, %v1318
      %v3321 = vpop.permute.xlu0 %3320
      %3324 = vset.pattern.permute.xlu0 0
      %3325 = vperm.xlu0 %3324, %v1333
      %v3326 = vpop.permute.xlu0 %3325
      %3329 = vset.pattern.permute.xlu0 0
      %3330 = vperm.xlu0 %3329, %v1348
      %v3331 = vpop.permute.xlu0 %3330
      %3334 = vset.pattern.permute.xlu0 0
      %3335 = vperm.xlu0 %3334, %v1363
      %v3336 = vpop.permute.xlu0 %3335
      %3339 = vset.pattern.permute.xlu0 0
      %3340 = vperm.xlu0 %3339, %v1378
      %v3341 = vpop.permute.xlu0 %3340
      %3344 = vset.pattern.permute.xlu0 0
      %3345 = vperm.xlu0 %3344, %v1393
      %v3346 = vpop.permute.xlu0 %3345
      %3349 = vset.pattern.permute.xlu0 0
      %3350 = vperm.xlu0 %3349, %v1408
      %v3351 = vpop.permute.xlu0 %3350
      %3354 = vset.pattern.permute.xlu0 0
      %3355 = vperm.xlu0 %3354, %v1423
      %v3356 = vpop.permute.xlu0 %3355
      %3359 = vset.pattern.permute.xlu0 0
      %3360 = vperm.xlu0 %3359, %v1438
      %v3361 = vpop.permute.xlu0 %3360
      %3364 = vset.pattern.permute.xlu0 0
      %3365 = vperm.xlu0 %3364, %v1453
      %v3366 = vpop.permute.xlu0 %3365
      %3369 = vset.pattern.permute.xlu0 0
      %3370 = vperm.xlu0 %3369, %v1468
      %v3371 = vpop.permute.xlu0 %3370
      %3374 = vset.pattern.permute.xlu0 0
      %3375 = vperm.xlu0 %3374, %v1483
      %v3376 = vpop.permute.xlu0 %3375
      %3379 = vset.pattern.permute.xlu0 0
      %3380 = vperm.xlu0 %3379, %v1498
      %v3381 = vpop.permute.xlu0 %3380
      %3384 = vset.pattern.permute.xlu0 0
      %3385 = vperm.xlu0 %3384, %v1513
      %v3386 = vpop.permute.xlu0 %3385
      %3389 = vset.pattern.permute.xlu0 0
      %3390 = vperm.xlu0 %3389, %v1528
      %v3391 = vpop.permute.xlu0 %3390
      %3394 = vset.pattern.permute.xlu0 0
      %3395 = vperm.xlu0 %3394, %v1543
      %v3396 = vpop.permute.xlu0 %3395
      %3399 = vset.pattern.permute.xlu0 0
      %3400 = vperm.xlu0 %3399, %v1558
      %v3401 = vpop.permute.xlu0 %3400
      %3404 = vset.pattern.permute.xlu0 0
      %3405 = vperm.xlu0 %3404, %v1573
      %v3406 = vpop.permute.xlu0 %3405
      %3409 = vset.pattern.permute.xlu0 0
      %3410 = vperm.xlu0 %3409, %v1588
      %v3411 = vpop.permute.xlu0 %3410
      %3414 = vset.pattern.permute.xlu0 0
      %3415 = vperm.xlu0 %3414, %v1603
      %v3416 = vpop.permute.xlu0 %3415
      %3419 = vset.pattern.permute.xlu0 0
      %3420 = vperm.xlu0 %3419, %v1618
      %v3421 = vpop.permute.xlu0 %3420
      %3424 = vset.pattern.permute.xlu0 0
      %3425 = vperm.xlu0 %3424, %v1633
      %v3426 = vpop.permute.xlu0 %3425
      %3429 = vset.pattern.permute.xlu0 0
      %3430 = vperm.xlu0 %3429, %v1648
      %v3431 = vpop.permute.xlu0 %3430
      %3434 = vset.pattern.permute.xlu0 0
      %3435 = vperm.xlu0 %3434, %v1663
      %v3436 = vpop.permute.xlu0 %3435
      %3439 = vset.pattern.permute.xlu0 0
      %3440 = vperm.xlu0 %3439, %v1678
      %v3441 = vpop.permute.xlu0 %3440
      %3444 = vset.pattern.permute.xlu0 0
      %3445 = vperm.xlu0 %3444, %v1693
      %v3446 = vpop.permute.xlu0 %3445
      %3449 = vset.pattern.permute.xlu0 0
      %3450 = vperm.xlu0 %3449, %v1708
      %v3451 = vpop.permute.xlu0 %3450
      %3454 = vset.pattern.permute.xlu0 0
      %3455 = vperm.xlu0 %3454, %v1723
      %v3456 = vpop.permute.xlu0 %3455
      %3459 = vset.pattern.permute.xlu0 0
      %3460 = vperm.xlu0 %3459, %v1738
      %v3461 = vpop.permute.xlu0 %3460
      %3464 = vset.pattern.permute.xlu0 0
      %3465 = vperm.xlu0 %3464, %v1753
      %v3466 = vpop.permute.xlu0 %3465
      %3469 = vset.pattern.permute.xlu0 0
      %3470 = vperm.xlu0 %3469, %v1768
      %v3471 = vpop.permute.xlu0 %3470
      %3474 = vset.pattern.permute.xlu0 0
      %3475 = vperm.xlu0 %3474, %v1783
      %v3476 = vpop.permute.xlu0 %3475
      %3479 = vset.pattern.permute.xlu0 0
      %3480 = vperm.xlu0 %3479, %v1798
      %v3481 = vpop.permute.xlu0 %3480
      %3484 = vset.pattern.permute.xlu0 0
      %3485 = vperm.xlu0 %3484, %v1813
      %v3486 = vpop.permute.xlu0 %3485
      %3489 = vset.pattern.permute.xlu0 0
      %3490 = vperm.xlu0 %3489, %v1828
      %v3491 = vpop.permute.xlu0 %3490
      %3494 = vset.pattern.permute.xlu0 0
      %3495 = vperm.xlu0 %3494, %v1843
      %v3496 = vpop.permute.xlu0 %3495
      %3499 = vset.pattern.permute.xlu0 0
      %3500 = vperm.xlu0 %3499, %v1858
      %v3501 = vpop.permute.xlu0 %3500
      %3504 = vset.pattern.permute.xlu0 0
      %3505 = vperm.xlu0 %3504, %v1873
      %v3506 = vpop.permute.xlu0 %3505
      %3509 = vset.pattern.permute.xlu0 0
      %3510 = vperm.xlu0 %3509, %v1888
      %v3511 = vpop.permute.xlu0 %3510
      %3514 = vset.pattern.permute.xlu0 0
      %3515 = vperm.xlu0 %3514, %v1903
      %v3516 = vpop.permute.xlu0 %3515
      %3519 = vset.pattern.permute.xlu0 0
      %3520 = vperm.xlu0 %3519, %v1918
      %v3521 = vpop.permute.xlu0 %3520
      %3524 = vset.pattern.permute.xlu0 0
      %3525 = vperm.xlu0 %3524, %v1933
      %v3526 = vpop.permute.xlu0 %3525
      %3529 = vset.pattern.permute.xlu0 0
      %3530 = vperm.xlu0 %3529, %v1948
      %v3531 = vpop.permute.xlu0 %3530
      %3534 = vset.pattern.permute.xlu0 0
      %3535 = vperm.xlu0 %3534, %v1963
      %v3536 = vpop.permute.xlu0 %3535
      %3539 = vset.pattern.permute.xlu0 0
      %3540 = vperm.xlu0 %3539, %v1978
      %v3541 = vpop.permute.xlu0 %3540
      %3544 = vset.pattern.permute.xlu0 0
      %3545 = vperm.xlu0 %3544, %v1993
      %v3546 = vpop.permute.xlu0 %3545
      %3549 = vset.pattern.permute.xlu0 0
      %3550 = vperm.xlu0 %3549, %v2008
      %v3551 = vpop.permute.xlu0 %3550
      %3554 = vset.pattern.permute.xlu0 0
      %3555 = vperm.xlu0 %3554, %v2023
      %v3556 = vpop.permute.xlu0 %3555
      %3559 = vset.pattern.permute.xlu0 0
      %3560 = vperm.xlu0 %3559, %v2038
      %v3561 = vpop.permute.xlu0 %3560
      %3564 = vset.pattern.permute.xlu0 0
      %3565 = vperm.xlu0 %3564, %v2053
      %v3566 = vpop.permute.xlu0 %3565
      %3569 = vset.pattern.permute.xlu0 0
      %3570 = vperm.xlu0 %3569, %v2068
      %v3571 = vpop.permute.xlu0 %3570
      %3574 = vset.pattern.permute.xlu0 0
      %3575 = vperm.xlu0 %3574, %v2083
      %v3576 = vpop.permute.xlu0 %3575
      %3579 = vset.pattern.permute.xlu0 0
      %3580 = vperm.xlu0 %3579, %v2098
      %v3581 = vpop.permute.xlu0 %3580
      %3584 = vset.pattern.permute.xlu0 0
      %3585 = vperm.xlu0 %3584, %v2113
      %v3586 = vpop.permute.xlu0 %3585
      %3589 = vset.pattern.permute.xlu0 0
      %3590 = vperm.xlu0 %3589, %v2128
      %v3591 = vpop.permute.xlu0 %3590
      %3594 = vset.pattern.permute.xlu0 0
      %3595 = vperm.xlu0 %3594, %v2143
      %v3596 = vpop.permute.xlu0 %3595
      %3599 = vset.pattern.permute.xlu0 0
      %3600 = vperm.xlu0 %3599, %v2158
      %v3601 = vpop.permute.xlu0 %3600
      %3604 = vset.pattern.permute.xlu0 0
      %3605 = vperm.xlu0 %3604, %v2173
      %v3606 = vpop.permute.xlu0 %3605
      %3609 = vset.pattern.permute.xlu0 0
      %3610 = vperm.xlu0 %3609, %v2188
      %v3611 = vpop.permute.xlu0 %3610
      %3614 = vset.pattern.permute.xlu0 0
      %3615 = vperm.xlu0 %3614, %v2203
      %v3616 = vpop.permute.xlu0 %3615
      %3619 = vset.pattern.permute.xlu0 0
      %3620 = vperm.xlu0 %3619, %v2218
      %v3621 = vpop.permute.xlu0 %3620
      %3624 = vset.pattern.permute.xlu0 0
      %3625 = vperm.xlu0 %3624, %v2233
      %v3626 = vpop.permute.xlu0 %3625
      %3629 = vset.pattern.permute.xlu0 0
      %3630 = vperm.xlu0 %3629, %v2248
      %v3631 = vpop.permute.xlu0 %3630
      %3634 = vset.pattern.permute.xlu0 0
      %3635 = vperm.xlu0 %3634, %v2263
      %v3636 = vpop.permute.xlu0 %3635
      %3639 = vset.pattern.permute.xlu0 0
      %3640 = vperm.xlu0 %3639, %v2278
      %v3641 = vpop.permute.xlu0 %3640
      %3644 = vset.pattern.permute.xlu0 0
      %3645 = vperm.xlu0 %3644, %v2293
      %v3646 = vpop.permute.xlu0 %3645
      %3649 = vset.pattern.permute.xlu0 0
      %3650 = vperm.xlu0 %3649, %v2308
      %v3651 = vpop.permute.xlu0 %3650
      %3654 = vset.pattern.permute.xlu0 0
      %3655 = vperm.xlu0 %3654, %v2323
      %v3656 = vpop.permute.xlu0 %3655
      %3659 = vset.pattern.permute.xlu0 0
      %3660 = vperm.xlu0 %3659, %v2338
      %v3661 = vpop.permute.xlu0 %3660
      %3664 = vset.pattern.permute.xlu0 0
      %3665 = vperm.xlu0 %3664, %v2353
      %v3666 = vpop.permute.xlu0 %3665
      %3669 = vset.pattern.permute.xlu0 0
      %3670 = vperm.xlu0 %3669, %v2368
      %v3671 = vpop.permute.xlu0 %3670
      %3674 = vset.pattern.permute.xlu0 0
      %3675 = vperm.xlu0 %3674, %v2383
      %v3676 = vpop.permute.xlu0 %3675
      %3679 = vset.pattern.permute.xlu0 0
      %3680 = vperm.xlu0 %3679, %v2398
      %v3681 = vpop.permute.xlu0 %3680
      %3684 = vset.pattern.permute.xlu0 0
      %3685 = vperm.xlu0 %3684, %v2413
      %v3686 = vpop.permute.xlu0 %3685
      %3689 = vset.pattern.permute.xlu0 0
      %3690 = vperm.xlu0 %3689, %v2428
      %v3691 = vpop.permute.xlu0 %3690
      %3694 = vset.pattern.permute.xlu0 0
      %3695 = vperm.xlu0 %3694, %v2443
      %v3696 = vpop.permute.xlu0 %3695
      %3699 = vset.pattern.permute.xlu0 0
      %3700 = vperm.xlu0 %3699, %v2458
      %v3701 = vpop.permute.xlu0 %3700
      %3704 = vset.pattern.permute.xlu0 0
      %3705 = vperm.xlu0 %3704, %v2473
      %v3706 = vpop.permute.xlu0 %3705
      %3709 = vset.pattern.permute.xlu0 0
      %3710 = vperm.xlu0 %3709, %v2488
      %v3711 = vpop.permute.xlu0 %3710
      %3714 = vset.pattern.permute.xlu0 0
      %3715 = vperm.xlu0 %3714, %v2503
      %v3716 = vpop.permute.xlu0 %3715
      %3719 = vset.pattern.permute.xlu0 0
      %3720 = vperm.xlu0 %3719, %v2518
      %v3721 = vpop.permute.xlu0 %3720
      %3724 = vset.pattern.permute.xlu0 0
      %3725 = vperm.xlu0 %3724, %v2533
      %v3726 = vpop.permute.xlu0 %3725
      %3729 = vset.pattern.permute.xlu0 0
      %3730 = vperm.xlu0 %3729, %v2548
      %v3731 = vpop.permute.xlu0 %3730
      %3734 = vset.pattern.permute.xlu0 0
      %3735 = vperm.xlu0 %3734, %v2563
      %v3736 = vpop.permute.xlu0 %3735
      %3739 = vset.pattern.permute.xlu0 0
      %3740 = vperm.xlu0 %3739, %v2578
      %v3741 = vpop.permute.xlu0 %3740
      %3744 = vset.pattern.permute.xlu0 0
      %3745 = vperm.xlu0 %3744, %v2593
      %v3746 = vpop.permute.xlu0 %3745
      %3749 = vset.pattern.permute.xlu0 0
      %3750 = vperm.xlu0 %3749, %v2608
      %v3751 = vpop.permute.xlu0 %3750
      %3754 = vset.pattern.permute.xlu0 0
      %3755 = vperm.xlu0 %3754, %v2623
      %v3756 = vpop.permute.xlu0 %3755
      %3759 = vset.pattern.permute.xlu0 0
      %3760 = vperm.xlu0 %3759, %v2638
      %v3761 = vpop.permute.xlu0 %3760
      %3764 = vset.pattern.permute.xlu0 0
      %3765 = vperm.xlu0 %3764, %v2653
      %v3766 = vpop.permute.xlu0 %3765
      %3769 = vset.pattern.permute.xlu0 0
      %3770 = vperm.xlu0 %3769, %v2668
      %v3771 = vpop.permute.xlu0 %3770
      %3774 = vset.pattern.permute.xlu0 0
      %3775 = vperm.xlu0 %3774, %v2683
      %v3776 = vpop.permute.xlu0 %3775
      %3779 = vset.pattern.permute.xlu0 0
      %3780 = vperm.xlu0 %3779, %v2698
      %v3781 = vpop.permute.xlu0 %3780
      %3784 = vset.pattern.permute.xlu0 0
      %3785 = vperm.xlu0 %3784, %v2713
      %v3786 = vpop.permute.xlu0 %3785
      %3789 = vset.pattern.permute.xlu0 0
      %3790 = vperm.xlu0 %3789, %v2728
      %v3791 = vpop.permute.xlu0 %3790
      %3794 = vset.pattern.permute.xlu0 0
      %3795 = vperm.xlu0 %3794, %v2743
      %v3796 = vpop.permute.xlu0 %3795
      %3799 = vset.pattern.permute.xlu0 0
      %3800 = vperm.xlu0 %3799, %v2758
      %v3801 = vpop.permute.xlu0 %3800
      %3804 = vset.pattern.permute.xlu0 0
      %3805 = vperm.xlu0 %3804, %v2773
      %v3806 = vpop.permute.xlu0 %3805
      %3809 = vset.pattern.permute.xlu0 0
      %3810 = vperm.xlu0 %3809, %v2788
      %v3811 = vpop.permute.xlu0 %3810
      %3814 = vset.pattern.permute.xlu0 0
      %3815 = vperm.xlu0 %3814, %v2803
      %v3816 = vpop.permute.xlu0 %3815
      %3819 = vset.pattern.permute.xlu0 0
      %3820 = vperm.xlu0 %3819, %v2818
      %v3821 = vpop.permute.xlu0 %3820
      %3824 = vset.pattern.permute.xlu0 0
      %3825 = vperm.xlu0 %3824, %v2833
      %v3826 = vpop.permute.xlu0 %3825
      %3829 = vset.pattern.permute.xlu0 0
      %3830 = vperm.xlu0 %3829, %v2848
      %v3831 = vpop.permute.xlu0 %3830
      %3834 = vset.pattern.permute.xlu0 0
      %3835 = vperm.xlu0 %3834, %v2863
      %v3836 = vpop.permute.xlu0 %3835
      %3839 = vset.pattern.permute.xlu0 0
      %3840 = vperm.xlu0 %3839, %v2878
      %v3841 = vpop.permute.xlu0 %3840
      %3844 = vset.pattern.permute.xlu0 0
      %3845 = vperm.xlu0 %3844, %v2893
      %v3846 = vpop.permute.xlu0 %3845
      %3849 = vset.pattern.permute.xlu0 0
      %3850 = vperm.xlu0 %3849, %v2908
      %v3851 = vpop.permute.xlu0 %3850
      %3854 = vset.pattern.permute.xlu0 0
      %3855 = vperm.xlu0 %3854, %v2923
      %v3856 = vpop.permute.xlu0 %3855
      %3859 = vset.pattern.permute.xlu0 0
      %3860 = vperm.xlu0 %3859, %v2938
      %v3861 = vpop.permute.xlu0 %3860
      %3864 = vset.pattern.permute.xlu0 0
      %3865 = vperm.xlu0 %3864, %v2953
      %v3866 = vpop.permute.xlu0 %3865
      %3869 = vset.pattern.permute.xlu0 0
      %3870 = vperm.xlu0 %3869, %v2968
      %v3871 = vpop.permute.xlu0 %3870
      %3874 = vset.pattern.permute.xlu0 0
      %3875 = vperm.xlu0 %3874, %v2983
      %v3876 = vpop.permute.xlu0 %3875
      %3879 = vset.pattern.permute.xlu0 0
      %3880 = vperm.xlu0 %3879, %v2998
      %v3881 = vpop.permute.xlu0 %3880
      %3884 = vset.pattern.permute.xlu0 0
      %3885 = vperm.xlu0 %3884, %v3013
      %v3886 = vpop.permute.xlu0 %3885
      %3889 = vset.pattern.permute.xlu0 0
      %3890 = vperm.xlu0 %3889, %v3028
      %v3891 = vpop.permute.xlu0 %3890
      %v3893 = vmul.f32 %v3029, %v3176
      %v3894 = vmul.f32 %v3030, %v3181
      %v3895 = vmul.f32 %v3031, %v3186
      %v3896 = vmul.f32 %v3032, %v3191
      %v3897 = vmul.f32 %v3033, %v3196
      %v3898 = vmul.f32 %v3034, %v3201
      %v3899 = vmul.f32 %v3035, %v3206
      %v3900 = vmul.f32 %v3036, %v3211
      %v3901 = vmul.f32 %v3037, %v3216
      %v3902 = vmul.f32 %v3038, %v3221
      %v3903 = vmul.f32 %v3039, %v3226
      %v3904 = vmul.f32 %v3040, %v3231
      %v3905 = vmul.f32 %v3041, %v3236
      %v3906 = vmul.f32 %v3042, %v3241
      %v3907 = vmul.f32 %v3043, %v3246
      %v3908 = vmul.f32 %v3044, %v3251
      %v3909 = vmul.f32 %v3045, %v3256
      %v3910 = vmul.f32 %v3046, %v3261
      %v3911 = vmul.f32 %v3047, %v3266
      %v3912 = vmul.f32 %v3048, %v3271
      %v3913 = vmul.f32 %v3049, %v3276
      %v3914 = vmul.f32 %v3050, %v3281
      %v3915 = vmul.f32 %v3051, %v3286
      %v3916 = vmul.f32 %v3052, %v3291
      %v3917 = vmul.f32 %v3053, %v3296
      %v3918 = vmul.f32 %v3054, %v3301
      %v3919 = vmul.f32 %v3055, %v3306
      %v3920 = vmul.f32 %v3056, %v3311
      %v3921 = vmul.f32 %v3057, %v3316
      %v3922 = vmul.f32 %v3058, %v3321
      %v3923 = vmul.f32 %v3059, %v3326
      %v3924 = vmul.f32 %v3060, %v3331
      %v3925 = vmul.f32 %v3061, %v3336
      %v3926 = vmul.f32 %v3062, %v3341
      %v3927 = vmul.f32 %v3063, %v3346
      %v3928 = vmul.f32 %v3064, %v3351
      %v3929 = vmul.f32 %v3065, %v3356
      %v3930 = vmul.f32 %v3066, %v3361
      %v3931 = vmul.f32 %v3067, %v3366
      %v3932 = vmul.f32 %v3068, %v3371
      %v3933 = vmul.f32 %v3069, %v3376
      %v3934 = vmul.f32 %v3070, %v3381
      %v3935 = vmul.f32 %v3071, %v3386
      %v3936 = vmul.f32 %v3072, %v3391
      %v3937 = vmul.f32 %v3073, %v3396
      %v3938 = vmul.f32 %v3074, %v3401
      %v3939 = vmul.f32 %v3075, %v3406
      %v3940 = vmul.f32 %v3076, %v3411
      %v3941 = vmul.f32 %v3077, %v3416
      %v3942 = vmul.f32 %v3078, %v3421
      %v3943 = vmul.f32 %v3079, %v3426
      %v3944 = vmul.f32 %v3080, %v3431
      %v3945 = vmul.f32 %v3081, %v3436
      %v3946 = vmul.f32 %v3082, %v3441
      %v3947 = vmul.f32 %v3083, %v3446
      %v3948 = vmul.f32 %v3084, %v3451
      %v3949 = vmul.f32 %v3085, %v3456
      %v3950 = vmul.f32 %v3086, %v3461
      %v3951 = vmul.f32 %v3087, %v3466
      %v3952 = vmul.f32 %v3088, %v3471
      %v3953 = vmul.f32 %v3089, %v3476
      %v3954 = vmul.f32 %v3090, %v3481
      %v3955 = vmul.f32 %v3091, %v3486
      %v3956 = vmul.f32 %v3092, %v3491
      %v3957 = vmul.f32 %v3093, %v3496
      %v3958 = vmul.f32 %v3094, %v3501
      %v3959 = vmul.f32 %v3095, %v3506
      %v3960 = vmul.f32 %v3096, %v3511
      %v3961 = vmul.f32 %v3097, %v3516
      %v3962 = vmul.f32 %v3098, %v3521
      %v3963 = vmul.f32 %v3099, %v3526
      %v3964 = vmul.f32 %v3100, %v3531
      %v3965 = vmul.f32 %v3101, %v3536
      %v3966 = vmul.f32 %v3102, %v3541
      %v3967 = vmul.f32 %v3103, %v3546
      %v3968 = vmul.f32 %v3104, %v3551
      %v3969 = vmul.f32 %v3105, %v3556
      %v3970 = vmul.f32 %v3106, %v3561
      %v3971 = vmul.f32 %v3107, %v3566
      %v3972 = vmul.f32 %v3108, %v3571
      %v3973 = vmul.f32 %v3109, %v3576
      %v3974 = vmul.f32 %v3110, %v3581
      %v3975 = vmul.f32 %v3111, %v3586
      %v3976 = vmul.f32 %v3112, %v3591
      %v3977 = vmul.f32 %v3113, %v3596
      %v3978 = vmul.f32 %v3114, %v3601
      %v3979 = vmul.f32 %v3115, %v3606
      %v3980 = vmul.f32 %v3116, %v3611
      %v3981 = vmul.f32 %v3117, %v3616
      %v3982 = vmul.f32 %v3118, %v3621
      %v3983 = vmul.f32 %v3119, %v3626
      %v3984 = vmul.f32 %v3120, %v3631
      %v3985 = vmul.f32 %v3121, %v3636
      %v3986 = vmul.f32 %v3122, %v3641
      %v3987 = vmul.f32 %v3123, %v3646
      %v3988 = vmul.f32 %v3124, %v3651
      %v3989 = vmul.f32 %v3125, %v3656
      %v3990 = vmul.f32 %v3126, %v3661
      %v3991 = vmul.f32 %v3127, %v3666
      %v3992 = vmul.f32 %v3128, %v3671
      %v3993 = vmul.f32 %v3129, %v3676
      %v3994 = vmul.f32 %v3130, %v3681
      %v3995 = vmul.f32 %v3131, %v3686
      %v3996 = vmul.f32 %v3132, %v3691
      %v3997 = vmul.f32 %v3133, %v3696
      %v3998 = vmul.f32 %v3134, %v3701
      %v3999 = vmul.f32 %v3135, %v3706
      %v4000 = vmul.f32 %v3136, %v3711
      %v4001 = vmul.f32 %v3137, %v3716
      %v4002 = vmul.f32 %v3138, %v3721
      %v4003 = vmul.f32 %v3139, %v3726
      %v4004 = vmul.f32 %v3140, %v3731
      %v4005 = vmul.f32 %v3141, %v3736
      %v4006 = vmul.f32 %v3142, %v3741
      %v4007 = vmul.f32 %v3143, %v3746
      %v4008 = vmul.f32 %v3144, %v3751
      %v4009 = vmul.f32 %v3145, %v3756
      %v4010 = vmul.f32 %v3146, %v3761
      %v4011 = vmul.f32 %v3147, %v3766
      %v4012 = vmul.f32 %v3148, %v3771
      %v4013 = vmul.f32 %v3149, %v3776
      %v4014 = vmul.f32 %v3150, %v3781
      %v4015 = vmul.f32 %v3151, %v3786
      %v4016 = vmul.f32 %v3152, %v3791
      %v4017 = vmul.f32 %v3153, %v3796
      %v4018 = vmul.f32 %v3154, %v3801
      %v4019 = vmul.f32 %v3155, %v3806
      %v4020 = vmul.f32 %v3156, %v3811
      %v4021 = vmul.f32 %v3157, %v3816
      %v4022 = vmul.f32 %v3158, %v3821
      %v4023 = vmul.f32 %v3159, %v3826
      %v4024 = vmul.f32 %v3160, %v3831
      %v4025 = vmul.f32 %v3161, %v3836
      %v4026 = vmul.f32 %v3162, %v3841
      %v4027 = vmul.f32 %v3163, %v3846
      %v4028 = vmul.f32 %v3164, %v3851
      %v4029 = vmul.f32 %v3165, %v3856
      %v4030 = vmul.f32 %v3166, %v3861
      %v4031 = vmul.f32 %v3167, %v3866
      %v4032 = vmul.f32 %v3168, %v3871
      %v4033 = vmul.f32 %v3169, %v3876
      %v4034 = vmul.f32 %v3170, %v3881
      %v4035 = vmul.f32 %v3171, %v3886
      %v4036 = vmul.f32 %v3172, %v3891
      %vm4037 = vcmask 400384
      %4038 = vst.msk [vmem:[%s145] sm:$0xff] %vm4037, %v3893
      %4039 = vst.msk [vmem:[%s145 + $0x8] sm:$0xff] %vm4037, %v3894
      %4040 = vst.msk [vmem:[%s145 + $0x10] sm:$0xff] %vm4037, %v3895
      %4041 = vst.msk [vmem:[%s145 + $0x18] sm:$0xff] %vm4037, %v3896
      %4042 = vst.msk [vmem:[%s145 + $0x20] sm:$0xff] %vm4037, %v3897
      %4043 = vst.msk [vmem:[%s145 + $0x28] sm:$0xff] %vm4037, %v3898
      %4044 = vst.msk [vmem:[%s145 + $0x30] sm:$0xff] %vm4037, %v3899
      %4045 = vst.msk [vmem:[%s145 + $0x38] sm:$0xff] %vm4037, %v3900
      %4046 = vst.msk [vmem:[%s145 + $0x40] sm:$0xff] %vm4037, %v3901
      %4047 = vst.msk [vmem:[%s145 + $0x48] sm:$0xff] %vm4037, %v3902
      %4048 = vst.msk [vmem:[%s145 + $0x50] sm:$0xff] %vm4037, %v3903
      %4049 = vst.msk [vmem:[%s145 + $0x58] sm:$0xff] %vm4037, %v3904
      %4050 = vst.msk [vmem:[%s145 + $0x60] sm:$0xff] %vm4037, %v3905
      %4051 = vst.msk [vmem:[%s145 + $0x68] sm:$0xff] %vm4037, %v3906
      %4052 = vst.msk [vmem:[%s145 + $0x70] sm:$0xff] %vm4037, %v3907
      %4053 = vst.msk [vmem:[%s145 + $0x78] sm:$0xff] %vm4037, %v3908
      %4054 = vst.msk [vmem:[%s145 + $0x80] sm:$0xff] %vm4037, %v3909
      %4055 = vst.msk [vmem:[%s145 + $0x88] sm:$0xff] %vm4037, %v3910
      %4056 = vst.msk [vmem:[%s145 + $0x90] sm:$0xff] %vm4037, %v3911
      %4057 = vst.msk [vmem:[%s145 + $0x98] sm:$0xff] %vm4037, %v3912
      %4058 = vst.msk [vmem:[%s145 + $0xa0] sm:$0xff] %vm4037, %v3913
      %4059 = vst.msk [vmem:[%s145 + $0xa8] sm:$0xff] %vm4037, %v3914
      %4060 = vst.msk [vmem:[%s145 + $0xb0] sm:$0xff] %vm4037, %v3915
      %4061 = vst.msk [vmem:[%s145 + $0xb8] sm:$0xff] %vm4037, %v3916
      %4062 = vst.msk [vmem:[%s145 + $0xc0] sm:$0xff] %vm4037, %v3917
      %4063 = vst.msk [vmem:[%s145 + $0xc8] sm:$0xff] %vm4037, %v3918
      %4064 = vst.msk [vmem:[%s145 + $0xd0] sm:$0xff] %vm4037, %v3919
      %4065 = vst.msk [vmem:[%s145 + $0xd8] sm:$0xff] %vm4037, %v3920
      %4066 = vst.msk [vmem:[%s145 + $0xe0] sm:$0xff] %vm4037, %v3921
      %4067 = vst.msk [vmem:[%s145 + $0xe8] sm:$0xff] %vm4037, %v3922
      %4068 = vst.msk [vmem:[%s145 + $0xf0] sm:$0xff] %vm4037, %v3923
      %4069 = vst.msk [vmem:[%s145 + $0xf8] sm:$0xff] %vm4037, %v3924
      %4070 = vst.msk [vmem:[%s145 + $0x100] sm:$0xff] %vm4037, %v3925
      %4071 = vst.msk [vmem:[%s145 + $0x108] sm:$0xff] %vm4037, %v3926
      %4072 = vst.msk [vmem:[%s145 + $0x110] sm:$0xff] %vm4037, %v3927
      %4073 = vst.msk [vmem:[%s145 + $0x118] sm:$0xff] %vm4037, %v3928
      %4074 = vst.msk [vmem:[%s145 + $0x120] sm:$0xff] %vm4037, %v3929
      %4075 = vst.msk [vmem:[%s145 + $0x128] sm:$0xff] %vm4037, %v3930
      %4076 = vst.msk [vmem:[%s145 + $0x130] sm:$0xff] %vm4037, %v3931
      %4077 = vst.msk [vmem:[%s145 + $0x138] sm:$0xff] %vm4037, %v3932
      %4078 = vst.msk [vmem:[%s145 + $0x140] sm:$0xff] %vm4037, %v3933
      %4079 = vst.msk [vmem:[%s145 + $0x148] sm:$0xff] %vm4037, %v3934
      %4080 = vst.msk [vmem:[%s145 + $0x150] sm:$0xff] %vm4037, %v3935
      %4081 = vst.msk [vmem:[%s145 + $0x158] sm:$0xff] %vm4037, %v3936
      %4082 = vst.msk [vmem:[%s145 + $0x160] sm:$0xff] %vm4037, %v3937
      %4083 = vst.msk [vmem:[%s145 + $0x168] sm:$0xff] %vm4037, %v3938
      %4084 = vst.msk [vmem:[%s145 + $0x170] sm:$0xff] %vm4037, %v3939
      %4085 = vst.msk [vmem:[%s145 + $0x178] sm:$0xff] %vm4037, %v3940
      %4086 = vst.msk [vmem:[%s145 + $0x180] sm:$0xff] %vm4037, %v3941
      %4087 = vst.msk [vmem:[%s145 + $0x188] sm:$0xff] %vm4037, %v3942
      %4088 = vst.msk [vmem:[%s145 + $0x190] sm:$0xff] %vm4037, %v3943
      %4089 = vst.msk [vmem:[%s145 + $0x198] sm:$0xff] %vm4037, %v3944
      %4090 = vst.msk [vmem:[%s145 + $0x1a0] sm:$0xff] %vm4037, %v3945
      %4091 = vst.msk [vmem:[%s145 + $0x1a8] sm:$0xff] %vm4037, %v3946
      %4092 = vst.msk [vmem:[%s145 + $0x1b0] sm:$0xff] %vm4037, %v3947
      %4093 = vst.msk [vmem:[%s145 + $0x1b8] sm:$0xff] %vm4037, %v3948
      %4094 = vst.msk [vmem:[%s145 + $0x1c0] sm:$0xff] %vm4037, %v3949
      %4095 = vst.msk [vmem:[%s145 + $0x1c8] sm:$0xff] %vm4037, %v3950
      %4096 = vst.msk [vmem:[%s145 + $0x1d0] sm:$0xff] %vm4037, %v3951
      %4097 = vst.msk [vmem:[%s145 + $0x1d8] sm:$0xff] %vm4037, %v3952
      %4098 = vst.msk [vmem:[%s145 + $0x1e0] sm:$0xff] %vm4037, %v3953
      %4099 = vst.msk [vmem:[%s145 + $0x1e8] sm:$0xff] %vm4037, %v3954
      %4100 = vst.msk [vmem:[%s145 + $0x1f0] sm:$0xff] %vm4037, %v3955
      %4101 = vst.msk [vmem:[%s145 + $0x1f8] sm:$0xff] %vm4037, %v3956
      %4102 = vst.msk [vmem:[%s145 + $0x200] sm:$0xff] %vm4037, %v3957
      %4103 = vst.msk [vmem:[%s145 + $0x208] sm:$0xff] %vm4037, %v3958
      %4104 = vst.msk [vmem:[%s145 + $0x210] sm:$0xff] %vm4037, %v3959
      %4105 = vst.msk [vmem:[%s145 + $0x218] sm:$0xff] %vm4037, %v3960
      %4106 = vst.msk [vmem:[%s145 + $0x220] sm:$0xff] %vm4037, %v3961
      %4107 = vst.msk [vmem:[%s145 + $0x228] sm:$0xff] %vm4037, %v3962
      %4108 = vst.msk [vmem:[%s145 + $0x230] sm:$0xff] %vm4037, %v3963
      %4109 = vst.msk [vmem:[%s145 + $0x238] sm:$0xff] %vm4037, %v3964
      %4110 = vst.msk [vmem:[%s145 + $0x240] sm:$0xff] %vm4037, %v3965
      %4111 = vst.msk [vmem:[%s145 + $0x248] sm:$0xff] %vm4037, %v3966
      %4112 = vst.msk [vmem:[%s145 + $0x250] sm:$0xff] %vm4037, %v3967
      %4113 = vst.msk [vmem:[%s145 + $0x258] sm:$0xff] %vm4037, %v3968
      %4114 = vst.msk [vmem:[%s145 + $0x260] sm:$0xff] %vm4037, %v3969
      %4115 = vst.msk [vmem:[%s145 + $0x268] sm:$0xff] %vm4037, %v3970
      %4116 = vst.msk [vmem:[%s145 + $0x270] sm:$0xff] %vm4037, %v3971
      %4117 = vst.msk [vmem:[%s145 + $0x278] sm:$0xff] %vm4037, %v3972
      %4118 = vst.msk [vmem:[%s145 + $0x280] sm:$0xff] %vm4037, %v3973
      %4119 = vst.msk [vmem:[%s145 + $0x288] sm:$0xff] %vm4037, %v3974
      %4120 = vst.msk [vmem:[%s145 + $0x290] sm:$0xff] %vm4037, %v3975
      %4121 = vst.msk [vmem:[%s145 + $0x298] sm:$0xff] %vm4037, %v3976
      %4122 = vst.msk [vmem:[%s145 + $0x2a0] sm:$0xff] %vm4037, %v3977
      %4123 = vst.msk [vmem:[%s145 + $0x2a8] sm:$0xff] %vm4037, %v3978
      %4124 = vst.msk [vmem:[%s145 + $0x2b0] sm:$0xff] %vm4037, %v3979
      %4125 = vst.msk [vmem:[%s145 + $0x2b8] sm:$0xff] %vm4037, %v3980
      %4126 = vst.msk [vmem:[%s145 + $0x2c0] sm:$0xff] %vm4037, %v3981
      %4127 = vst.msk [vmem:[%s145 + $0x2c8] sm:$0xff] %vm4037, %v3982
      %4128 = vst.msk [vmem:[%s145 + $0x2d0] sm:$0xff] %vm4037, %v3983
      %4129 = vst.msk [vmem:[%s145 + $0x2d8] sm:$0xff] %vm4037, %v3984
      %4130 = vst.msk [vmem:[%s145 + $0x2e0] sm:$0xff] %vm4037, %v3985
      %4131 = vst.msk [vmem:[%s145 + $0x2e8] sm:$0xff] %vm4037, %v3986
      %4132 = vst.msk [vmem:[%s145 + $0x2f0] sm:$0xff] %vm4037, %v3987
      %4133 = vst.msk [vmem:[%s145 + $0x2f8] sm:$0xff] %vm4037, %v3988
      %4134 = vst.msk [vmem:[%s145 + $0x300] sm:$0xff] %vm4037, %v3989
      %4135 = vst.msk [vmem:[%s145 + $0x308] sm:$0xff] %vm4037, %v3990
      %4136 = vst.msk [vmem:[%s145 + $0x310] sm:$0xff] %vm4037, %v3991
      %4137 = vst.msk [vmem:[%s145 + $0x318] sm:$0xff] %vm4037, %v3992
      %4138 = vst.msk [vmem:[%s145 + $0x320] sm:$0xff] %vm4037, %v3993
      %4139 = vst.msk [vmem:[%s145 + $0x328] sm:$0xff] %vm4037, %v3994
      %4140 = vst.msk [vmem:[%s145 + $0x330] sm:$0xff] %vm4037, %v3995
      %4141 = vst.msk [vmem:[%s145 + $0x338] sm:$0xff] %vm4037, %v3996
      %4142 = vst.msk [vmem:[%s145 + $0x340] sm:$0xff] %vm4037, %v3997
      %4143 = vst.msk [vmem:[%s145 + $0x348] sm:$0xff] %vm4037, %v3998
      %4144 = vst.msk [vmem:[%s145 + $0x350] sm:$0xff] %vm4037, %v3999
      %4145 = vst.msk [vmem:[%s145 + $0x358] sm:$0xff] %vm4037, %v4000
      %4146 = vst.msk [vmem:[%s145 + $0x360] sm:$0xff] %vm4037, %v4001
      %4147 = vst.msk [vmem:[%s145 + $0x368] sm:$0xff] %vm4037, %v4002
      %4148 = vst.msk [vmem:[%s145 + $0x370] sm:$0xff] %vm4037, %v4003
      %4149 = vst.msk [vmem:[%s145 + $0x378] sm:$0xff] %vm4037, %v4004
      %4150 = vst.msk [vmem:[%s145 + $0x380] sm:$0xff] %vm4037, %v4005
      %4151 = vst.msk [vmem:[%s145 + $0x388] sm:$0xff] %vm4037, %v4006
      %4152 = vst.msk [vmem:[%s145 + $0x390] sm:$0xff] %vm4037, %v4007
      %4153 = vst.msk [vmem:[%s145 + $0x398] sm:$0xff] %vm4037, %v4008
      %4154 = vst.msk [vmem:[%s145 + $0x3a0] sm:$0xff] %vm4037, %v4009
      %4155 = vst.msk [vmem:[%s145 + $0x3a8] sm:$0xff] %vm4037, %v4010
      %4156 = vst.msk [vmem:[%s145 + $0x3b0] sm:$0xff] %vm4037, %v4011
      %4157 = vst.msk [vmem:[%s145 + $0x3b8] sm:$0xff] %vm4037, %v4012
      %4158 = vst.msk [vmem:[%s145 + $0x3c0] sm:$0xff] %vm4037, %v4013
      %4159 = vst.msk [vmem:[%s145 + $0x3c8] sm:$0xff] %vm4037, %v4014
      %4160 = vst.msk [vmem:[%s145 + $0x3d0] sm:$0xff] %vm4037, %v4015
      %4161 = vst.msk [vmem:[%s145 + $0x3d8] sm:$0xff] %vm4037, %v4016
      %4162 = vst.msk [vmem:[%s145 + $0x3e0] sm:$0xff] %vm4037, %v4017
      %4163 = vst.msk [vmem:[%s145 + $0x3e8] sm:$0xff] %vm4037, %v4018
      %4164 = vst.msk [vmem:[%s145 + $0x3f0] sm:$0xff] %vm4037, %v4019
      %4165 = vst.msk [vmem:[%s145 + $0x3f8] sm:$0xff] %vm4037, %v4020
      %4166 = vst.msk [vmem:[%s145 + $0x400] sm:$0xff] %vm4037, %v4021
      %4167 = vst.msk [vmem:[%s145 + $0x408] sm:$0xff] %vm4037, %v4022
      %4168 = vst.msk [vmem:[%s145 + $0x410] sm:$0xff] %vm4037, %v4023
      %4169 = vst.msk [vmem:[%s145 + $0x418] sm:$0xff] %vm4037, %v4024
      %4170 = vst.msk [vmem:[%s145 + $0x420] sm:$0xff] %vm4037, %v4025
      %4171 = vst.msk [vmem:[%s145 + $0x428] sm:$0xff] %vm4037, %v4026
      %4172 = vst.msk [vmem:[%s145 + $0x430] sm:$0xff] %vm4037, %v4027
      %4173 = vst.msk [vmem:[%s145 + $0x438] sm:$0xff] %vm4037, %v4028
      %4174 = vst.msk [vmem:[%s145 + $0x440] sm:$0xff] %vm4037, %v4029
      %4175 = vst.msk [vmem:[%s145 + $0x448] sm:$0xff] %vm4037, %v4030
      %4176 = vst.msk [vmem:[%s145 + $0x450] sm:$0xff] %vm4037, %v4031
      %4177 = vst.msk [vmem:[%s145 + $0x458] sm:$0xff] %vm4037, %v4032
      %4178 = vst.msk [vmem:[%s145 + $0x460] sm:$0xff] %vm4037, %v4033
      %4179 = vst.msk [vmem:[%s145 + $0x468] sm:$0xff] %vm4037, %v4034
      %4180 = vst.msk [vmem:[%s145 + $0x470] sm:$0xff] %vm4037, %v4035
      %4181 = vst.msk [vmem:[%s145 + $0x478] sm:$0xff] %vm4037, %v4036
      %s4182 = smul.u32 144, %s13
      %p4183 = scmp.lt.s32.totalorder %s4182, 287
      %s4184 = scalar_select %p4183, %s4182, 287
      %s4185 = smul.addr %s4184, 8
      %s4186 = scalar_lea.vmem %s2, %s4185
      // Predicated region
      $region29: #{sigmoid_mul.1} parent=27 // pred_check
        %p4187 = pneg %p78
      $region30: #{sigmoid_mul.1} parent=27 // pred_check_branch
        %4189 = sbr.rel (%p4187) target = $region32
      $region31: #{sigmoid_mul.1} parent=27 // pred_region
        %s4190 = smul.u32 144, %s13
      $region32: #{sigmoid_mul.1} parent=27 // pred_fallthru
        _
    $region28: #{sigmoid_mul.1} parent=5 // pred_fallthru
      _
    %p4191 = scmp.le.s32.totalorder 2, %s8
    // Predicated region
    $region33: #{sigmoid_mul.1} parent=5 // pred_check
      %p4192 = pneg %p4191
    $region34: #{sigmoid_mul.1} parent=5 // pred_check_branch
      %4194 = sbr.rel (%p4192) target = $region36
    $region35: #{sigmoid_mul.1} parent=5 // pred_region
      %s4195 = ssub.s32 %s8, 2
      // Predicated region
      $region37: #{sigmoid_mul.1} parent=35 // pred_check
        %p4196 = pneg %p84
      $region38: #{sigmoid_mul.1} parent=35 // pred_check_branch
        %4198 = sbr.rel (%p4196) target = $region40
      $region39: #{sigmoid_mul.1} parent=35 // pred_region
        %s4199 = smul.u32 144, %s14
        %p4200 = scmp.lt.s32.totalorder %s4199, 287
        %s4201 = scalar_select %p4200, %s4199, 287
        %s4202 = smul.addr %s4201, 8
        %s4203 = scalar_lea.vmem %s2, %s4202
      $region40: #{sigmoid_mul.1} parent=35 // pred_fallthru
        _
    $region36: #{sigmoid_mul.1} parent=5 // pred_fallthru
      _
  $region6: #{sigmoid_mul.1} parent=0 // loop_footer
    %s12 = sadd.s32 1, %s8
  $region7: #{sigmoid_mul.1} parent=0 // loop_footer_branch
    %7 = sbr.rel target = $region3
  $region8: #{sigmoid_mul.1} parent=0 // loop_exit
    _

</llo_original>
